<compile_context>
chip_gen: v7x
topology: tpu7x:2x2x1
jax: 0.10.0
libtpu: 0.0.40
codegen_flags: <defaults>
</compile_context>

<pallas_src>
import functools

import jax
import jax.numpy as jnp
from jax import lax
from jax.experimental import pallas as pl
from jax.experimental.pallas import tpu as pltpu


# ----------------------------------------------------------------------------
# Elementwise helpers (EUP exp + approximate EUP reciprocal).
# ----------------------------------------------------------------------------
def _sigmoid(x):
    return pl.reciprocal(1.0 + jnp.exp(-x), approx=True)


def _silu(x):
    return x * _sigmoid(x)


# ----------------------------------------------------------------------------
# Pallas kernel: EffBlock for one lane-fused slab of `block_b` sequences.
# ----------------------------------------------------------------------------
def _effblock_kernel(x_ref,      # (Cin, N) f32,  N = block_b * L (lane-fused)
                     seg_ref,    # (block_b, N) f32 per-sequence indicator
                     w1_ref,     # (D, Cin) bf16
                     gw_ref,     # (D, ncopies*ks) conv_dtype grouped-conv cols
                     dpar_ref,   # (D, 5) f32: bn1s, bn1b, bn2s, bn2b, se_b2
                     sew1_ref,   # (H, D) f32
                     seb1_ref,   # (H, 1) f32
                     sew2_ref,   # (D, H) f32
                     w3_ref,     # (Cin, D) bf16
                     cpar_ref,   # (Cin, 2) f32: bn3s, bn3b
                     out_ref,    # (Cin, N) f32
                     *, ks, fpg, seq_len, block_b, conv_dtype):
    L = seq_len
    N = block_b * L
    D = w1_ref.shape[0]
    pad = ks // 2
    ncopies = gw_ref.shape[1] // ks

    # ---- 1x1 expand conv (bf16 MXU, f32 accumulate) + folded BN + SiLU -----
    h = jnp.dot(w1_ref[...], x_ref[...].astype(jnp.bfloat16),
                preferred_element_type=jnp.float32)              # (D, N) f32
    h = h * dpar_ref[:, 0:1] + dpar_ref[:, 1:2]
    h = _silu(h)

    # ---- grouped conv (ks taps, groups = D/fpg, 'same') as VPU shift-FMAs --
    # Build the in-group channel "copies" once (sublane rolls hoisted out of
    # the tap loop).  For fpg == 2 the single partner copy hp[o] = h[o ^ 1]
    # replaces the two +/-1 shift terms (weights pre-merged in the wrapper).
    if fpg == 2:
        row = lax.broadcasted_iota(jnp.int32, (D, 1), 0)
        hpart = jnp.where(row % 2 == 0,
                          pltpu.roll(h, shift=D - 1, axis=0),    # h[o + 1]
                          pltpu.roll(h, shift=1, axis=0))        # h[o - 1]
        copies = (h.astype(conv_dtype), hpart.astype(conv_dtype))
    else:
        copies = tuple(
            (h if si == fpg - 1
             else pltpu.roll(h, shift=(fpg - 1 - si) % D, axis=0)
             ).astype(conv_dtype)
            for si in range(ncopies))

    # Per-lane position within its own sequence ('same' padding masks; also
    # kills cross-sequence contamination of the fused lane axis).
    lane = lax.broadcasted_iota(jnp.int32, (1, N), 1)
    pos = (lane & (L - 1)) if (L & (L - 1)) == 0 else (lane % L)

    # ks tap contributions; two independent accumulator chains (VALU ILP),
    # initialized from the first contributions (no zeros + add).
    accs = [None, None]
    for t in range(ks):
        d = t - pad
        if d == 0:
            contrib = copies[0] * gw_ref[:, t:t + 1]
            for ci in range(1, ncopies):
                contrib = contrib + copies[ci] * gw_ref[:, ci * ks + t:
                                                         ci * ks + t + 1]
        else:
            sh = (-d) % N
            contrib = (pltpu.roll(copies[0], shift=sh, axis=1)
                       * gw_ref[:, t:t + 1])
            for ci in range(1, ncopies):
                contrib = contrib + (pltpu.roll(copies[ci], shift=sh, axis=1)
                                     * gw_ref[:, ci * ks + t:ci * ks + t + 1])
            valid = (pos < L - d) if d > 0 else (pos >= -d)
            contrib = jnp.where(valid, contrib, 0)               # shared mask
        contrib = contrib.astype(jnp.float32)                    # f32 accumulate
        slot = t % 2
        accs[slot] = contrib if accs[slot] is None else accs[slot] + contrib
    acc = accs[0] if accs[1] is None else accs[0] + accs[1]      # (D, N) f32

    h2 = acc * dpar_ref[:, 2:3] + dpar_ref[:, 3:4]
    h2 = _silu(h2)                                               # (D, N) f32

    # ---- SE layer: per-sequence mean + two tiny FCs + channel rescale ------
    seg = seg_ref[...]                                           # (block_b, N)
    means = lax.dot_general(h2, seg, (((1,), (1,)), ((), ())),
                            preferred_element_type=jnp.float32) * (1.0 / L)
    y = jnp.dot(sew1_ref[...], means,
                preferred_element_type=jnp.float32) + seb1_ref[...]
    y = _silu(y)
    y = jnp.dot(sew2_ref[...], y,
                preferred_element_type=jnp.float32) + dpar_ref[:, 4:5]
    y = _sigmoid(y)                                              # (D, block_b)
    y_b = jnp.dot(y, seg, preferred_element_type=jnp.float32)    # (D, N)
    h3 = (h2 * y_b).astype(jnp.bfloat16)

    # ---- 1x1 project conv (bf16 MXU) + folded BN + SiLU --------------------
    o = jnp.dot(w3_ref[...], h3, preferred_element_type=jnp.float32)  # (Cin,N)
    o = o * cpar_ref[:, 0:1] + cpar_ref[:, 1:2]
    o = _silu(o)
    out_ref[...] = o.astype(out_ref.dtype)                       # lane-dense


# ----------------------------------------------------------------------------
# Wrapper / parameter plumbing (plain JAX glue).
# ----------------------------------------------------------------------------
def _fold_bn(gamma, beta, mean, var, eps=1e-5):
    scale = gamma / jnp.sqrt(var + eps)
    bias = beta - mean * scale
    return scale, bias


def _grouped_weight_columns(w2, fpg):
    """(D, fpg, ks) grouped-conv weight -> (D, ncopies*ks) shift-FMA columns.

    fpg == 2:   ncopies = 2, columns = [w_self | w_partner] (partner = o ^ 1).
    otherwise:  ncopies = 2*fpg-1, one column block per in-group channel shift
                s in [-(fpg-1), fpg-1], zeroed where the shift leaves the group.
    """
    D, _, ks = w2.shape
    o = jnp.arange(D)
    if fpg == 2:
        j = o % 2
        w_self = w2[o, j, :]                              # (D, ks)
        w_part = w2[o, 1 - j, :]                          # (D, ks)
        return jnp.concatenate([w_self, w_part], axis=1)
    j = o % fpg
    cols = []
    for s in range(-(fpg - 1), fpg):
        i = j + s
        valid = (i >= 0) & (i < fpg)
        w_si = w2[o, jnp.clip(i, 0, fpg - 1), :]
        cols.append(jnp.where(valid[:, None], w_si, 0.0))
    return jnp.concatenate(cols, axis=1)


def _default_conv_dtype():
    """bf16 shift-FMA path only where the VPU/XLU pack bf16 (v6e / v7x)."""
    try:
        kind = jax.devices()[0].device_kind.lower()
    except Exception:
        return jnp.float32
    if any(tag in kind for tag in ("v6", "v7", "7x")):
        return jnp.bfloat16
    return jnp.float32


def effblock_pallas(x_ncl, p, *, ks, filter_per_group, block_b=None,
                    conv_dtype=None):
    """x_ncl: (B, Cin, L) float32 in native NCL layout. Returns (B, Cin, L)."""
    B, Cin, L = x_ncl.shape
    D = p['w1'].shape[0]
    H = p['se_w1'].shape[0]
    fpg = filter_per_group
    assert D % fpg == 0
    if conv_dtype is None:
        conv_dtype = _default_conv_dtype()

    if block_b is None:
        # Largest divisor of B with fused lane axis block_b*L <= 1024 (VMEM
        # headroom on v7x, MXU-N >= 512 when possible) that still leaves >= 2
        # grid steps (megacore sharding + DMA/compute overlap).
        block_b = 1
        for cand in range(2, B + 1):
            if B % cand or cand * L > 1024 or B // cand < 2:
                continue
            block_b = cand
    assert B % block_b == 0
    Bb = B // block_b
    N = block_b * L

    # ---- kernel-layout parameters ------------------------------------------
    w1 = p['w1'][:, :, 0].astype(jnp.bfloat16)                    # (D, Cin)
    w3 = p['w3'][:, :, 0].astype(jnp.bfloat16)                    # (Cin, D)
    gw = _grouped_weight_columns(p['w2'], fpg).astype(conv_dtype)
    ncopies = gw.shape[1] // ks
    bn1s, bn1b = _fold_bn(p['bn1_g'], p['bn1_b'], p['bn1_m'], p['bn1_v'])
    bn2s, bn2b = _fold_bn(p['bn2_g'], p['bn2_b'], p['bn2_m'], p['bn2_v'])
    bn3s, bn3b = _fold_bn(p['bn3_g'], p['bn3_b'], p['bn3_m'], p['bn3_v'])
    dpar = jnp.stack([bn1s, bn1b, bn2s, bn2b, p['se_b2']], axis=1
                     ).astype(jnp.float32)                        # (D, 5)
    cpar = jnp.stack([bn3s, bn3b], axis=1).astype(jnp.float32)    # (Cin, 2)
    sew1 = p['se_w1'].astype(jnp.float32)                         # (H, D)
    seb1 = p['se_b1'][:, None].astype(jnp.float32)                # (H, 1)
    sew2 = p['se_w2'].astype(jnp.float32)                         # (D, H)

    # Per-sequence indicator over the fused lane axis (SE mean + broadcast).
    seg = (jnp.arange(block_b, dtype=jnp.int32)[:, None]
           == (jnp.arange(N, dtype=jnp.int32) // L)[None, :]
           ).astype(jnp.float32)                                  # (block_b, N)

    # One-time wrapper-side lane-fusing transpose (layout plumbing only).
    xf = (x_ncl.reshape(Bb, block_b, Cin, L)
               .transpose(0, 2, 1, 3)
               .reshape(Bb * Cin, N))

    kernel = functools.partial(_effblock_kernel, ks=ks, fpg=fpg, seq_len=L,
                               block_b=block_b, conv_dtype=conv_dtype)

    def wspec(shape):
        nd = len(shape)
        return pl.BlockSpec(shape, lambda i, _n=nd: (0,) * _n)

    # VMEM budget from actual buffer math (not a fixed constant).
    csz = jnp.dtype(conv_dtype).itemsize
    io_bytes = 2 * 2 * Cin * N * 4                       # x/out, double-buffered
    w_bytes = 2 * (w1.size * 2 + w3.size * 2 + gw.size * csz + dpar.size * 4
                   + cpar.size * 4 + sew1.size * 4 + seb1.size * 4
                   + sew2.size * 4 + seg.size * 4)
    tmp_bytes = D * N * (6 * 4 + (ncopies + 2) * csz)    # live (D, N) temporaries
    vmem_limit = int(min(max(2 * (io_bytes + w_bytes + tmp_bytes), 32 << 20),
                         64 << 20))

    flops = int(2 * B * L * D * (2 * Cin + ncopies * ks + 2) + 4 * B * H * D)
    transcendentals = int(2 * B * L * (2 * D + Cin))     # exp + recip per SiLU
    bytes_accessed = int(2 * B * Cin * L * 4 + w_bytes // 2)

    call = pl.pallas_call(
        kernel,
        out_shape=jax.ShapeDtypeStruct((Bb * Cin, N), jnp.float32),
        grid_spec=pltpu.PrefetchScalarGridSpec(
            num_scalar_prefetch=0,
            grid=(Bb,),
            in_specs=[
                pl.BlockSpec((Cin, N), lambda i: (i, 0)),   # x (lane-fused)
                wspec((block_b, N)),                        # seg indicator
                wspec((D, Cin)),                            # w1 (bf16)
                wspec((D, ncopies * ks)),                   # grouped-conv cols
                wspec((D, 5)),                              # bn1/bn2/se_b2
                wspec((H, D)), wspec((H, 1)),               # SE fc1
                wspec((D, H)),                              # SE fc2
                wspec((Cin, D)),                            # w3 (bf16)
                wspec((Cin, 2)),                            # bn3
            ],
            out_specs=pl.BlockSpec((Cin, N), lambda i: (i, 0)),
        ),
        compiler_params=pltpu.CompilerParams(
            dimension_semantics=("parallel",),
            vmem_limit_bytes=vmem_limit,
        ),
        cost_estimate=pl.CostEstimate(
            flops=flops, transcendentals=transcendentals,
            bytes_accessed=bytes_accessed),
    )

    of = call(xf, seg, w1, gw, dpar, sew1, seb1, sew2, w3, cpar)
    return (of.reshape(Bb, Cin, block_b, L)
              .transpose(0, 2, 1, 3)
              .reshape(B, Cin, L))


# ----------------------------------------------------------------------------
# Pure-JAX reference (independent of the kernel math) for validation.
# ----------------------------------------------------------------------------
def effblock_ref(x, p, *, ks, filter_per_group, eps=1e-5):
    def bn(h, g, b, m, v):
        return ((h - m[None, :, None]) / jnp.sqrt(v[None, :, None] + eps)
                * g[None, :, None] + b[None, :, None])

    def silu(h):
        return h * jax.nn.sigmoid(h)

    D = p['w1'].shape[0]
    groups = D // filter_per_group

    h = jnp.einsum('bcl,dc->bdl', x, p['w1'][:, :, 0])
    h = silu(bn(h, p['bn1_g'], p['bn1_b'], p['bn1_m'], p['bn1_v']))

    h2 = lax.conv_general_dilated(
        h, p['w2'], window_strides=(1,), padding='SAME',
        dimension_numbers=('NCH', 'OIH', 'NCH'),
        feature_group_count=groups)
    h2 = silu(bn(h2, p['bn2_g'], p['bn2_b'], p['bn2_m'], p['bn2_v']))

    y = jnp.mean(h2, axis=2)                              # (B, D)
    y = y @ p['se_w1'].T + p['se_b1']
    y = silu(y)
    y = y @ p['se_w2'].T + p['se_b2']
    y = jax.nn.sigmoid(y)
    h3 = h2 * y[:, :, None]

    o = jnp.einsum('bdl,cd->bcl', h3, p['w3'][:, :, 0])
    o = silu(bn(o, p['bn3_g'], p['bn3_b'], p['bn3_m'], p['bn3_v']))
    return o


# ----------------------------------------------------------------------------
def init_params(key, in_ch, inner_dim, se_hidden, ks, fpg):
    ks_list = jax.random.split(key, 22)
    n = jax.random.normal
    u = jax.random.uniform
    p = {
        'w1': n(ks_list[0], (inner_dim, in_ch, 1)) * 0.2,
        'bn1_g': u(ks_list[1], (inner_dim,), minval=0.5, maxval=1.5),
        'bn1_b': n(ks_list[2], (inner_dim,)) * 0.1,
        'bn1_m': n(ks_list[3], (inner_dim,)) * 0.1,
        'bn1_v': u(ks_list[4], (inner_dim,), minval=0.5, maxval=1.5),
        'w2': n(ks_list[5], (inner_dim, fpg, ks)) * 0.2,
        'bn2_g': u(ks_list[6], (inner_dim,), minval=0.5, maxval=1.5),
        'bn2_b': n(ks_list[7], (inner_dim,)) * 0.1,
        'bn2_m': n(ks_list[8], (inner_dim,)) * 0.1,
        'bn2_v': u(ks_list[9], (inner_dim,), minval=0.5, maxval=1.5),
        'se_w1': n(ks_list[10], (se_hidden, inner_dim)) * 0.2,
        'se_b1': n(ks_list[11], (se_hidden,)) * 0.1,
        'se_w2': n(ks_list[12], (inner_dim, se_hidden)) * 0.2,
        'se_b2': n(ks_list[13], (inner_dim,)) * 0.1,
        'w3': n(ks_list[14], (in_ch, inner_dim, 1)) * 0.2,
        'bn3_g': u(ks_list[15], (in_ch,), minval=0.5, maxval=1.5),
        'bn3_b': n(ks_list[16], (in_ch,)) * 0.1,
        'bn3_m': n(ks_list[17], (in_ch,)) * 0.1,
        'bn3_v': u(ks_list[18], (in_ch,), minval=0.5, maxval=1.5),
    }
    return {k: v.astype(jnp.float32) for k, v in p.items()}


if __name__ == "__main__":
    # EffBlock(in_ch=32, ks=5, resize_factor=2, filter_per_group=2,
    #          activation=nn.SiLU, inner_dim_calculation='in')
    B, in_ch, L = 8, 32, 128
    ks = 5
    resize_factor = 2
    filter_per_group = 2
    inner_dim = in_ch * resize_factor            # 'in' mode -> 64
    se_reduction = resize_factor                 # default
    se_hidden = in_ch // se_reduction            # 16

    key = jax.random.PRNGKey(0)
    kx, kp = jax.random.split(key)
    x = jax.random.normal(kx, (B, in_ch, L), dtype=jnp.float32)
    params = init_params(kp, in_ch, inner_dim, se_hidden, ks, filter_per_group)

    conv_dtype = _default_conv_dtype()
    # Auto block_b picks 4 -> 2 grid steps, fused lane axis block_b*L = 512.
    out = effblock_pallas(x, params, ks=ks, filter_per_group=filter_per_group,
                          conv_dtype=conv_dtype)
    out = jax.block_until_ready(out)

    ref = jax.block_until_ready(
        effblock_ref(x, params, ks=ks, filter_per_group=filter_per_group))

    assert out.shape == (B, in_ch, L)
    # Tolerance accounts for bf16 MXU inputs (f32 accumulation) vs the all-f32
    # reference; slightly looser when the grouped-conv path also runs in bf16
    # (v6e / v7x).
    tol = 3e-2 if conv_dtype == jnp.float32 else 5e-2
    assert jnp.allclose(out, ref, rtol=tol, atol=tol), (
        f"max abs diff {jnp.max(jnp.abs(out - ref))}")

    print("KERNEL_OK")
</pallas_src>

<mosaic_0001>
module attributes {stable_mosaic.version = 11 : i64} {
  func.func @_effblock_kernel(%arg0: i32, %arg1: memref<32x512xf32, #tpu.memory_space<vmem>>, %arg2: memref<4x512xf32, #tpu.memory_space<vmem>>, %arg3: memref<64x32xbf16, #tpu.memory_space<vmem>>, %arg4: memref<64x10xf32, #tpu.memory_space<vmem>>, %arg5: memref<64x5xf32, #tpu.memory_space<vmem>>, %arg6: memref<16x64xf32, #tpu.memory_space<vmem>>, %arg7: memref<16x1xf32, #tpu.memory_space<vmem>>, %arg8: memref<64x16xf32, #tpu.memory_space<vmem>>, %arg9: memref<32x64xbf16, #tpu.memory_space<vmem>>, %arg10: memref<32x2xf32, #tpu.memory_space<vmem>>, %arg11: memref<32x512xf32, #tpu.memory_space<vmem>>) attributes {dimension_semantics = [#tpu.dimension_semantics<parallel>], iteration_bounds = array<i64: 2>, scalar_prefetch = 0 : i64, scratch_operands = 0 : i64, tpu.core_type = #tpu.core_type<tc>, window_params = [{transform_indices = @transform_0, window_bounds = array<i64: 32, 512>}, {pipeline_mode = #tpu.pipeline_mode<synchronous>, transform_indices = @transform_1, window_bounds = array<i64: 4, 512>}, {pipeline_mode = #tpu.pipeline_mode<synchronous>, transform_indices = @transform_2, window_bounds = array<i64: 64, 32>}, {pipeline_mode = #tpu.pipeline_mode<synchronous>, transform_indices = @transform_3, window_bounds = array<i64: 64, 10>}, {pipeline_mode = #tpu.pipeline_mode<synchronous>, transform_indices = @transform_4, window_bounds = array<i64: 64, 5>}, {pipeline_mode = #tpu.pipeline_mode<synchronous>, transform_indices = @transform_5, window_bounds = array<i64: 16, 64>}, {pipeline_mode = #tpu.pipeline_mode<synchronous>, transform_indices = @transform_6, window_bounds = array<i64: 16, 1>}, {pipeline_mode = #tpu.pipeline_mode<synchronous>, transform_indices = @transform_7, window_bounds = array<i64: 64, 16>}, {pipeline_mode = #tpu.pipeline_mode<synchronous>, transform_indices = @transform_8, window_bounds = array<i64: 32, 64>}, {pipeline_mode = #tpu.pipeline_mode<synchronous>, transform_indices = @transform_9, window_bounds = array<i64: 32, 2>}, {transform_indices = @transform_10, window_bounds = array<i64: 32, 512>}]} {
    %c0 = arith.constant 0 : index
    %c0_0 = arith.constant 0 : index
    %0 = vector.load %arg3[%c0, %c0_0] : memref<64x32xbf16, #tpu.memory_space<vmem>>, vector<64x32xbf16>
    %c0_1 = arith.constant 0 : index
    %c0_2 = arith.constant 0 : index
    %1 = vector.load %arg1[%c0_1, %c0_2] : memref<32x512xf32, #tpu.memory_space<vmem>>, vector<32x512xf32>
    %2 = arith.truncf %1 : vector<32x512xf32> to vector<32x512xbf16>
    %cst = arith.constant dense<0.000000e+00> : vector<64x512xf32>
    %3 = tpu.matmul %0, %2, %cst {dimension_numbers = #tpu.dot_dimension_numbers<[1], [0], [0], [1], [0, 0, 1, 1], [], []>} : vector<64x32xbf16>, vector<32x512xbf16>, vector<64x512xf32> -> vector<64x512xf32>
    %c0_3 = arith.constant 0 : index
    %c0_4 = arith.constant 0 : index
    %4 = vector.load %arg5[%c0_3, %c0_4] : memref<64x5xf32, #tpu.memory_space<vmem>>, vector<64x1xf32>
    %5 = vector.broadcast %4 : vector<64x1xf32> to vector<64x512xf32>
    %6 = arith.mulf %3, %5 : vector<64x512xf32>
    %c0_5 = arith.constant 0 : index
    %c1 = arith.constant 1 : index
    %7 = vector.load %arg5[%c0_5, %c1] : memref<64x5xf32, #tpu.memory_space<vmem>>, vector<64x1xf32>
    %8 = vector.broadcast %7 : vector<64x1xf32> to vector<64x512xf32>
    %9 = arith.addf %6, %8 : vector<64x512xf32>
    %cst_6 = arith.constant 0.000000e+00 : f32
    %10 = vector.broadcast %cst_6 : f32 to vector<64x512xf32>
    %11 = arith.subf %10, %9 : vector<64x512xf32>
    %12 = math.exp %11 : vector<64x512xf32>
    %cst_7 = arith.constant 1.000000e+00 : f32
    %13 = vector.broadcast %cst_7 : f32 to vector<64x512xf32>
    %14 = arith.addf %13, %12 : vector<64x512xf32>
    %15 = tpu.reciprocal %14 {approx = true} : vector<64x512xf32> -> vector<64x512xf32>
    %16 = arith.mulf %9, %15 : vector<64x512xf32>
    %17 = tpu.iota {dimensions = array<i32: 0>} : vector<64x1xi32>
    %c2_i32 = arith.constant 2 : i32
    %c0_i32 = arith.constant 0 : i32
    %18 = arith.cmpi eq, %c2_i32, %c0_i32 : i32
    %c1_i32 = arith.constant 1 : i32
    %19 = arith.select %18, %c1_i32, %c2_i32 : i32
    %20 = vector.broadcast %19 : i32 to vector<64x1xi32>
    %21 = arith.remsi %17, %20 : vector<64x1xi32>
    %c0_i32_8 = arith.constant 0 : i32
    %22 = vector.broadcast %c0_i32_8 : i32 to vector<64x1xi32>
    %23 = arith.cmpi ne, %21, %22 : vector<64x1xi32>
    %c0_i32_9 = arith.constant 0 : i32
    %24 = vector.broadcast %c0_i32_9 : i32 to vector<64x1xi32>
    %25 = arith.cmpi slt, %21, %24 : vector<64x1xi32>
    %c0_i32_10 = arith.constant 0 : i32
    %26 = arith.cmpi slt, %19, %c0_i32_10 : i32
    %27 = vector.broadcast %26 : i1 to vector<64x1xi1>
    %28 = vector.broadcast %27 : vector<64x1xi1> to vector<64x1xi1>
    %29 = arith.xori %25, %28 : vector<64x1xi1>
    %30 = arith.andi %29, %23 : vector<64x1xi1>
    %31 = vector.broadcast %19 : i32 to vector<64x1xi32>
    %32 = arith.addi %21, %31 : vector<64x1xi32>
    %33 = arith.select %30, %32, %21 : vector<64x1xi1>, vector<64x1xi32>
    %c0_i32_11 = arith.constant 0 : i32
    %34 = vector.broadcast %c0_i32_11 : i32 to vector<64x1xi32>
    %35 = arith.cmpi eq, %33, %34 : vector<64x1xi32>
    %c63_i32 = arith.constant 63 : i32
    %36 = tpu.dynamic_rotate %16 by %c63_i32 dim 0 : vector<64x512xf32>, i32 -> vector<64x512xf32>
    %c1_i32_12 = arith.constant 1 : i32
    %37 = tpu.dynamic_rotate %16 by %c1_i32_12 dim 0 : vector<64x512xf32>, i32 -> vector<64x512xf32>
    %38 = vector.shape_cast %35 : vector<64x1xi1> to vector<64x1xi1>
    %39 = vector.broadcast %38 : vector<64x1xi1> to vector<64x512xi1>
    %40 = arith.select %39, %36, %37 : vector<64x512xi1>, vector<64x512xf32>
    %41 = tpu.iota {dimensions = array<i32: 1>} : vector<1x512xi32>
    %c127_i32 = arith.constant 127 : i32
    %42 = vector.broadcast %c127_i32 : i32 to vector<1x512xi32>
    %43 = arith.andi %41, %42 : vector<1x512xi32>
    %c2_i32_13 = arith.constant 2 : i32
    %44 = tpu.dynamic_rotate %16 by %c2_i32_13 dim 1 : vector<64x512xf32>, i32 -> vector<64x512xf32>
    %c0_14 = arith.constant 0 : index
    %c0_15 = arith.constant 0 : index
    %45 = vector.load %arg4[%c0_14, %c0_15] : memref<64x10xf32, #tpu.memory_space<vmem>>, vector<64x1xf32>
    %46 = vector.broadcast %45 : vector<64x1xf32> to vector<64x512xf32>
    %47 = arith.mulf %44, %46 : vector<64x512xf32>
    %c2_i32_16 = arith.constant 2 : i32
    %48 = tpu.dynamic_rotate %40 by %c2_i32_16 dim 1 : vector<64x512xf32>, i32 -> vector<64x512xf32>
    %c0_17 = arith.constant 0 : index
    %c5 = arith.constant 5 : index
    %49 = vector.load %arg4[%c0_17, %c5] : memref<64x10xf32, #tpu.memory_space<vmem>>, vector<64x1xf32>
    %50 = vector.broadcast %49 : vector<64x1xf32> to vector<64x512xf32>
    %51 = arith.mulf %48, %50 : vector<64x512xf32>
    %52 = arith.addf %47, %51 : vector<64x512xf32>
    %c2_i32_18 = arith.constant 2 : i32
    %53 = vector.broadcast %c2_i32_18 : i32 to vector<1x512xi32>
    %54 = arith.cmpi sge, %43, %53 : vector<1x512xi32>
    %c0_i32_19 = arith.constant 0 : i32
    %55 = arith.sitofp %c0_i32_19 : i32 to f32
    %56 = vector.shape_cast %54 : vector<1x512xi1> to vector<1x512xi1>
    %57 = vector.broadcast %56 : vector<1x512xi1> to vector<64x512xi1>
    %58 = vector.broadcast %55 : f32 to vector<64x512xf32>
    %59 = arith.select %57, %52, %58 : vector<64x512xi1>, vector<64x512xf32>
    %c1_i32_20 = arith.constant 1 : i32
    %60 = tpu.dynamic_rotate %16 by %c1_i32_20 dim 1 : vector<64x512xf32>, i32 -> vector<64x512xf32>
    %c0_21 = arith.constant 0 : index
    %c1_22 = arith.constant 1 : index
    %61 = vector.load %arg4[%c0_21, %c1_22] : memref<64x10xf32, #tpu.memory_space<vmem>>, vector<64x1xf32>
    %62 = vector.broadcast %61 : vector<64x1xf32> to vector<64x512xf32>
    %63 = arith.mulf %60, %62 : vector<64x512xf32>
    %c1_i32_23 = arith.constant 1 : i32
    %64 = tpu.dynamic_rotate %40 by %c1_i32_23 dim 1 : vector<64x512xf32>, i32 -> vector<64x512xf32>
    %c0_24 = arith.constant 0 : index
    %c6 = arith.constant 6 : index
    %65 = vector.load %arg4[%c0_24, %c6] : memref<64x10xf32, #tpu.memory_space<vmem>>, vector<64x1xf32>
    %66 = vector.broadcast %65 : vector<64x1xf32> to vector<64x512xf32>
    %67 = arith.mulf %64, %66 : vector<64x512xf32>
    %68 = arith.addf %63, %67 : vector<64x512xf32>
    %c1_i32_25 = arith.constant 1 : i32
    %69 = vector.broadcast %c1_i32_25 : i32 to vector<1x512xi32>
    %70 = arith.cmpi sge, %43, %69 : vector<1x512xi32>
    %c0_i32_26 = arith.constant 0 : i32
    %71 = arith.sitofp %c0_i32_26 : i32 to f32
    %72 = vector.shape_cast %70 : vector<1x512xi1> to vector<1x512xi1>
    %73 = vector.broadcast %72 : vector<1x512xi1> to vector<64x512xi1>
    %74 = vector.broadcast %71 : f32 to vector<64x512xf32>
    %75 = arith.select %73, %68, %74 : vector<64x512xi1>, vector<64x512xf32>
    %c0_27 = arith.constant 0 : index
    %c2 = arith.constant 2 : index
    %76 = vector.load %arg4[%c0_27, %c2] : memref<64x10xf32, #tpu.memory_space<vmem>>, vector<64x1xf32>
    %77 = vector.broadcast %76 : vector<64x1xf32> to vector<64x512xf32>
    %78 = arith.mulf %16, %77 : vector<64x512xf32>
    %c0_28 = arith.constant 0 : index
    %c7 = arith.constant 7 : index
    %79 = vector.load %arg4[%c0_28, %c7] : memref<64x10xf32, #tpu.memory_space<vmem>>, vector<64x1xf32>
    %80 = vector.broadcast %79 : vector<64x1xf32> to vector<64x512xf32>
    %81 = arith.mulf %40, %80 : vector<64x512xf32>
    %82 = arith.addf %78, %81 : vector<64x512xf32>
    %83 = arith.addf %59, %82 : vector<64x512xf32>
    %c511_i32 = arith.constant 511 : i32
    %84 = tpu.dynamic_rotate %16 by %c511_i32 dim 1 : vector<64x512xf32>, i32 -> vector<64x512xf32>
    %c0_29 = arith.constant 0 : index
    %c3 = arith.constant 3 : index
    %85 = vector.load %arg4[%c0_29, %c3] : memref<64x10xf32, #tpu.memory_space<vmem>>, vector<64x1xf32>
    %86 = vector.broadcast %85 : vector<64x1xf32> to vector<64x512xf32>
    %87 = arith.mulf %84, %86 : vector<64x512xf32>
    %c511_i32_30 = arith.constant 511 : i32
    %88 = tpu.dynamic_rotate %40 by %c511_i32_30 dim 1 : vector<64x512xf32>, i32 -> vector<64x512xf32>
    %c0_31 = arith.constant 0 : index
    %c8 = arith.constant 8 : index
    %89 = vector.load %arg4[%c0_31, %c8] : memref<64x10xf32, #tpu.memory_space<vmem>>, vector<64x1xf32>
    %90 = vector.broadcast %89 : vector<64x1xf32> to vector<64x512xf32>
    %91 = arith.mulf %88, %90 : vector<64x512xf32>
    %92 = arith.addf %87, %91 : vector<64x512xf32>
    %c127_i32_32 = arith.constant 127 : i32
    %93 = vector.broadcast %c127_i32_32 : i32 to vector<1x512xi32>
    %94 = arith.cmpi slt, %43, %93 : vector<1x512xi32>
    %c0_i32_33 = arith.constant 0 : i32
    %95 = arith.sitofp %c0_i32_33 : i32 to f32
    %96 = vector.shape_cast %94 : vector<1x512xi1> to vector<1x512xi1>
    %97 = vector.broadcast %96 : vector<1x512xi1> to vector<64x512xi1>
    %98 = vector.broadcast %95 : f32 to vector<64x512xf32>
    %99 = arith.select %97, %92, %98 : vector<64x512xi1>, vector<64x512xf32>
    %100 = arith.addf %75, %99 : vector<64x512xf32>
    %c510_i32 = arith.constant 510 : i32
    %101 = tpu.dynamic_rotate %16 by %c510_i32 dim 1 : vector<64x512xf32>, i32 -> vector<64x512xf32>
    %c0_34 = arith.constant 0 : index
    %c4 = arith.constant 4 : index
    %102 = vector.load %arg4[%c0_34, %c4] : memref<64x10xf32, #tpu.memory_space<vmem>>, vector<64x1xf32>
    %103 = vector.broadcast %102 : vector<64x1xf32> to vector<64x512xf32>
    %104 = arith.mulf %101, %103 : vector<64x512xf32>
    %c510_i32_35 = arith.constant 510 : i32
    %105 = tpu.dynamic_rotate %40 by %c510_i32_35 dim 1 : vector<64x512xf32>, i32 -> vector<64x512xf32>
    %c0_36 = arith.constant 0 : index
    %c9 = arith.constant 9 : index
    %106 = vector.load %arg4[%c0_36, %c9] : memref<64x10xf32, #tpu.memory_space<vmem>>, vector<64x1xf32>
    %107 = vector.broadcast %106 : vector<64x1xf32> to vector<64x512xf32>
    %108 = arith.mulf %105, %107 : vector<64x512xf32>
    %109 = arith.addf %104, %108 : vector<64x512xf32>
    %c126_i32 = arith.constant 126 : i32
    %110 = vector.broadcast %c126_i32 : i32 to vector<1x512xi32>
    %111 = arith.cmpi slt, %43, %110 : vector<1x512xi32>
    %c0_i32_37 = arith.constant 0 : i32
    %112 = arith.sitofp %c0_i32_37 : i32 to f32
    %113 = vector.shape_cast %111 : vector<1x512xi1> to vector<1x512xi1>
    %114 = vector.broadcast %113 : vector<1x512xi1> to vector<64x512xi1>
    %115 = vector.broadcast %112 : f32 to vector<64x512xf32>
    %116 = arith.select %114, %109, %115 : vector<64x512xi1>, vector<64x512xf32>
    %117 = arith.addf %83, %116 : vector<64x512xf32>
    %118 = arith.addf %117, %100 : vector<64x512xf32>
    %c0_38 = arith.constant 0 : index
    %c2_39 = arith.constant 2 : index
    %119 = vector.load %arg5[%c0_38, %c2_39] : memref<64x5xf32, #tpu.memory_space<vmem>>, vector<64x1xf32>
    %120 = vector.broadcast %119 : vector<64x1xf32> to vector<64x512xf32>
    %121 = arith.mulf %118, %120 : vector<64x512xf32>
    %c0_40 = arith.constant 0 : index
    %c3_41 = arith.constant 3 : index
    %122 = vector.load %arg5[%c0_40, %c3_41] : memref<64x5xf32, #tpu.memory_space<vmem>>, vector<64x1xf32>
    %123 = vector.broadcast %122 : vector<64x1xf32> to vector<64x512xf32>
    %124 = arith.addf %121, %123 : vector<64x512xf32>
    %cst_42 = arith.constant 0.000000e+00 : f32
    %125 = vector.broadcast %cst_42 : f32 to vector<64x512xf32>
    %126 = arith.subf %125, %124 : vector<64x512xf32>
    %127 = math.exp %126 : vector<64x512xf32>
    %cst_43 = arith.constant 1.000000e+00 : f32
    %128 = vector.broadcast %cst_43 : f32 to vector<64x512xf32>
    %129 = arith.addf %128, %127 : vector<64x512xf32>
    %130 = tpu.reciprocal %129 {approx = true} : vector<64x512xf32> -> vector<64x512xf32>
    %131 = arith.mulf %124, %130 : vector<64x512xf32>
    %c0_44 = arith.constant 0 : index
    %c0_45 = arith.constant 0 : index
    %132 = vector.load %arg2[%c0_44, %c0_45] : memref<4x512xf32, #tpu.memory_space<vmem>>, vector<4x512xf32>
    %cst_46 = arith.constant dense<0.000000e+00> : vector<64x4xf32>
    %133 = tpu.matmul %131, %132, %cst_46 {dimension_numbers = #tpu.dot_dimension_numbers<[1], [1], [0], [0], [0, 0, 1, 0], [], []>} : vector<64x512xf32>, vector<4x512xf32>, vector<64x4xf32> -> vector<64x4xf32>
    %cst_47 = arith.constant 7.812500e-03 : f32
    %134 = vector.broadcast %cst_47 : f32 to vector<64x4xf32>
    %135 = arith.mulf %133, %134 : vector<64x4xf32>
    %c0_48 = arith.constant 0 : index
    %c0_49 = arith.constant 0 : index
    %136 = vector.load %arg6[%c0_48, %c0_49] : memref<16x64xf32, #tpu.memory_space<vmem>>, vector<16x64xf32>
    %cst_50 = arith.constant dense<0.000000e+00> : vector<16x4xf32>
    %137 = tpu.matmul %136, %135, %cst_50 {dimension_numbers = #tpu.dot_dimension_numbers<[1], [0], [0], [1], [0, 0, 1, 1], [], []>} : vector<16x64xf32>, vector<64x4xf32>, vector<16x4xf32> -> vector<16x4xf32>
    %c0_51 = arith.constant 0 : index
    %c0_52 = arith.constant 0 : index
    %138 = vector.load %arg7[%c0_51, %c0_52] : memref<16x1xf32, #tpu.memory_space<vmem>>, vector<16x1xf32>
    %139 = vector.broadcast %138 : vector<16x1xf32> to vector<16x4xf32>
    %140 = arith.addf %137, %139 : vector<16x4xf32>
    %cst_53 = arith.constant 0.000000e+00 : f32
    %141 = vector.broadcast %cst_53 : f32 to vector<16x4xf32>
    %142 = arith.subf %141, %140 : vector<16x4xf32>
    %143 = math.exp %142 : vector<16x4xf32>
    %cst_54 = arith.constant 1.000000e+00 : f32
    %144 = vector.broadcast %cst_54 : f32 to vector<16x4xf32>
    %145 = arith.addf %144, %143 : vector<16x4xf32>
    %146 = tpu.reciprocal %145 {approx = true} : vector<16x4xf32> -> vector<16x4xf32>
    %147 = arith.mulf %140, %146 : vector<16x4xf32>
    %c0_55 = arith.constant 0 : index
    %c0_56 = arith.constant 0 : index
    %148 = vector.load %arg8[%c0_55, %c0_56] : memref<64x16xf32, #tpu.memory_space<vmem>>, vector<64x16xf32>
    %cst_57 = arith.constant dense<0.000000e+00> : vector<64x4xf32>
    %149 = tpu.matmul %148, %147, %cst_57 {dimension_numbers = #tpu.dot_dimension_numbers<[1], [0], [0], [1], [0, 0, 1, 1], [], []>} : vector<64x16xf32>, vector<16x4xf32>, vector<64x4xf32> -> vector<64x4xf32>
    %c0_58 = arith.constant 0 : index
    %c4_59 = arith.constant 4 : index
    %150 = vector.load %arg5[%c0_58, %c4_59] : memref<64x5xf32, #tpu.memory_space<vmem>>, vector<64x1xf32>
    %151 = vector.broadcast %150 : vector<64x1xf32> to vector<64x4xf32>
    %152 = arith.addf %149, %151 : vector<64x4xf32>
    %cst_60 = arith.constant 0.000000e+00 : f32
    %153 = vector.broadcast %cst_60 : f32 to vector<64x4xf32>
    %154 = arith.subf %153, %152 : vector<64x4xf32>
    %155 = math.exp %154 : vector<64x4xf32>
    %cst_61 = arith.constant 1.000000e+00 : f32
    %156 = vector.broadcast %cst_61 : f32 to vector<64x4xf32>
    %157 = arith.addf %156, %155 : vector<64x4xf32>
    %158 = tpu.reciprocal %157 {approx = true} : vector<64x4xf32> -> vector<64x4xf32>
    %cst_62 = arith.constant dense<0.000000e+00> : vector<64x512xf32>
    %159 = tpu.matmul %158, %132, %cst_62 {dimension_numbers = #tpu.dot_dimension_numbers<[1], [0], [0], [1], [0, 0, 1, 1], [], []>} : vector<64x4xf32>, vector<4x512xf32>, vector<64x512xf32> -> vector<64x512xf32>
    %160 = arith.mulf %131, %159 : vector<64x512xf32>
    %161 = arith.truncf %160 : vector<64x512xf32> to vector<64x512xbf16>
    %c0_63 = arith.constant 0 : index
    %c0_64 = arith.constant 0 : index
    %162 = vector.load %arg9[%c0_63, %c0_64] : memref<32x64xbf16, #tpu.memory_space<vmem>>, vector<32x64xbf16>
    %cst_65 = arith.constant dense<0.000000e+00> : vector<32x512xf32>
    %163 = tpu.matmul %162, %161, %cst_65 {dimension_numbers = #tpu.dot_dimension_numbers<[1], [0], [0], [1], [0, 0, 1, 1], [], []>} : vector<32x64xbf16>, vector<64x512xbf16>, vector<32x512xf32> -> vector<32x512xf32>
    %c0_66 = arith.constant 0 : index
    %c0_67 = arith.constant 0 : index
    %164 = vector.load %arg10[%c0_66, %c0_67] : memref<32x2xf32, #tpu.memory_space<vmem>>, vector<32x1xf32>
    %165 = vector.broadcast %164 : vector<32x1xf32> to vector<32x512xf32>
    %166 = arith.mulf %163, %165 : vector<32x512xf32>
    %c0_68 = arith.constant 0 : index
    %c1_69 = arith.constant 1 : index
    %167 = vector.load %arg10[%c0_68, %c1_69] : memref<32x2xf32, #tpu.memory_space<vmem>>, vector<32x1xf32>
    %168 = vector.broadcast %167 : vector<32x1xf32> to vector<32x512xf32>
    %169 = arith.addf %166, %168 : vector<32x512xf32>
    %cst_70 = arith.constant 0.000000e+00 : f32
    %170 = vector.broadcast %cst_70 : f32 to vector<32x512xf32>
    %171 = arith.subf %170, %169 : vector<32x512xf32>
    %172 = math.exp %171 : vector<32x512xf32>
    %cst_71 = arith.constant 1.000000e+00 : f32
    %173 = vector.broadcast %cst_71 : f32 to vector<32x512xf32>
    %174 = arith.addf %173, %172 : vector<32x512xf32>
    %175 = tpu.reciprocal %174 {approx = true} : vector<32x512xf32> -> vector<32x512xf32>
    %176 = arith.mulf %169, %175 : vector<32x512xf32>
    %c0_72 = arith.constant 0 : index
    %c0_73 = arith.constant 0 : index
    %177 = vector.load %arg11[%c0_72, %c0_73] : memref<32x512xf32, #tpu.memory_space<vmem>>, vector<32x512xf32>
    tpu.vector_store %arg11[%c0_72, %c0_73], %176 {strides = array<i32>} : memref<32x512xf32, #tpu.memory_space<vmem>>, vector<32x512xf32>,
    return
  }
  func.func @transform_0(%arg0: i32) -> (i32, i32) {
    %c0_i32 = arith.constant 0 : i32
    %c0_i32_0 = arith.constant 0 : i32
    return %arg0, %c0_i32 : i32, i32
  }
  func.func @transform_1(%arg0: i32) -> (i32, i32) {
    %c0_i32 = arith.constant 0 : i32
    %c0_i32_0 = arith.constant 0 : i32
    %c0_i32_1 = arith.constant 0 : i32
    return %c0_i32, %c0_i32_0 : i32, i32
  }
  func.func @transform_2(%arg0: i32) -> (i32, i32) {
    %c0_i32 = arith.constant 0 : i32
    %c0_i32_0 = arith.constant 0 : i32
    %c0_i32_1 = arith.constant 0 : i32
    return %c0_i32, %c0_i32_0 : i32, i32
  }
  func.func @transform_3(%arg0: i32) -> (i32, i32) {
    %c0_i32 = arith.constant 0 : i32
    %c0_i32_0 = arith.constant 0 : i32
    %c0_i32_1 = arith.constant 0 : i32
    return %c0_i32, %c0_i32_0 : i32, i32
  }
  func.func @transform_4(%arg0: i32) -> (i32, i32) {
    %c0_i32 = arith.constant 0 : i32
    %c0_i32_0 = arith.constant 0 : i32
    %c0_i32_1 = arith.constant 0 : i32
    return %c0_i32, %c0_i32_0 : i32, i32
  }
  func.func @transform_5(%arg0: i32) -> (i32, i32) {
    %c0_i32 = arith.constant 0 : i32
    %c0_i32_0 = arith.constant 0 : i32
    %c0_i32_1 = arith.constant 0 : i32
    return %c0_i32, %c0_i32_0 : i32, i32
  }
  func.func @transform_6(%arg0: i32) -> (i32, i32) {
    %c0_i32 = arith.constant 0 : i32
    %c0_i32_0 = arith.constant 0 : i32
    %c0_i32_1 = arith.constant 0 : i32
    return %c0_i32, %c0_i32_0 : i32, i32
  }
  func.func @transform_7(%arg0: i32) -> (i32, i32) {
    %c0_i32 = arith.constant 0 : i32
    %c0_i32_0 = arith.constant 0 : i32
    %c0_i32_1 = arith.constant 0 : i32
    return %c0_i32, %c0_i32_0 : i32, i32
  }
  func.func @transform_8(%arg0: i32) -> (i32, i32) {
    %c0_i32 = arith.constant 0 : i32
    %c0_i32_0 = arith.constant 0 : i32
    %c0_i32_1 = arith.constant 0 : i32
    return %c0_i32, %c0_i32_0 : i32, i32
  }
  func.func @transform_9(%arg0: i32) -> (i32, i32) {
    %c0_i32 = arith.constant 0 : i32
    %c0_i32_0 = arith.constant 0 : i32
    %c0_i32_1 = arith.constant 0 : i32
    return %c0_i32, %c0_i32_0 : i32, i32
  }
  func.func @transform_10(%arg0: i32) -> (i32, i32) {
    %c0_i32 = arith.constant 0 : i32
    %c0_i32_0 = arith.constant 0 : i32
    return %arg0, %c0_i32 : i32, i32
  }
}

</mosaic_0001>

<llo_original>
// kernel: tpu_custom_call.1
$region0: #{tpu_custom_call.1}
  #allocation0 [shape = 'u32[]', space=smem, size = 0x4, offset = 0x4, fixed_abs, tag = 'smem constant byte address 0x4 - core index']
  #allocation1 [shape = 'u32[144,128]{1,0:T(1,128)}', space=vmem, size = 0x12000, scoped, tag = 'internal scratch']
  %s0 = inlined_call_operand.hbm [shape: f32[64,512], index: 0, kind: input, shape index: {}]
  %s1 = inlined_call_operand.vmem [shape: f32[4,512], index: 1, kind: input, shape index: {}]
  %s2 = inlined_call_operand.vmem [shape: bf16[64,32], index: 2, kind: input, shape index: {}]
  %s3 = inlined_call_operand.vmem [shape: f32[64,10], index: 3, kind: input, shape index: {}]
  %s4 = inlined_call_operand.vmem [shape: f32[64,5], index: 4, kind: input, shape index: {}]
  %s5 = inlined_call_operand.vmem [shape: f32[16,64], index: 5, kind: input, shape index: {}]
  %s6 = inlined_call_operand.vmem [shape: f32[16,1], index: 6, kind: input, shape index: {}]
  %s7 = inlined_call_operand.vmem [shape: f32[64,16], index: 7, kind: input, shape index: {}]
  %s8 = inlined_call_operand.vmem [shape: bf16[32,64], index: 8, kind: input, shape index: {}]
  %s9 = inlined_call_operand.vmem [shape: f32[32,2], index: 9, kind: input, shape index: {}]
  %s10 = inlined_call_operand.hbm [shape: f32[64,512], index: 10, kind: output, shape index: {}]
  %s11 = sld [smem:[#allocation0]]
  $region77: #{tpu_custom_call.1} parent=0
    _
  %s13 = ssub.s32 1, %s11
  %s14 = scalar_select 0, %s13, %s11
  $region1: #{tpu_custom_call.1} parent=0
    #allocation2 [shape = 'u8[131072]{0}', space=vmem, size = 0x20000, scoped, tag = 'input window, operand 0']
    #allocation3 [shape = 's32[2]{0}', space=sflag, size = 0x8, scoped, tag = 'scoped memory for tpu_custom_call.1']
    #allocation4 [shape = 's32[2]{0}', space=sflag, size = 0x8, scoped, tag = 'scoped memory for tpu_custom_call.1']
    #allocation5 [shape = 'u8[131072]{0}', space=vmem, size = 0x20000, scoped, tag = 'output window, operand 0']
    %15 = vsyncpa [#allocation3], 0
    %s16 = scalar_lea.sflag [#allocation3], 1
    %17 = vsyncpa %s16, 0
    %18 = vsyncpa [#allocation4], 0
    %s19 = scalar_lea.sflag [#allocation4], 1
    %20 = vsyncpa %s19, 0
    loop: start=0, step=1, limit=4
    $region2: #{tpu_custom_call.1} parent=1 // loop_pre_header
      _
    $region3: #{tpu_custom_call.1} parent=1 // loop_header
      %s22 = sphi 0, %s26
      %p23 = scmp.ge.s32.totalorder %s22, 4
      %s32 = sphi 0, %s34
      %s35 = sphi 0, %s32
      %s36 = sphi 0, %s35
      %s52 = sphi 0, %s36
      %s56 = sphi 0, %s56
      %s58 = sphi 0, %s56
      %s59 = sphi 0, %s58
      %s73 = sphi 0, %s59
      %s77 = sphi 0, %s77
      %s79 = sphi 0, %s77
      %s80 = sphi 0, %s79
      %s94 = sphi 0, %s80
      %s98 = sphi 0, %s98
      %s100 = sphi 0, %s98
      %s101 = sphi 0, %s100
      %s115 = sphi 0, %s101
      %s119 = sphi 0, %s119
      %s121 = sphi 0, %s119
      %s122 = sphi 0, %s121
      %s136 = sphi 0, %s122
      %s140 = sphi 0, %s140
      %s142 = sphi 0, %s140
      %s143 = sphi 0, %s142
      %s157 = sphi 0, %s143
      %s161 = sphi 0, %s161
      %s163 = sphi 0, %s161
      %s164 = sphi 0, %s163
      %s178 = sphi 0, %s164
      %s182 = sphi 0, %s182
      %s184 = sphi 0, %s182
      %s185 = sphi 0, %s184
      %s199 = sphi 0, %s185
      %s203 = sphi 0, %s203
      %s205 = sphi 0, %s203
      %s206 = sphi 0, %s205
      %s220 = sphi 0, %s206
      %s224 = sphi 0, %s224
      %s226 = sphi 0, %s224
      %s227 = sphi 0, %s226
      %s241 = sphi 0, %s227
      %s247 = sphi 0, %s249
      %s250 = sphi 0, %s247
      %s251 = sphi 0, %s250
      %s267 = sphi 0, %s251
    $region4: #{tpu_custom_call.1} parent=1 // loop_header_branch
      %25 = sbr.rel (%p23) target = $region8
    $region5: #{tpu_custom_call.1} parent=1 // loop_body
      %s27 = ssub.s32 %s22, 1
      %s28 = ssub.s32 %s22, 2
      %s29 = sadd.s32 %s22, 1
      %s30 = ssub.s32 %s22, %s29
      %p31 = scmp.eq.s32.totalorder %s30, 0
      %s33 = sadd.s32 %s32, 1
      %s34 = scalar_select %p31, %s32, %s33
      %p37 = pneg %p31
      %p38 = scmp.eq.s32.totalorder %s22, 1
      %p39 = por %p37, %p38
      %p40 = scmp.ne.s32.totalorder %s32, %s35
      %p41 = scmp.eq.s32.totalorder %s22, 0
      %p42 = por %p40, %p41
      %p43 = scmp.ne.s32.totalorder %s32, %s35
      %p44 = scmp.eq.s32.totalorder %s27, 1
      %p45 = por %p43, %p44
      %p46 = scmp.ne.s32.totalorder %s35, %s36
      %p47 = scmp.eq.s32.totalorder %s27, 0
      %p48 = por %p46, %p47
      %p49 = scmp.ne.s32.totalorder %s35, %s36
      %p50 = scmp.eq.s32.totalorder %s28, 1
      %p51 = por %p49, %p50
      %p53 = scmp.ne.s32.totalorder %s36, %s52
      %p54 = scmp.eq.s32.totalorder %s28, 0
      %p55 = por %p53, %p54
      %s57 = sadd.s32 %s56, 1
      %p60 = scmp.eq.s32.totalorder %s22, 1
      %p61 = scmp.ne.s32.totalorder %s56, %s58
      %p62 = scmp.eq.s32.totalorder %s22, 0
      %p63 = por %p61, %p62
      %p64 = scmp.ne.s32.totalorder %s56, %s58
      %p65 = scmp.eq.s32.totalorder %s27, 1
      %p66 = por %p64, %p65
      %p67 = scmp.ne.s32.totalorder %s58, %s59
      %p68 = scmp.eq.s32.totalorder %s27, 0
      %p69 = por %p67, %p68
      %p70 = scmp.ne.s32.totalorder %s58, %s59
      %p71 = scmp.eq.s32.totalorder %s28, 1
      %p72 = por %p70, %p71
      %p74 = scmp.ne.s32.totalorder %s59, %s73
      %p75 = scmp.eq.s32.totalorder %s28, 0
      %p76 = por %p74, %p75
      %s78 = sadd.s32 %s77, 1
      %p81 = scmp.eq.s32.totalorder %s22, 1
      %p82 = scmp.ne.s32.totalorder %s77, %s79
      %p83 = scmp.eq.s32.totalorder %s22, 0
      %p84 = por %p82, %p83
      %p85 = scmp.ne.s32.totalorder %s77, %s79
      %p86 = scmp.eq.s32.totalorder %s27, 1
      %p87 = por %p85, %p86
      %p88 = scmp.ne.s32.totalorder %s79, %s80
      %p89 = scmp.eq.s32.totalorder %s27, 0
      %p90 = por %p88, %p89
      %p91 = scmp.ne.s32.totalorder %s79, %s80
      %p92 = scmp.eq.s32.totalorder %s28, 1
      %p93 = por %p91, %p92
      %p95 = scmp.ne.s32.totalorder %s80, %s94
      %p96 = scmp.eq.s32.totalorder %s28, 0
      %p97 = por %p95, %p96
      %s99 = sadd.s32 %s98, 1
      %p102 = scmp.eq.s32.totalorder %s22, 1
      %p103 = scmp.ne.s32.totalorder %s98, %s100
      %p104 = scmp.eq.s32.totalorder %s22, 0
      %p105 = por %p103, %p104
      %p106 = scmp.ne.s32.totalorder %s98, %s100
      %p107 = scmp.eq.s32.totalorder %s27, 1
      %p108 = por %p106, %p107
      %p109 = scmp.ne.s32.totalorder %s100, %s101
      %p110 = scmp.eq.s32.totalorder %s27, 0
      %p111 = por %p109, %p110
      %p112 = scmp.ne.s32.totalorder %s100, %s101
      %p113 = scmp.eq.s32.totalorder %s28, 1
      %p114 = por %p112, %p113
      %p116 = scmp.ne.s32.totalorder %s101, %s115
      %p117 = scmp.eq.s32.totalorder %s28, 0
      %p118 = por %p116, %p117
      %s120 = sadd.s32 %s119, 1
      %p123 = scmp.eq.s32.totalorder %s22, 1
      %p124 = scmp.ne.s32.totalorder %s119, %s121
      %p125 = scmp.eq.s32.totalorder %s22, 0
      %p126 = por %p124, %p125
      %p127 = scmp.ne.s32.totalorder %s119, %s121
      %p128 = scmp.eq.s32.totalorder %s27, 1
      %p129 = por %p127, %p128
      %p130 = scmp.ne.s32.totalorder %s121, %s122
      %p131 = scmp.eq.s32.totalorder %s27, 0
      %p132 = por %p130, %p131
      %p133 = scmp.ne.s32.totalorder %s121, %s122
      %p134 = scmp.eq.s32.totalorder %s28, 1
      %p135 = por %p133, %p134
      %p137 = scmp.ne.s32.totalorder %s122, %s136
      %p138 = scmp.eq.s32.totalorder %s28, 0
      %p139 = por %p137, %p138
      %s141 = sadd.s32 %s140, 1
      %p144 = scmp.eq.s32.totalorder %s22, 1
      %p145 = scmp.ne.s32.totalorder %s140, %s142
      %p146 = scmp.eq.s32.totalorder %s22, 0
      %p147 = por %p145, %p146
      %p148 = scmp.ne.s32.totalorder %s140, %s142
      %p149 = scmp.eq.s32.totalorder %s27, 1
      %p150 = por %p148, %p149
      %p151 = scmp.ne.s32.totalorder %s142, %s143
      %p152 = scmp.eq.s32.totalorder %s27, 0
      %p153 = por %p151, %p152
      %p154 = scmp.ne.s32.totalorder %s142, %s143
      %p155 = scmp.eq.s32.totalorder %s28, 1
      %p156 = por %p154, %p155
      %p158 = scmp.ne.s32.totalorder %s143, %s157
      %p159 = scmp.eq.s32.totalorder %s28, 0
      %p160 = por %p158, %p159
      %s162 = sadd.s32 %s161, 1
      %p165 = scmp.eq.s32.totalorder %s22, 1
      %p166 = scmp.ne.s32.totalorder %s161, %s163
      %p167 = scmp.eq.s32.totalorder %s22, 0
      %p168 = por %p166, %p167
      %p169 = scmp.ne.s32.totalorder %s161, %s163
      %p170 = scmp.eq.s32.totalorder %s27, 1
      %p171 = por %p169, %p170
      %p172 = scmp.ne.s32.totalorder %s163, %s164
      %p173 = scmp.eq.s32.totalorder %s27, 0
      %p174 = por %p172, %p173
      %p175 = scmp.ne.s32.totalorder %s163, %s164
      %p176 = scmp.eq.s32.totalorder %s28, 1
      %p177 = por %p175, %p176
      %p179 = scmp.ne.s32.totalorder %s164, %s178
      %p180 = scmp.eq.s32.totalorder %s28, 0
      %p181 = por %p179, %p180
      %s183 = sadd.s32 %s182, 1
      %p186 = scmp.eq.s32.totalorder %s22, 1
      %p187 = scmp.ne.s32.totalorder %s182, %s184
      %p188 = scmp.eq.s32.totalorder %s22, 0
      %p189 = por %p187, %p188
      %p190 = scmp.ne.s32.totalorder %s182, %s184
      %p191 = scmp.eq.s32.totalorder %s27, 1
      %p192 = por %p190, %p191
      %p193 = scmp.ne.s32.totalorder %s184, %s185
      %p194 = scmp.eq.s32.totalorder %s27, 0
      %p195 = por %p193, %p194
      %p196 = scmp.ne.s32.totalorder %s184, %s185
      %p197 = scmp.eq.s32.totalorder %s28, 1
      %p198 = por %p196, %p197
      %p200 = scmp.ne.s32.totalorder %s185, %s199
      %p201 = scmp.eq.s32.totalorder %s28, 0
      %p202 = por %p200, %p201
      %s204 = sadd.s32 %s203, 1
      %p207 = scmp.eq.s32.totalorder %s22, 1
      %p208 = scmp.ne.s32.totalorder %s203, %s205
      %p209 = scmp.eq.s32.totalorder %s22, 0
      %p210 = por %p208, %p209
      %p211 = scmp.ne.s32.totalorder %s203, %s205
      %p212 = scmp.eq.s32.totalorder %s27, 1
      %p213 = por %p211, %p212
      %p214 = scmp.ne.s32.totalorder %s205, %s206
      %p215 = scmp.eq.s32.totalorder %s27, 0
      %p216 = por %p214, %p215
      %p217 = scmp.ne.s32.totalorder %s205, %s206
      %p218 = scmp.eq.s32.totalorder %s28, 1
      %p219 = por %p217, %p218
      %p221 = scmp.ne.s32.totalorder %s206, %s220
      %p222 = scmp.eq.s32.totalorder %s28, 0
      %p223 = por %p221, %p222
      %s225 = sadd.s32 %s224, 1
      %p228 = scmp.eq.s32.totalorder %s22, 1
      %p229 = scmp.ne.s32.totalorder %s224, %s226
      %p230 = scmp.eq.s32.totalorder %s22, 0
      %p231 = por %p229, %p230
      %p232 = scmp.ne.s32.totalorder %s224, %s226
      %p233 = scmp.eq.s32.totalorder %s27, 1
      %p234 = por %p232, %p233
      %p235 = scmp.ne.s32.totalorder %s226, %s227
      %p236 = scmp.eq.s32.totalorder %s27, 0
      %p237 = por %p235, %p236
      %p238 = scmp.ne.s32.totalorder %s226, %s227
      %p239 = scmp.eq.s32.totalorder %s28, 1
      %p240 = por %p238, %p239
      %p242 = scmp.ne.s32.totalorder %s227, %s241
      %p243 = scmp.eq.s32.totalorder %s28, 0
      %p244 = por %p242, %p243
      %s245 = ssub.s32 %s22, %s29
      %p246 = scmp.eq.s32.totalorder %s245, 0
      %s248 = sadd.s32 %s247, 1
      %s249 = scalar_select %p246, %s247, %s248
      %p252 = pneg %p246
      %p253 = scmp.eq.s32.totalorder %s22, 1
      %p254 = por %p252, %p253
      %p255 = scmp.ne.s32.totalorder %s247, %s250
      %p256 = scmp.eq.s32.totalorder %s22, 0
      %p257 = por %p255, %p256
      %p258 = scmp.ne.s32.totalorder %s247, %s250
      %p259 = scmp.eq.s32.totalorder %s27, 1
      %p260 = por %p258, %p259
      %p261 = scmp.ne.s32.totalorder %s250, %s251
      %p262 = scmp.eq.s32.totalorder %s27, 0
      %p263 = por %p261, %p262
      %p264 = scmp.ne.s32.totalorder %s250, %s251
      %p265 = scmp.eq.s32.totalorder %s28, 1
      %p266 = por %p264, %p265
      %p268 = scmp.ne.s32.totalorder %s251, %s267
      %p269 = scmp.eq.s32.totalorder %s28, 0
      %p270 = por %p268, %p269
      %p271 = scmp.le.s32.totalorder 1, %s22
      %p272 = scmp.lt.s32.totalorder %s22, 3
      %p273 = pnand %p271, %p272
      %p274 = pneg %p273
      // Predicated region
      $region9: #{tpu_custom_call.1} parent=5 // pred_check
        _
      $region10: #{tpu_custom_call.1} parent=5 // pred_check_branch
        %276 = sbr.rel (%p273) target = $region12
      $region11: #{tpu_custom_call.1} parent=5 // pred_region
        %s277 = ssub.s32 %s22, 1
        // Predicated region
        $region13: #{tpu_custom_call.1} parent=11 // pred_check
          %p278 = pneg %p69
        $region14: #{tpu_custom_call.1} parent=11 // pred_check_branch
          %280 = sbr.rel (%p278) target = $region16
        $region15: #{tpu_custom_call.1} parent=11 // pred_region
          _
        $region16: #{tpu_custom_call.1} parent=11 // pred_fallthru
          _
        // Predicated region
        $region17: #{tpu_custom_call.1} parent=11 // pred_check
          %p281 = pneg %p90
        $region18: #{tpu_custom_call.1} parent=11 // pred_check_branch
          %283 = sbr.rel (%p281) target = $region20
        $region19: #{tpu_custom_call.1} parent=11 // pred_region
          _
        $region20: #{tpu_custom_call.1} parent=11 // pred_fallthru
          _
        // Predicated region
        $region21: #{tpu_custom_call.1} parent=11 // pred_check
          %p284 = pneg %p111
        $region22: #{tpu_custom_call.1} parent=11 // pred_check_branch
          %286 = sbr.rel (%p284) target = $region24
        $region23: #{tpu_custom_call.1} parent=11 // pred_region
          _
        $region24: #{tpu_custom_call.1} parent=11 // pred_fallthru
          _
        // Predicated region
        $region25: #{tpu_custom_call.1} parent=11 // pred_check
          %p287 = pneg %p132
        $region26: #{tpu_custom_call.1} parent=11 // pred_check_branch
          %289 = sbr.rel (%p287) target = $region28
        $region27: #{tpu_custom_call.1} parent=11 // pred_region
          _
        $region28: #{tpu_custom_call.1} parent=11 // pred_fallthru
          _
        // Predicated region
        $region29: #{tpu_custom_call.1} parent=11 // pred_check
          %p290 = pneg %p153
        $region30: #{tpu_custom_call.1} parent=11 // pred_check_branch
          %292 = sbr.rel (%p290) target = $region32
        $region31: #{tpu_custom_call.1} parent=11 // pred_region
          _
        $region32: #{tpu_custom_call.1} parent=11 // pred_fallthru
          _
        // Predicated region
        $region33: #{tpu_custom_call.1} parent=11 // pred_check
          %p293 = pneg %p174
        $region34: #{tpu_custom_call.1} parent=11 // pred_check_branch
          %295 = sbr.rel (%p293) target = $region36
        $region35: #{tpu_custom_call.1} parent=11 // pred_region
          _
        $region36: #{tpu_custom_call.1} parent=11 // pred_fallthru
          _
        // Predicated region
        $region37: #{tpu_custom_call.1} parent=11 // pred_check
          %p296 = pneg %p195
        $region38: #{tpu_custom_call.1} parent=11 // pred_check_branch
          %298 = sbr.rel (%p296) target = $region40
        $region39: #{tpu_custom_call.1} parent=11 // pred_region
          _
        $region40: #{tpu_custom_call.1} parent=11 // pred_fallthru
          _
        // Predicated region
        $region41: #{tpu_custom_call.1} parent=11 // pred_check
          %p299 = pneg %p216
        $region42: #{tpu_custom_call.1} parent=11 // pred_check_branch
          %301 = sbr.rel (%p299) target = $region44
        $region43: #{tpu_custom_call.1} parent=11 // pred_region
          _
        $region44: #{tpu_custom_call.1} parent=11 // pred_fallthru
          _
        // Predicated region
        $region45: #{tpu_custom_call.1} parent=11 // pred_check
          %p302 = pneg %p237
        $region46: #{tpu_custom_call.1} parent=11 // pred_check_branch
          %304 = sbr.rel (%p302) target = $region48
        $region47: #{tpu_custom_call.1} parent=11 // pred_region
          _
        $region48: #{tpu_custom_call.1} parent=11 // pred_fallthru
          _
      $region12: #{tpu_custom_call.1} parent=5 // pred_fallthru
        _
      %p305 = scmp.lt.s32.totalorder %s22, 2
      // Predicated region
      $region49: #{tpu_custom_call.1} parent=5 // pred_check
        %p306 = pneg %p305
      $region50: #{tpu_custom_call.1} parent=5 // pred_check_branch
        %308 = sbr.rel (%p306) target = $region52
      $region51: #{tpu_custom_call.1} parent=5 // pred_region
        // Predicated region
        $region53: #{tpu_custom_call.1} parent=51 // pred_check
          %p309 = pneg %p42
        $region54: #{tpu_custom_call.1} parent=51 // pred_check_branch
          %311 = sbr.rel (%p309) target = $region56
        $region55: #{tpu_custom_call.1} parent=51 // pred_region
          %s312 = sand.u32 %s32, 1
          %s313 = scalar_lea.sflag [#allocation3], %s312
          %s314 = sand.u32 %s32, 1
          %s315 = smul.addr %s314, 128
          %s316 = scalar_lea.vmem [#allocation2], %s315
          %s317 = smul.u32 4, %s22
          %s319 = ssub.s32 2048, 2048
          %320 = vsyncadd %s313, %s319
          %s321 = smul.addr %s317, 4
          %s322 = smul.addr %s321, 128
          %s323 = scalar_lea.hbm %s0, %s322
          %s324 = sshll.u32 %s316, 4
          %s325 = int_to_ptr.vmem [resolvable:$true] %s324
          %330 = dma.hbm_to_vmem [thread:$0]  %s323, 2048, %s325, %s313, 512, 512, 32
        $region56: #{tpu_custom_call.1} parent=51 // pred_fallthru
          _
      $region52: #{tpu_custom_call.1} parent=5 // pred_fallthru
        _
      %p331 = scmp.le.s32.totalorder 1, %s22
      %p332 = scmp.lt.s32.totalorder %s22, 3
      %p333 = pnand %p331, %p332
      %p334 = pneg %p333
      // Predicated region
      $region57: #{tpu_custom_call.1} parent=5 // pred_check
        _
      $region58: #{tpu_custom_call.1} parent=5 // pred_check_branch
        %336 = sbr.rel (%p333) target = $region60
      $region59: #{tpu_custom_call.1} parent=5 // pred_region
        %s337 = ssub.s32 %s22, 1
        %s338 = sand.u32 %s35, 1
        %s339 = scalar_lea.sflag [#allocation3], %s338
        %s340 = sand.u32 %s35, 1
        %s341 = smul.addr %s340, 128
        %s342 = scalar_lea.vmem [#allocation2], %s341
        // Predicated region
        $region61: #{tpu_custom_call.1} parent=59 // pred_check
          %p343 = pneg %p48
        $region62: #{tpu_custom_call.1} parent=59 // pred_check_branch
          %345 = sbr.rel (%p343) target = $region64
        $region63: #{tpu_custom_call.1} parent=59 // pred_region
          %346 = dma.done %s339, 2048
        $region64: #{tpu_custom_call.1} parent=59 // pred_fallthru
          _
        %s347 = sand.u32 %s35, 1
        %s348 = scalar_lea.sflag [#allocation3], %s347
        %s349 = sand.u32 %s35, 1
        %s350 = smul.addr %s349, 128
        %s351 = scalar_lea.vmem [#allocation2], %s350
        %p352 = pneg %p48
        %p353 = pneg %p45
        %p354 = pneg %p69
        %p355 = pneg %p66
        %p356 = pneg %p90
        %p357 = pneg %p87
        %p358 = pneg %p111
        %p359 = pneg %p108
        %p360 = pneg %p132
        %p361 = pneg %p129
        %p362 = pneg %p153
        %p363 = pneg %p150
        %p364 = pneg %p174
        %p365 = pneg %p171
        %p366 = pneg %p195
        %p367 = pneg %p192
        %p368 = pneg %p216
        %p369 = pneg %p213
        %p370 = pneg %p237
        %p371 = pneg %p234
        %p372 = pneg %p263
        %p373 = pneg %p260
        %s374 = sand.u32 %s250, 1
        %s375 = scalar_lea.sflag [#allocation4], %s374
        %s376 = sand.u32 %s250, 1
        %s377 = smul.addr %s376, 128
        %s378 = scalar_lea.vmem [#allocation5], %s377
        %s379 = smul.u32 4, %s27
        %s380 = smul.u32 4, %s27
        %v382 = vld [vmem:[%s2] sm:$0xf]
        %v383 = vld [vmem:[%s2 + $0x4] sm:$0xf]
        %v384 = vld [vmem:[%s2 + $0x8] sm:$0xf]
        %v385 = vld [vmem:[%s2 + $0xc] sm:$0xf]
        %v386 = vld [vmem:[%s2 + $0x10] sm:$0xf]
        %v387 = vld [vmem:[%s2 + $0x14] sm:$0xf]
        %v388 = vld [vmem:[%s2 + $0x18] sm:$0xf]
        %v389 = vld [vmem:[%s2 + $0x1c] sm:$0xf]
        %v390 = vld [vmem:[%s342] sm:$0xff]
        %v391 = vld [vmem:[%s342 + $0x8] sm:$0xff]
        %v392 = vld [vmem:[%s342 + $0x10] sm:$0xff]
        %v393 = vld [vmem:[%s342 + $0x18] sm:$0xff]
        %v394 = vld [vmem:[%s342 + $0x20] sm:$0xff]
        %v395 = vld [vmem:[%s342 + $0x28] sm:$0xff]
        %v396 = vld [vmem:[%s342 + $0x30] sm:$0xff]
        %v397 = vld [vmem:[%s342 + $0x38] sm:$0xff]
        %v398 = vld [vmem:[%s342 + $0x40] sm:$0xff]
        %v399 = vld [vmem:[%s342 + $0x48] sm:$0xff]
        %v400 = vld [vmem:[%s342 + $0x50] sm:$0xff]
        %v401 = vld [vmem:[%s342 + $0x58] sm:$0xff]
        %v402 = vld [vmem:[%s342 + $0x60] sm:$0xff]
        %v403 = vld [vmem:[%s342 + $0x68] sm:$0xff]
        %v404 = vld [vmem:[%s342 + $0x70] sm:$0xff]
        %v405 = vld [vmem:[%s342 + $0x78] sm:$0xff]
        %v406 = vpack.c.bf16 %v394, %v390
        %v407 = vpack.c.bf16 %v395, %v391
        %v408 = vpack.c.bf16 %v396, %v392
        %v409 = vpack.c.bf16 %v397, %v393
        %v410 = vpack.c.bf16 %v402, %v398
        %v411 = vpack.c.bf16 %v403, %v399
        %v412 = vpack.c.bf16 %v404, %v400
        %v413 = vpack.c.bf16 %v405, %v401
        %v422 = vunpack.c.l.b16 %v382
        %v423 = vunpack.c.l.b16 %v383
        %v424 = vunpack.c.l.b16 %v384
        %v425 = vunpack.c.l.b16 %v385
        %v426 = vunpack.c.l.b16 %v386
        %v427 = vunpack.c.l.b16 %v387
        %v428 = vunpack.c.l.b16 %v388
        %v429 = vunpack.c.l.b16 %v389
        %v430 = vpack.c.b16 %v423, %v422
        %v431 = vpack.c.b16 %v425, %v424
        %v432 = vpack.c.b16 %v427, %v426
        %v433 = vpack.c.b16 %v429, %v428
        %vm434 = vcmask 261120
        %v436 = vsel %vm434, %v430, 0
        %v439 = vsel %vm434, %v431, 0
        %v442 = vsel %vm434, %v432, 0
        %v445 = vsel %vm434, %v433, 0
        %447 = vmatprep.subr.bf16.mxu0 %v407
        %448 = vmatpush1.bf16.msra.mxu0 %v406
        %449 = vmatprep.subr.bf16.mxu0 %v411
        %450 = vmatpush1.bf16.msra.mxu0 %v410
        %451 = vmatprep.subr.bf16.mxu0 0
        %452 = vmatpush1.bf16.msra.mxu0 0
        %453 = vmatprep.subr.bf16.mxu0 0
        %454 = vmatpush1.bf16.msra.mxu0 0
        %455 = vmatprep.subr.bf16.mxu0 0
        %456 = vmatpush1.bf16.msra.mxu0 0
        %457 = vmatprep.subr.bf16.mxu0 0
        %458 = vmatpush1.bf16.msra.mxu0 0
        %459 = vmatprep.subr.bf16.mxu0 0
        %460 = vmatpush1.bf16.msra.mxu0 0
        %461 = vmatprep.subr.bf16.mxu0 0
        %462 = vmatpush1.bf16.msra.mxu0 0
        %463 = vmatprep.subr.bf16.mxu0 0
        %464 = vmatpush1.bf16.msra.mxu0 0
        %465 = vmatprep.subr.bf16.mxu0 0
        %466 = vmatpush1.bf16.msra.mxu0 0
        %467 = vmatprep.subr.bf16.mxu0 0
        %468 = vmatpush1.bf16.msra.mxu0 0
        %469 = vmatprep.subr.bf16.mxu0 0
        %470 = vmatpush1.bf16.msra.mxu0 0
        %471 = vmatprep.subr.bf16.mxu0 0
        %472 = vmatpush1.bf16.msra.mxu0 0
        %473 = vmatprep.subr.bf16.mxu0 0
        %474 = vmatpush1.bf16.msra.mxu0 0
        %475 = vmatprep.subr.bf16.mxu0 0
        %476 = vmatpush1.bf16.msra.mxu0 0
        %477 = vmatprep.subr.bf16.mxu0 0
        %478 = vmatpush1.bf16.msra.mxu0 0
        %479 = vmatprep.mubr.bf16.mxu0 0
        %480 = vmatmul.mubr.bf16.gmra.mrb[0].mxu0 %v436
        %v481 = vpop.f32.mrb[0].mxu0
        %v482 = vadd.f32 0.0, %v481
        %v483 = vpop.f32.mrb[0].mxu0
        %v484 = vadd.f32 0.0, %v483
        %v485 = vpop.f32.mrb[0].mxu0
        %v486 = vadd.f32 0.0, %v485
        %v487 = vpop.f32.mrb[0].mxu0
        %v488 = vadd.f32 0.0, %v487
        %489 = vmatprep.mubr.bf16.mxu0 0
        %490 = vmatmul.mubr.bf16.gmra.mrb[0].mxu0 %v439
        %v491 = vpop.f32.mrb[0].mxu0
        %v492 = vadd.f32 0.0, %v491
        %v493 = vpop.f32.mrb[0].mxu0
        %v494 = vadd.f32 0.0, %v493
        %v495 = vpop.f32.mrb[0].mxu0
        %v496 = vadd.f32 0.0, %v495
        %v497 = vpop.f32.mrb[0].mxu0
        %v498 = vadd.f32 0.0, %v497
        %499 = vmatprep.mubr.bf16.mxu0 0
        %500 = vmatmul.mubr.bf16.gmra.mrb[0].mxu0 %v442
        %v501 = vpop.f32.mrb[0].mxu0
        %v502 = vadd.f32 0.0, %v501
        %v503 = vpop.f32.mrb[0].mxu0
        %v504 = vadd.f32 0.0, %v503
        %v505 = vpop.f32.mrb[0].mxu0
        %v506 = vadd.f32 0.0, %v505
        %v507 = vpop.f32.mrb[0].mxu0
        %v508 = vadd.f32 0.0, %v507
        %509 = vmatprep.mubr.bf16.mxu0 0
        %510 = vmatmul.mubr.bf16.gmra.mrb[0].mxu0 %v445
        %v511 = vpop.f32.mrb[0].mxu0
        %v512 = vadd.f32 0.0, %v511
        %v513 = vpop.f32.mrb[0].mxu0
        %v514 = vadd.f32 0.0, %v513
        %v515 = vpop.f32.mrb[0].mxu0
        %v516 = vadd.f32 0.0, %v515
        %v517 = vpop.f32.mrb[0].mxu0
        %v518 = vadd.f32 0.0, %v517
        %519 = vdwg.mxu0
        %520 = vmatprep.subr.bf16.mxu0 %v409
        %521 = vmatpush1.bf16.msra.mxu0 %v408
        %522 = vmatprep.subr.bf16.mxu0 %v413
        %523 = vmatpush1.bf16.msra.mxu0 %v412
        %524 = vmatprep.subr.bf16.mxu0 0
        %525 = vmatpush1.bf16.msra.mxu0 0
        %526 = vmatprep.subr.bf16.mxu0 0
        %527 = vmatpush1.bf16.msra.mxu0 0
        %528 = vmatprep.subr.bf16.mxu0 0
        %529 = vmatpush1.bf16.msra.mxu0 0
        %530 = vmatprep.subr.bf16.mxu0 0
        %531 = vmatpush1.bf16.msra.mxu0 0
        %532 = vmatprep.subr.bf16.mxu0 0
        %533 = vmatpush1.bf16.msra.mxu0 0
        %534 = vmatprep.subr.bf16.mxu0 0
        %535 = vmatpush1.bf16.msra.mxu0 0
        %536 = vmatprep.subr.bf16.mxu0 0
        %537 = vmatpush1.bf16.msra.mxu0 0
        %538 = vmatprep.subr.bf16.mxu0 0
        %539 = vmatpush1.bf16.msra.mxu0 0
        %540 = vmatprep.subr.bf16.mxu0 0
        %541 = vmatpush1.bf16.msra.mxu0 0
        %542 = vmatprep.subr.bf16.mxu0 0
        %543 = vmatpush1.bf16.msra.mxu0 0
        %544 = vmatprep.subr.bf16.mxu0 0
        %545 = vmatpush1.bf16.msra.mxu0 0
        %546 = vmatprep.subr.bf16.mxu0 0
        %547 = vmatpush1.bf16.msra.mxu0 0
        %548 = vmatprep.subr.bf16.mxu0 0
        %549 = vmatpush1.bf16.msra.mxu0 0
        %550 = vmatprep.subr.bf16.mxu0 0
        %551 = vmatpush1.bf16.msra.mxu0 0
        %552 = vmatprep.mubr.bf16.mxu0 0
        %553 = vmatmul.mubr.bf16.gmra.mrb[0].mxu0 %v436
        %v554 = vpop.f32.mrb[0].mxu0
        %v555 = vadd.f32 0.0, %v554
        %v556 = vpop.f32.mrb[0].mxu0
        %v557 = vadd.f32 0.0, %v556
        %v558 = vpop.f32.mrb[0].mxu0
        %v559 = vadd.f32 0.0, %v558
        %v560 = vpop.f32.mrb[0].mxu0
        %v561 = vadd.f32 0.0, %v560
        %562 = vmatprep.mubr.bf16.mxu0 0
        %563 = vmatmul.mubr.bf16.gmra.mrb[0].mxu0 %v439
        %v564 = vpop.f32.mrb[0].mxu0
        %v565 = vadd.f32 0.0, %v564
        %v566 = vpop.f32.mrb[0].mxu0
        %v567 = vadd.f32 0.0, %v566
        %v568 = vpop.f32.mrb[0].mxu0
        %v569 = vadd.f32 0.0, %v568
        %v570 = vpop.f32.mrb[0].mxu0
        %v571 = vadd.f32 0.0, %v570
        %572 = vmatprep.mubr.bf16.mxu0 0
        %573 = vmatmul.mubr.bf16.gmra.mrb[0].mxu0 %v442
        %v574 = vpop.f32.mrb[0].mxu0
        %v575 = vadd.f32 0.0, %v574
        %v576 = vpop.f32.mrb[0].mxu0
        %v577 = vadd.f32 0.0, %v576
        %v578 = vpop.f32.mrb[0].mxu0
        %v579 = vadd.f32 0.0, %v578
        %v580 = vpop.f32.mrb[0].mxu0
        %v581 = vadd.f32 0.0, %v580
        %582 = vmatprep.mubr.bf16.mxu0 0
        %583 = vmatmul.mubr.bf16.gmra.mrb[0].mxu0 %v445
        %v584 = vpop.f32.mrb[0].mxu0
        %v585 = vadd.f32 0.0, %v584
        %v586 = vpop.f32.mrb[0].mxu0
        %v587 = vadd.f32 0.0, %v586
        %v588 = vpop.f32.mrb[0].mxu0
        %v589 = vadd.f32 0.0, %v588
        %v590 = vpop.f32.mrb[0].mxu0
        %v591 = vadd.f32 0.0, %v590
        %592 = vdwg.mxu0
        %v593 = vld [vmem:[%s4] sm:$0xff]
        %v594 = vld [vmem:[%s4 + $0x8] sm:$0xff]
        %v595 = vld [vmem:[%s4 + $0x10] sm:$0xff]
        %v596 = vld [vmem:[%s4 + $0x18] sm:$0xff]
        %v597 = vld [vmem:[%s4 + $0x20] sm:$0xff]
        %v598 = vld [vmem:[%s4 + $0x28] sm:$0xff]
        %v599 = vld [vmem:[%s4 + $0x30] sm:$0xff]
        %v600 = vld [vmem:[%s4 + $0x38] sm:$0xff]
        %602 = vset.pattern.permute.xlu0 0
        %603 = vperm.xlu0 %602, %v593
        %v604 = vpop.permute.xlu0 %603
        %607 = vset.pattern.permute.xlu0 0
        %608 = vperm.xlu0 %607, %v594
        %v609 = vpop.permute.xlu0 %608
        %612 = vset.pattern.permute.xlu0 0
        %613 = vperm.xlu0 %612, %v595
        %v614 = vpop.permute.xlu0 %613
        %617 = vset.pattern.permute.xlu0 0
        %618 = vperm.xlu0 %617, %v596
        %v619 = vpop.permute.xlu0 %618
        %622 = vset.pattern.permute.xlu0 0
        %623 = vperm.xlu0 %622, %v597
        %v624 = vpop.permute.xlu0 %623
        %627 = vset.pattern.permute.xlu0 0
        %628 = vperm.xlu0 %627, %v598
        %v629 = vpop.permute.xlu0 %628
        %632 = vset.pattern.permute.xlu0 0
        %633 = vperm.xlu0 %632, %v599
        %v634 = vpop.permute.xlu0 %633
        %637 = vset.pattern.permute.xlu0 0
        %638 = vperm.xlu0 %637, %v600
        %v639 = vpop.permute.xlu0 %638
        %v641 = vmul.f32 %v482, %v604
        %v642 = vmul.f32 %v484, %v604
        %v643 = vmul.f32 %v555, %v604
        %v644 = vmul.f32 %v557, %v604
        %v645 = vmul.f32 %v486, %v609
        %v646 = vmul.f32 %v488, %v609
        %v647 = vmul.f32 %v559, %v609
        %v648 = vmul.f32 %v561, %v609
        %v649 = vmul.f32 %v492, %v614
        %v650 = vmul.f32 %v494, %v614
        %v651 = vmul.f32 %v565, %v614
        %v652 = vmul.f32 %v567, %v614
        %v653 = vmul.f32 %v496, %v619
        %v654 = vmul.f32 %v498, %v619
        %v655 = vmul.f32 %v569, %v619
        %v656 = vmul.f32 %v571, %v619
        %v657 = vmul.f32 %v502, %v624
        %v658 = vmul.f32 %v504, %v624
        %v659 = vmul.f32 %v575, %v624
        %v660 = vmul.f32 %v577, %v624
        %v661 = vmul.f32 %v506, %v629
        %v662 = vmul.f32 %v508, %v629
        %v663 = vmul.f32 %v579, %v629
        %v664 = vmul.f32 %v581, %v629
        %v665 = vmul.f32 %v512, %v634
        %v666 = vmul.f32 %v514, %v634
        %v667 = vmul.f32 %v585, %v634
        %v668 = vmul.f32 %v587, %v634
        %v669 = vmul.f32 %v516, %v639
        %v670 = vmul.f32 %v518, %v639
        %v671 = vmul.f32 %v589, %v639
        %v672 = vmul.f32 %v591, %v639
        %673 = vset.pattern.permute.xlu0 1
        %674 = vperm.xlu0 %673, %v593
        %v675 = vpop.permute.xlu0 %674
        %677 = vset.pattern.permute.xlu0 1
        %678 = vperm.xlu0 %677, %v594
        %v679 = vpop.permute.xlu0 %678
        %681 = vset.pattern.permute.xlu0 1
        %682 = vperm.xlu0 %681, %v595
        %v683 = vpop.permute.xlu0 %682
        %685 = vset.pattern.permute.xlu0 1
        %686 = vperm.xlu0 %685, %v596
        %v687 = vpop.permute.xlu0 %686
        %689 = vset.pattern.permute.xlu0 1
        %690 = vperm.xlu0 %689, %v597
        %v691 = vpop.permute.xlu0 %690
        %693 = vset.pattern.permute.xlu0 1
        %694 = vperm.xlu0 %693, %v598
        %v695 = vpop.permute.xlu0 %694
        %697 = vset.pattern.permute.xlu0 1
        %698 = vperm.xlu0 %697, %v599
        %v699 = vpop.permute.xlu0 %698
        %701 = vset.pattern.permute.xlu0 1
        %702 = vperm.xlu0 %701, %v600
        %v703 = vpop.permute.xlu0 %702
        %v705 = vadd.f32 %v641, %v675
        %v706 = vadd.f32 %v642, %v675
        %v707 = vadd.f32 %v643, %v675
        %v708 = vadd.f32 %v644, %v675
        %v709 = vadd.f32 %v645, %v679
        %v710 = vadd.f32 %v646, %v679
        %v711 = vadd.f32 %v647, %v679
        %v712 = vadd.f32 %v648, %v679
        %v713 = vadd.f32 %v649, %v683
        %v714 = vadd.f32 %v650, %v683
        %v715 = vadd.f32 %v651, %v683
        %v716 = vadd.f32 %v652, %v683
        %v717 = vadd.f32 %v653, %v687
        %v718 = vadd.f32 %v654, %v687
        %v719 = vadd.f32 %v655, %v687
        %v720 = vadd.f32 %v656, %v687
        %v721 = vadd.f32 %v657, %v691
        %v722 = vadd.f32 %v658, %v691
        %v723 = vadd.f32 %v659, %v691
        %v724 = vadd.f32 %v660, %v691
        %v725 = vadd.f32 %v661, %v695
        %v726 = vadd.f32 %v662, %v695
        %v727 = vadd.f32 %v663, %v695
        %v728 = vadd.f32 %v664, %v695
        %v729 = vadd.f32 %v665, %v699
        %v730 = vadd.f32 %v666, %v699
        %v731 = vadd.f32 %v667, %v699
        %v732 = vadd.f32 %v668, %v699
        %v733 = vadd.f32 %v669, %v703
        %v734 = vadd.f32 %v670, %v703
        %v735 = vadd.f32 %v671, %v703
        %v736 = vadd.f32 %v672, %v703
        %v737 = vsub.f32 0.0, %v705
        %v738 = vsub.f32 0.0, %v706
        %v739 = vsub.f32 0.0, %v707
        %v740 = vsub.f32 0.0, %v708
        %v741 = vsub.f32 0.0, %v709
        %v742 = vsub.f32 0.0, %v710
        %v743 = vsub.f32 0.0, %v711
        %v744 = vsub.f32 0.0, %v712
        %v745 = vsub.f32 0.0, %v713
        %v746 = vsub.f32 0.0, %v714
        %v747 = vsub.f32 0.0, %v715
        %v748 = vsub.f32 0.0, %v716
        %v749 = vsub.f32 0.0, %v717
        %v750 = vsub.f32 0.0, %v718
        %v751 = vsub.f32 0.0, %v719
        %v752 = vsub.f32 0.0, %v720
        %v753 = vsub.f32 0.0, %v721
        %v754 = vsub.f32 0.0, %v722
        %v755 = vsub.f32 0.0, %v723
        %v756 = vsub.f32 0.0, %v724
        %v757 = vsub.f32 0.0, %v725
        %v758 = vsub.f32 0.0, %v726
        %v759 = vsub.f32 0.0, %v727
        %v760 = vsub.f32 0.0, %v728
        %v761 = vsub.f32 0.0, %v729
        %v762 = vsub.f32 0.0, %v730
        %v763 = vsub.f32 0.0, %v731
        %v764 = vsub.f32 0.0, %v732
        %v765 = vsub.f32 0.0, %v733
        %v766 = vsub.f32 0.0, %v734
        %v767 = vsub.f32 0.0, %v735
        %v768 = vsub.f32 0.0, %v736
        %v769 = vmul.f32 %v737, 1.442695
        %v770 = vpow.pop %v769
        %v771 = vmul.f32 %v738, 1.442695
        %v772 = vpow.pop %v771
        %v773 = vmul.f32 %v739, 1.442695
        %v774 = vpow.pop %v773
        %v775 = vmul.f32 %v740, 1.442695
        %v776 = vpow.pop %v775
        %v777 = vmul.f32 %v741, 1.442695
        %v778 = vpow.pop %v777
        %v779 = vmul.f32 %v742, 1.442695
        %v780 = vpow.pop %v779
        %v781 = vmul.f32 %v743, 1.442695
        %v782 = vpow.pop %v781
        %v783 = vmul.f32 %v744, 1.442695
        %v784 = vpow.pop %v783
        %v785 = vmul.f32 %v745, 1.442695
        %v786 = vpow.pop %v785
        %v787 = vmul.f32 %v746, 1.442695
        %v788 = vpow.pop %v787
        %v789 = vmul.f32 %v747, 1.442695
        %v790 = vpow.pop %v789
        %v791 = vmul.f32 %v748, 1.442695
        %v792 = vpow.pop %v791
        %v793 = vmul.f32 %v749, 1.442695
        %v794 = vpow.pop %v793
        %v795 = vmul.f32 %v750, 1.442695
        %v796 = vpow.pop %v795
        %v797 = vmul.f32 %v751, 1.442695
        %v798 = vpow.pop %v797
        %v799 = vmul.f32 %v752, 1.442695
        %v800 = vpow.pop %v799
        %v801 = vmul.f32 %v753, 1.442695
        %v802 = vpow.pop %v801
        %v803 = vmul.f32 %v754, 1.442695
        %v804 = vpow.pop %v803
        %v805 = vmul.f32 %v755, 1.442695
        %v806 = vpow.pop %v805
        %v807 = vmul.f32 %v756, 1.442695
        %v808 = vpow.pop %v807
        %v809 = vmul.f32 %v757, 1.442695
        %v810 = vpow.pop %v809
        %v811 = vmul.f32 %v758, 1.442695
        %v812 = vpow.pop %v811
        %v813 = vmul.f32 %v759, 1.442695
        %v814 = vpow.pop %v813
        %v815 = vmul.f32 %v760, 1.442695
        %v816 = vpow.pop %v815
        %v817 = vmul.f32 %v761, 1.442695
        %v818 = vpow.pop %v817
        %v819 = vmul.f32 %v762, 1.442695
        %v820 = vpow.pop %v819
        %v821 = vmul.f32 %v763, 1.442695
        %v822 = vpow.pop %v821
        %v823 = vmul.f32 %v764, 1.442695
        %v824 = vpow.pop %v823
        %v825 = vmul.f32 %v765, 1.442695
        %v826 = vpow.pop %v825
        %v827 = vmul.f32 %v766, 1.442695
        %v828 = vpow.pop %v827
        %v829 = vmul.f32 %v767, 1.442695
        %v830 = vpow.pop %v829
        %v831 = vmul.f32 %v768, 1.442695
        %v832 = vpow.pop %v831
        %v833 = vadd.f32 %v770, 1.0
        %v834 = vadd.f32 %v772, 1.0
        %v835 = vadd.f32 %v774, 1.0
        %v836 = vadd.f32 %v776, 1.0
        %v837 = vadd.f32 %v778, 1.0
        %v838 = vadd.f32 %v780, 1.0
        %v839 = vadd.f32 %v782, 1.0
        %v840 = vadd.f32 %v784, 1.0
        %v841 = vadd.f32 %v786, 1.0
        %v842 = vadd.f32 %v788, 1.0
        %v843 = vadd.f32 %v790, 1.0
        %v844 = vadd.f32 %v792, 1.0
        %v845 = vadd.f32 %v794, 1.0
        %v846 = vadd.f32 %v796, 1.0
        %v847 = vadd.f32 %v798, 1.0
        %v848 = vadd.f32 %v800, 1.0
        %v849 = vadd.f32 %v802, 1.0
        %v850 = vadd.f32 %v804, 1.0
        %v851 = vadd.f32 %v806, 1.0
        %v852 = vadd.f32 %v808, 1.0
        %v853 = vadd.f32 %v810, 1.0
        %v854 = vadd.f32 %v812, 1.0
        %v855 = vadd.f32 %v814, 1.0
        %v856 = vadd.f32 %v816, 1.0
        %v857 = vadd.f32 %v818, 1.0
        %v858 = vadd.f32 %v820, 1.0
        %v859 = vadd.f32 %v822, 1.0
        %v860 = vadd.f32 %v824, 1.0
        %v861 = vadd.f32 %v826, 1.0
        %v862 = vadd.f32 %v828, 1.0
        %v863 = vadd.f32 %v830, 1.0
        %v864 = vadd.f32 %v832, 1.0
        %v865 = vrcp.pop %v833
        %v866 = vrcp.pop %v834
        %v867 = vrcp.pop %v835
        %v868 = vrcp.pop %v836
        %v869 = vrcp.pop %v837
        %v870 = vrcp.pop %v838
        %v871 = vrcp.pop %v839
        %v872 = vrcp.pop %v840
        %v873 = vrcp.pop %v841
        %v874 = vrcp.pop %v842
        %v875 = vrcp.pop %v843
        %v876 = vrcp.pop %v844
        %v877 = vrcp.pop %v845
        %v878 = vrcp.pop %v846
        %v879 = vrcp.pop %v847
        %v880 = vrcp.pop %v848
        %v881 = vrcp.pop %v849
        %v882 = vrcp.pop %v850
        %v883 = vrcp.pop %v851
        %v884 = vrcp.pop %v852
        %v885 = vrcp.pop %v853
        %v886 = vrcp.pop %v854
        %v887 = vrcp.pop %v855
        %v888 = vrcp.pop %v856
        %v889 = vrcp.pop %v857
        %v890 = vrcp.pop %v858
        %v891 = vrcp.pop %v859
        %v892 = vrcp.pop %v860
        %v893 = vrcp.pop %v861
        %v894 = vrcp.pop %v862
        %v895 = vrcp.pop %v863
        %v896 = vrcp.pop %v864
        %v897 = vmul.f32 %v705, %v865
        %v898 = vmul.f32 %v706, %v866
        %v899 = vmul.f32 %v707, %v867
        %v900 = vmul.f32 %v708, %v868
        %v901 = vmul.f32 %v709, %v869
        %v902 = vmul.f32 %v710, %v870
        %v903 = vmul.f32 %v711, %v871
        %v904 = vmul.f32 %v712, %v872
        %v905 = vmul.f32 %v713, %v873
        %v906 = vmul.f32 %v714, %v874
        %v907 = vmul.f32 %v715, %v875
        %v908 = vmul.f32 %v716, %v876
        %v909 = vmul.f32 %v717, %v877
        %v910 = vmul.f32 %v718, %v878
        %v911 = vmul.f32 %v719, %v879
        %v912 = vmul.f32 %v720, %v880
        %v913 = vmul.f32 %v721, %v881
        %v914 = vmul.f32 %v722, %v882
        %v915 = vmul.f32 %v723, %v883
        %v916 = vmul.f32 %v724, %v884
        %v917 = vmul.f32 %v725, %v885
        %v918 = vmul.f32 %v726, %v886
        %v919 = vmul.f32 %v727, %v887
        %v920 = vmul.f32 %v728, %v888
        %v921 = vmul.f32 %v729, %v889
        %v922 = vmul.f32 %v730, %v890
        %v923 = vmul.f32 %v731, %v891
        %v924 = vmul.f32 %v732, %v892
        %v925 = vmul.f32 %v733, %v893
        %v926 = vmul.f32 %v734, %v894
        %v927 = vmul.f32 %v735, %v895
        %v928 = vmul.f32 %v736, %v896
        %v929 = vlaneseq
        %v930 = vshrl.u32 %v929, 7
        %v931 = vadd.s32 %v930, 8
        %v932 = vadd.s32 %v930, 16
        %v933 = vadd.s32 %v930, 24
        %v934 = vadd.s32 %v930, 32
        %v935 = vadd.s32 %v930, 40
        %v936 = vadd.s32 %v930, 48
        %v937 = vadd.s32 %v930, 56
        %vm938 = vcmp.lt.s32.totalorder %v930, 0
        %v939 = vsub.s32 0, %v930
        %v940 = vsel %vm938, %v939, %v930
        %v941 = vshrl.u32 %v940, 1
        %v942 = vand.u32 %v940, 1
        %v943 = vsub.s32 0, %v942
        %v944 = vsel %vm938, %v943, %v942
        %vm945 = vcmp.lt.s32.totalorder %v931, 0
        %v946 = vsub.s32 0, %v931
        %v947 = vsel %vm945, %v946, %v931
        %v948 = vshrl.u32 %v947, 1
        %v949 = vand.u32 %v947, 1
        %v950 = vsub.s32 0, %v949
        %v951 = vsel %vm945, %v950, %v949
        %vm952 = vcmp.lt.s32.totalorder %v932, 0
        %v953 = vsub.s32 0, %v932
        %v954 = vsel %vm952, %v953, %v932
        %v955 = vshrl.u32 %v954, 1
        %v956 = vand.u32 %v954, 1
        %v957 = vsub.s32 0, %v956
        %v958 = vsel %vm952, %v957, %v956
        %vm959 = vcmp.lt.s32.totalorder %v933, 0
        %v960 = vsub.s32 0, %v933
        %v961 = vsel %vm959, %v960, %v933
        %v962 = vshrl.u32 %v961, 1
        %v963 = vand.u32 %v961, 1
        %v964 = vsub.s32 0, %v963
        %v965 = vsel %vm959, %v964, %v963
        %vm966 = vcmp.lt.s32.totalorder %v934, 0
        %v967 = vsub.s32 0, %v934
        %v968 = vsel %vm966, %v967, %v934
        %v969 = vshrl.u32 %v968, 1
        %v970 = vand.u32 %v968, 1
        %v971 = vsub.s32 0, %v970
        %v972 = vsel %vm966, %v971, %v970
        %vm973 = vcmp.lt.s32.totalorder %v935, 0
        %v974 = vsub.s32 0, %v935
        %v975 = vsel %vm973, %v974, %v935
        %v976 = vshrl.u32 %v975, 1
        %v977 = vand.u32 %v975, 1
        %v978 = vsub.s32 0, %v977
        %v979 = vsel %vm973, %v978, %v977
        %vm980 = vcmp.lt.s32.totalorder %v936, 0
        %v981 = vsub.s32 0, %v936
        %v982 = vsel %vm980, %v981, %v936
        %v983 = vshrl.u32 %v982, 1
        %v984 = vand.u32 %v982, 1
        %v985 = vsub.s32 0, %v984
        %v986 = vsel %vm980, %v985, %v984
        %vm987 = vcmp.lt.s32.totalorder %v937, 0
        %v988 = vsub.s32 0, %v937
        %v989 = vsel %vm987, %v988, %v937
        %v990 = vshrl.u32 %v989, 1
        %v991 = vand.u32 %v989, 1
        %v992 = vsub.s32 0, %v991
        %v993 = vsel %vm987, %v992, %v991
        %vm994 = vcmp.ne.s32.totalorder %v944, 0
        %vm995 = vcmp.ne.s32.totalorder %v951, 0
        %vm996 = vcmp.ne.s32.totalorder %v958, 0
        %vm997 = vcmp.ne.s32.totalorder %v965, 0
        %vm998 = vcmp.ne.s32.totalorder %v972, 0
        %vm999 = vcmp.ne.s32.totalorder %v979, 0
        %vm1000 = vcmp.ne.s32.totalorder %v986, 0
        %vm1001 = vcmp.ne.s32.totalorder %v993, 0
        %vm1002 = vcmp.lt.s32.totalorder %v944, 0
        %vm1003 = vcmp.lt.s32.totalorder %v951, 0
        %vm1004 = vcmp.lt.s32.totalorder %v958, 0
        %vm1005 = vcmp.lt.s32.totalorder %v965, 0
        %vm1006 = vcmp.lt.s32.totalorder %v972, 0
        %vm1007 = vcmp.lt.s32.totalorder %v979, 0
        %vm1008 = vcmp.lt.s32.totalorder %v986, 0
        %vm1009 = vcmp.lt.s32.totalorder %v993, 0
        %vm1010 = vmand %vm1002, %vm994
        %vm1011 = vmand %vm1003, %vm995
        %vm1012 = vmand %vm1004, %vm996
        %vm1013 = vmand %vm1005, %vm997
        %vm1014 = vmand %vm1006, %vm998
        %vm1015 = vmand %vm1007, %vm999
        %vm1016 = vmand %vm1008, %vm1000
        %vm1017 = vmand %vm1009, %vm1001
        %v1018 = vadd.s32 %v944, 2
        %v1019 = vadd.s32 %v951, 2
        %v1020 = vadd.s32 %v958, 2
        %v1021 = vadd.s32 %v965, 2
        %v1022 = vadd.s32 %v972, 2
        %v1023 = vadd.s32 %v979, 2
        %v1024 = vadd.s32 %v986, 2
        %v1025 = vadd.s32 %v993, 2
        %v1026 = vsel %vm1010, %v1018, %v944
        %v1027 = vsel %vm1011, %v1019, %v951
        %v1028 = vsel %vm1012, %v1020, %v958
        %v1029 = vsel %vm1013, %v1021, %v965
        %v1030 = vsel %vm1014, %v1022, %v972
        %v1031 = vsel %vm1015, %v1023, %v979
        %v1032 = vsel %vm1016, %v1024, %v986
        %v1033 = vsel %vm1017, %v1025, %v993
        %vm1034 = vcmp.eq.s32.totalorder %v1026, 0
        %vm1035 = vcmp.eq.s32.totalorder %v1027, 0
        %vm1036 = vcmp.eq.s32.totalorder %v1028, 0
        %vm1037 = vcmp.eq.s32.totalorder %v1029, 0
        %vm1038 = vcmp.eq.s32.totalorder %v1030, 0
        %vm1039 = vcmp.eq.s32.totalorder %v1031, 0
        %vm1040 = vcmp.eq.s32.totalorder %v1032, 0
        %vm1041 = vcmp.eq.s32.totalorder %v1033, 0
        %v1042 = vrot.slane %v897, 1
        %v1043 = vrot.slane %v898, 1
        %v1044 = vrot.slane %v899, 1
        %v1045 = vrot.slane %v900, 1
        %v1046 = vrot.slane %v901, 1
        %v1047 = vrot.slane %v902, 1
        %v1048 = vrot.slane %v903, 1
        %v1049 = vrot.slane %v904, 1
        %v1050 = vrot.slane %v905, 1
        %v1051 = vrot.slane %v906, 1
        %v1052 = vrot.slane %v907, 1
        %v1053 = vrot.slane %v908, 1
        %v1054 = vrot.slane %v909, 1
        %v1055 = vrot.slane %v910, 1
        %v1056 = vrot.slane %v911, 1
        %v1057 = vrot.slane %v912, 1
        %v1058 = vrot.slane %v913, 1
        %v1059 = vrot.slane %v914, 1
        %v1060 = vrot.slane %v915, 1
        %v1061 = vrot.slane %v916, 1
        %v1062 = vrot.slane %v917, 1
        %v1063 = vrot.slane %v918, 1
        %v1064 = vrot.slane %v919, 1
        %v1065 = vrot.slane %v920, 1
        %v1066 = vrot.slane %v921, 1
        %v1067 = vrot.slane %v922, 1
        %v1068 = vrot.slane %v923, 1
        %v1069 = vrot.slane %v924, 1
        %v1070 = vrot.slane %v925, 1
        %v1071 = vrot.slane %v926, 1
        %v1072 = vrot.slane %v927, 1
        %v1073 = vrot.slane %v928, 1
        %vm1074 = vcmp.lt.s32.totalorder %v930, 7
        %v1075 = vsel %vm1074, %v1066, %v1070
        %v1076 = vsel %vm1074, %v1067, %v1071
        %v1077 = vsel %vm1074, %v1068, %v1072
        %v1078 = vsel %vm1074, %v1069, %v1073
        %v1079 = vsel %vm1074, %v1062, %v1066
        %v1080 = vsel %vm1074, %v1063, %v1067
        %v1081 = vsel %vm1074, %v1064, %v1068
        %v1082 = vsel %vm1074, %v1065, %v1069
        %v1083 = vsel %vm1074, %v1058, %v1062
        %v1084 = vsel %vm1074, %v1059, %v1063
        %v1085 = vsel %vm1074, %v1060, %v1064
        %v1086 = vsel %vm1074, %v1061, %v1065
        %v1087 = vsel %vm1074, %v1054, %v1058
        %v1088 = vsel %vm1074, %v1055, %v1059
        %v1089 = vsel %vm1074, %v1056, %v1060
        %v1090 = vsel %vm1074, %v1057, %v1061
        %v1091 = vsel %vm1074, %v1050, %v1054
        %v1092 = vsel %vm1074, %v1051, %v1055
        %v1093 = vsel %vm1074, %v1052, %v1056
        %v1094 = vsel %vm1074, %v1053, %v1057
        %v1095 = vsel %vm1074, %v1046, %v1050
        %v1096 = vsel %vm1074, %v1047, %v1051
        %v1097 = vsel %vm1074, %v1048, %v1052
        %v1098 = vsel %vm1074, %v1049, %v1053
        %v1099 = vsel %vm1074, %v1042, %v1046
        %v1100 = vsel %vm1074, %v1043, %v1047
        %v1101 = vsel %vm1074, %v1044, %v1048
        %v1102 = vsel %vm1074, %v1045, %v1049
        %v1103 = vsel %vm1074, %v1070, %v1042
        %v1104 = vsel %vm1074, %v1071, %v1043
        %v1105 = vsel %vm1074, %v1072, %v1044
        %v1106 = vsel %vm1074, %v1073, %v1045
        %v1107 = vrot.slane %v897, 7
        %v1108 = vrot.slane %v898, 7
        %v1109 = vrot.slane %v899, 7
        %v1110 = vrot.slane %v900, 7
        %v1111 = vrot.slane %v901, 7
        %v1112 = vrot.slane %v902, 7
        %v1113 = vrot.slane %v903, 7
        %v1114 = vrot.slane %v904, 7
        %v1115 = vrot.slane %v905, 7
        %v1116 = vrot.slane %v906, 7
        %v1117 = vrot.slane %v907, 7
        %v1118 = vrot.slane %v908, 7
        %v1119 = vrot.slane %v909, 7
        %v1120 = vrot.slane %v910, 7
        %v1121 = vrot.slane %v911, 7
        %v1122 = vrot.slane %v912, 7
        %v1123 = vrot.slane %v913, 7
        %v1124 = vrot.slane %v914, 7
        %v1125 = vrot.slane %v915, 7
        %v1126 = vrot.slane %v916, 7
        %v1127 = vrot.slane %v917, 7
        %v1128 = vrot.slane %v918, 7
        %v1129 = vrot.slane %v919, 7
        %v1130 = vrot.slane %v920, 7
        %v1131 = vrot.slane %v921, 7
        %v1132 = vrot.slane %v922, 7
        %v1133 = vrot.slane %v923, 7
        %v1134 = vrot.slane %v924, 7
        %v1135 = vrot.slane %v925, 7
        %v1136 = vrot.slane %v926, 7
        %v1137 = vrot.slane %v927, 7
        %v1138 = vrot.slane %v928, 7
        %vm1139 = vcmp.lt.s32.totalorder %v930, 1
        %v1140 = vsel %vm1139, %v1131, %v1135
        %v1141 = vsel %vm1139, %v1132, %v1136
        %v1142 = vsel %vm1139, %v1133, %v1137
        %v1143 = vsel %vm1139, %v1134, %v1138
        %v1144 = vsel %vm1139, %v1127, %v1131
        %v1145 = vsel %vm1139, %v1128, %v1132
        %v1146 = vsel %vm1139, %v1129, %v1133
        %v1147 = vsel %vm1139, %v1130, %v1134
        %v1148 = vsel %vm1139, %v1123, %v1127
        %v1149 = vsel %vm1139, %v1124, %v1128
        %v1150 = vsel %vm1139, %v1125, %v1129
        %v1151 = vsel %vm1139, %v1126, %v1130
        %v1152 = vsel %vm1139, %v1119, %v1123
        %v1153 = vsel %vm1139, %v1120, %v1124
        %v1154 = vsel %vm1139, %v1121, %v1125
        %v1155 = vsel %vm1139, %v1122, %v1126
        %v1156 = vsel %vm1139, %v1115, %v1119
        %v1157 = vsel %vm1139, %v1116, %v1120
        %v1158 = vsel %vm1139, %v1117, %v1121
        %v1159 = vsel %vm1139, %v1118, %v1122
        %v1160 = vsel %vm1139, %v1111, %v1115
        %v1161 = vsel %vm1139, %v1112, %v1116
        %v1162 = vsel %vm1139, %v1113, %v1117
        %v1163 = vsel %vm1139, %v1114, %v1118
        %v1164 = vsel %vm1139, %v1107, %v1111
        %v1165 = vsel %vm1139, %v1108, %v1112
        %v1166 = vsel %vm1139, %v1109, %v1113
        %v1167 = vsel %vm1139, %v1110, %v1114
        %v1168 = vsel %vm1139, %v1135, %v1107
        %v1169 = vsel %vm1139, %v1136, %v1108
        %v1170 = vsel %vm1139, %v1137, %v1109
        %v1171 = vsel %vm1139, %v1138, %v1110
        %v1172 = vsel %vm1034, 1, 0
        %v1173 = vsel %vm1035, 1, 0
        %v1174 = vsel %vm1036, 1, 0
        %v1175 = vsel %vm1037, 1, 0
        %v1176 = vsel %vm1038, 1, 0
        %v1177 = vsel %vm1039, 1, 0
        %v1178 = vsel %vm1040, 1, 0
        %v1179 = vsel %vm1041, 1, 0
        %vm1180 = vcmp.eq.s32.totalorder %v1172, 1
        %vm1181 = vcmp.eq.s32.totalorder %v1173, 1
        %vm1182 = vcmp.eq.s32.totalorder %v1174, 1
        %vm1183 = vcmp.eq.s32.totalorder %v1175, 1
        %vm1184 = vcmp.eq.s32.totalorder %v1176, 1
        %vm1185 = vcmp.eq.s32.totalorder %v1177, 1
        %vm1186 = vcmp.eq.s32.totalorder %v1178, 1
        %vm1187 = vcmp.eq.s32.totalorder %v1179, 1
        %v1188 = vsel %vm1180, %v1099, %v1168
        %v1189 = vsel %vm1180, %v1100, %v1169
        %v1190 = vsel %vm1180, %v1101, %v1170
        %v1191 = vsel %vm1180, %v1102, %v1171
        %v1192 = vsel %vm1181, %v1095, %v1164
        %v1193 = vsel %vm1181, %v1096, %v1165
        %v1194 = vsel %vm1181, %v1097, %v1166
        %v1195 = vsel %vm1181, %v1098, %v1167
        %v1196 = vsel %vm1182, %v1091, %v1160
        %v1197 = vsel %vm1182, %v1092, %v1161
        %v1198 = vsel %vm1182, %v1093, %v1162
        %v1199 = vsel %vm1182, %v1094, %v1163
        %v1200 = vsel %vm1183, %v1087, %v1156
        %v1201 = vsel %vm1183, %v1088, %v1157
        %v1202 = vsel %vm1183, %v1089, %v1158
        %v1203 = vsel %vm1183, %v1090, %v1159
        %v1204 = vsel %vm1184, %v1083, %v1152
        %v1205 = vsel %vm1184, %v1084, %v1153
        %v1206 = vsel %vm1184, %v1085, %v1154
        %v1207 = vsel %vm1184, %v1086, %v1155
        %v1208 = vsel %vm1185, %v1079, %v1148
        %v1209 = vsel %vm1185, %v1080, %v1149
        %v1210 = vsel %vm1185, %v1081, %v1150
        %v1211 = vsel %vm1185, %v1082, %v1151
        %v1212 = vsel %vm1186, %v1075, %v1144
        %v1213 = vsel %vm1186, %v1076, %v1145
        %v1214 = vsel %vm1186, %v1077, %v1146
        %v1215 = vsel %vm1186, %v1078, %v1147
        %v1216 = vsel %vm1187, %v1103, %v1140
        %v1217 = vsel %vm1187, %v1104, %v1141
        %v1218 = vsel %vm1187, %v1105, %v1142
        %v1219 = vsel %vm1187, %v1106, %v1143
        %v1220 = vlaneseq
        %v1221 = vand.u32 %v1220, 127
        %v1222 = vadd.s32 %v1221, 128
        %v1223 = vadd.s32 %v1221, 256
        %v1224 = vadd.s32 %v1221, 384
        %v1225 = vand.u32 %v1221, 127
        %v1226 = vand.u32 %v1222, 127
        %v1227 = vand.u32 %v1223, 127
        %v1228 = vand.u32 %v1224, 127
        %1229 = vrot.lane.b32.xlu0 %v897, 2
        %v1230 = vpop.permute.xlu0 %1229
        %1231 = vrot.lane.b32.xlu0 %v901, 2
        %v1232 = vpop.permute.xlu0 %1231
        %1233 = vrot.lane.b32.xlu0 %v905, 2
        %v1234 = vpop.permute.xlu0 %1233
        %1235 = vrot.lane.b32.xlu0 %v909, 2
        %v1236 = vpop.permute.xlu0 %1235
        %1237 = vrot.lane.b32.xlu0 %v913, 2
        %v1238 = vpop.permute.xlu0 %1237
        %1239 = vrot.lane.b32.xlu0 %v917, 2
        %v1240 = vpop.permute.xlu0 %1239
        %1241 = vrot.lane.b32.xlu0 %v921, 2
        %v1242 = vpop.permute.xlu0 %1241
        %1243 = vrot.lane.b32.xlu0 %v925, 2
        %v1244 = vpop.permute.xlu0 %1243
        %1245 = vrot.lane.b32.xlu0 %v898, 2
        %v1246 = vpop.permute.xlu0 %1245
        %1247 = vrot.lane.b32.xlu0 %v902, 2
        %v1248 = vpop.permute.xlu0 %1247
        %1249 = vrot.lane.b32.xlu0 %v906, 2
        %v1250 = vpop.permute.xlu0 %1249
        %1251 = vrot.lane.b32.xlu0 %v910, 2
        %v1252 = vpop.permute.xlu0 %1251
        %1253 = vrot.lane.b32.xlu0 %v914, 2
        %v1254 = vpop.permute.xlu0 %1253
        %1255 = vrot.lane.b32.xlu0 %v918, 2
        %v1256 = vpop.permute.xlu0 %1255
        %1257 = vrot.lane.b32.xlu0 %v922, 2
        %v1258 = vpop.permute.xlu0 %1257
        %1259 = vrot.lane.b32.xlu0 %v926, 2
        %v1260 = vpop.permute.xlu0 %1259
        %1261 = vrot.lane.b32.xlu0 %v899, 2
        %v1262 = vpop.permute.xlu0 %1261
        %1263 = vrot.lane.b32.xlu0 %v903, 2
        %v1264 = vpop.permute.xlu0 %1263
        %1265 = vrot.lane.b32.xlu0 %v907, 2
        %v1266 = vpop.permute.xlu0 %1265
        %1267 = vrot.lane.b32.xlu0 %v911, 2
        %v1268 = vpop.permute.xlu0 %1267
        %1269 = vrot.lane.b32.xlu0 %v915, 2
        %v1270 = vpop.permute.xlu0 %1269
        %1271 = vrot.lane.b32.xlu0 %v919, 2
        %v1272 = vpop.permute.xlu0 %1271
        %1273 = vrot.lane.b32.xlu0 %v923, 2
        %v1274 = vpop.permute.xlu0 %1273
        %1275 = vrot.lane.b32.xlu0 %v927, 2
        %v1276 = vpop.permute.xlu0 %1275
        %1277 = vrot.lane.b32.xlu0 %v900, 2
        %v1278 = vpop.permute.xlu0 %1277
        %1279 = vrot.lane.b32.xlu0 %v904, 2
        %v1280 = vpop.permute.xlu0 %1279
        %1281 = vrot.lane.b32.xlu0 %v908, 2
        %v1282 = vpop.permute.xlu0 %1281
        %1283 = vrot.lane.b32.xlu0 %v912, 2
        %v1284 = vpop.permute.xlu0 %1283
        %1285 = vrot.lane.b32.xlu0 %v916, 2
        %v1286 = vpop.permute.xlu0 %1285
        %1287 = vrot.lane.b32.xlu0 %v920, 2
        %v1288 = vpop.permute.xlu0 %1287
        %1289 = vrot.lane.b32.xlu0 %v924, 2
        %v1290 = vpop.permute.xlu0 %1289
        %1291 = vrot.lane.b32.xlu0 %v928, 2
        %v1292 = vpop.permute.xlu0 %1291
        %vm1293 = vcmp.lt.s32.totalorder %v1221, 2
        %v1294 = vsel %vm1293, %v1262, %v1278
        %v1295 = vsel %vm1293, %v1264, %v1280
        %v1296 = vsel %vm1293, %v1266, %v1282
        %v1297 = vsel %vm1293, %v1268, %v1284
        %v1298 = vsel %vm1293, %v1270, %v1286
        %v1299 = vsel %vm1293, %v1272, %v1288
        %v1300 = vsel %vm1293, %v1274, %v1290
        %v1301 = vsel %vm1293, %v1276, %v1292
        %v1302 = vsel %vm1293, %v1246, %v1262
        %v1303 = vsel %vm1293, %v1248, %v1264
        %v1304 = vsel %vm1293, %v1250, %v1266
        %v1305 = vsel %vm1293, %v1252, %v1268
        %v1306 = vsel %vm1293, %v1254, %v1270
        %v1307 = vsel %vm1293, %v1256, %v1272
        %v1308 = vsel %vm1293, %v1258, %v1274
        %v1309 = vsel %vm1293, %v1260, %v1276
        %v1310 = vsel %vm1293, %v1230, %v1246
        %v1311 = vsel %vm1293, %v1232, %v1248
        %v1312 = vsel %vm1293, %v1234, %v1250
        %v1313 = vsel %vm1293, %v1236, %v1252
        %v1314 = vsel %vm1293, %v1238, %v1254
        %v1315 = vsel %vm1293, %v1240, %v1256
        %v1316 = vsel %vm1293, %v1242, %v1258
        %v1317 = vsel %vm1293, %v1244, %v1260
        %v1318 = vsel %vm1293, %v1278, %v1230
        %v1319 = vsel %vm1293, %v1280, %v1232
        %v1320 = vsel %vm1293, %v1282, %v1234
        %v1321 = vsel %vm1293, %v1284, %v1236
        %v1322 = vsel %vm1293, %v1286, %v1238
        %v1323 = vsel %vm1293, %v1288, %v1240
        %v1324 = vsel %vm1293, %v1290, %v1242
        %v1325 = vsel %vm1293, %v1292, %v1244
        %v1326 = vld [vmem:[%s3] sm:$0xff]
        %v1327 = vld [vmem:[%s3 + $0x8] sm:$0xff]
        %v1328 = vld [vmem:[%s3 + $0x10] sm:$0xff]
        %v1329 = vld [vmem:[%s3 + $0x18] sm:$0xff]
        %v1330 = vld [vmem:[%s3 + $0x20] sm:$0xff]
        %v1331 = vld [vmem:[%s3 + $0x28] sm:$0xff]
        %v1332 = vld [vmem:[%s3 + $0x30] sm:$0xff]
        %v1333 = vld [vmem:[%s3 + $0x38] sm:$0xff]
        %1335 = vset.pattern.permute.xlu0 0
        %1336 = vperm.xlu0 %1335, %v1326
        %v1337 = vpop.permute.xlu0 %1336
        %1340 = vset.pattern.permute.xlu0 0
        %1341 = vperm.xlu0 %1340, %v1327
        %v1342 = vpop.permute.xlu0 %1341
        %1345 = vset.pattern.permute.xlu0 0
        %1346 = vperm.xlu0 %1345, %v1328
        %v1347 = vpop.permute.xlu0 %1346
        %1350 = vset.pattern.permute.xlu0 0
        %1351 = vperm.xlu0 %1350, %v1329
        %v1352 = vpop.permute.xlu0 %1351
        %1355 = vset.pattern.permute.xlu0 0
        %1356 = vperm.xlu0 %1355, %v1330
        %v1357 = vpop.permute.xlu0 %1356
        %1360 = vset.pattern.permute.xlu0 0
        %1361 = vperm.xlu0 %1360, %v1331
        %v1362 = vpop.permute.xlu0 %1361
        %1365 = vset.pattern.permute.xlu0 0
        %1366 = vperm.xlu0 %1365, %v1332
        %v1367 = vpop.permute.xlu0 %1366
        %1370 = vset.pattern.permute.xlu0 0
        %1371 = vperm.xlu0 %1370, %v1333
        %v1372 = vpop.permute.xlu0 %1371
        %v1374 = vmul.f32 %v1318, %v1337
        %v1375 = vmul.f32 %v1310, %v1337
        %v1376 = vmul.f32 %v1302, %v1337
        %v1377 = vmul.f32 %v1294, %v1337
        %v1378 = vmul.f32 %v1319, %v1342
        %v1379 = vmul.f32 %v1311, %v1342
        %v1380 = vmul.f32 %v1303, %v1342
        %v1381 = vmul.f32 %v1295, %v1342
        %v1382 = vmul.f32 %v1320, %v1347
        %v1383 = vmul.f32 %v1312, %v1347
        %v1384 = vmul.f32 %v1304, %v1347
        %v1385 = vmul.f32 %v1296, %v1347
        %v1386 = vmul.f32 %v1321, %v1352
        %v1387 = vmul.f32 %v1313, %v1352
        %v1388 = vmul.f32 %v1305, %v1352
        %v1389 = vmul.f32 %v1297, %v1352
        %v1390 = vmul.f32 %v1322, %v1357
        %v1391 = vmul.f32 %v1314, %v1357
        %v1392 = vmul.f32 %v1306, %v1357
        %v1393 = vmul.f32 %v1298, %v1357
        %v1394 = vmul.f32 %v1323, %v1362
        %v1395 = vmul.f32 %v1315, %v1362
        %v1396 = vmul.f32 %v1307, %v1362
        %v1397 = vmul.f32 %v1299, %v1362
        %v1398 = vmul.f32 %v1324, %v1367
        %v1399 = vmul.f32 %v1316, %v1367
        %v1400 = vmul.f32 %v1308, %v1367
        %v1401 = vmul.f32 %v1300, %v1367
        %v1402 = vmul.f32 %v1325, %v1372
        %v1403 = vmul.f32 %v1317, %v1372
        %v1404 = vmul.f32 %v1309, %v1372
        %v1405 = vmul.f32 %v1301, %v1372
        %1406 = vrot.lane.b32.xlu0 %v1188, 2
        %v1407 = vpop.permute.xlu0 %1406
        %1408 = vrot.lane.b32.xlu0 %v1192, 2
        %v1409 = vpop.permute.xlu0 %1408
        %1410 = vrot.lane.b32.xlu0 %v1196, 2
        %v1411 = vpop.permute.xlu0 %1410
        %1412 = vrot.lane.b32.xlu0 %v1200, 2
        %v1413 = vpop.permute.xlu0 %1412
        %1414 = vrot.lane.b32.xlu0 %v1204, 2
        %v1415 = vpop.permute.xlu0 %1414
        %1416 = vrot.lane.b32.xlu0 %v1208, 2
        %v1417 = vpop.permute.xlu0 %1416
        %1418 = vrot.lane.b32.xlu0 %v1212, 2
        %v1419 = vpop.permute.xlu0 %1418
        %1420 = vrot.lane.b32.xlu0 %v1216, 2
        %v1421 = vpop.permute.xlu0 %1420
        %1422 = vrot.lane.b32.xlu0 %v1189, 2
        %v1423 = vpop.permute.xlu0 %1422
        %1424 = vrot.lane.b32.xlu0 %v1193, 2
        %v1425 = vpop.permute.xlu0 %1424
        %1426 = vrot.lane.b32.xlu0 %v1197, 2
        %v1427 = vpop.permute.xlu0 %1426
        %1428 = vrot.lane.b32.xlu0 %v1201, 2
        %v1429 = vpop.permute.xlu0 %1428
        %1430 = vrot.lane.b32.xlu0 %v1205, 2
        %v1431 = vpop.permute.xlu0 %1430
        %1432 = vrot.lane.b32.xlu0 %v1209, 2
        %v1433 = vpop.permute.xlu0 %1432
        %1434 = vrot.lane.b32.xlu0 %v1213, 2
        %v1435 = vpop.permute.xlu0 %1434
        %1436 = vrot.lane.b32.xlu0 %v1217, 2
        %v1437 = vpop.permute.xlu0 %1436
        %1438 = vrot.lane.b32.xlu0 %v1190, 2
        %v1439 = vpop.permute.xlu0 %1438
        %1440 = vrot.lane.b32.xlu0 %v1194, 2
        %v1441 = vpop.permute.xlu0 %1440
        %1442 = vrot.lane.b32.xlu0 %v1198, 2
        %v1443 = vpop.permute.xlu0 %1442
        %1444 = vrot.lane.b32.xlu0 %v1202, 2
        %v1445 = vpop.permute.xlu0 %1444
        %1446 = vrot.lane.b32.xlu0 %v1206, 2
        %v1447 = vpop.permute.xlu0 %1446
        %1448 = vrot.lane.b32.xlu0 %v1210, 2
        %v1449 = vpop.permute.xlu0 %1448
        %1450 = vrot.lane.b32.xlu0 %v1214, 2
        %v1451 = vpop.permute.xlu0 %1450
        %1452 = vrot.lane.b32.xlu0 %v1218, 2
        %v1453 = vpop.permute.xlu0 %1452
        %1454 = vrot.lane.b32.xlu0 %v1191, 2
        %v1455 = vpop.permute.xlu0 %1454
        %1456 = vrot.lane.b32.xlu0 %v1195, 2
        %v1457 = vpop.permute.xlu0 %1456
        %1458 = vrot.lane.b32.xlu0 %v1199, 2
        %v1459 = vpop.permute.xlu0 %1458
        %1460 = vrot.lane.b32.xlu0 %v1203, 2
        %v1461 = vpop.permute.xlu0 %1460
        %1462 = vrot.lane.b32.xlu0 %v1207, 2
        %v1463 = vpop.permute.xlu0 %1462
        %1464 = vrot.lane.b32.xlu0 %v1211, 2
        %v1465 = vpop.permute.xlu0 %1464
        %1466 = vrot.lane.b32.xlu0 %v1215, 2
        %v1467 = vpop.permute.xlu0 %1466
        %1468 = vrot.lane.b32.xlu0 %v1219, 2
        %v1469 = vpop.permute.xlu0 %1468
        %v1470 = vsel %vm1293, %v1439, %v1455
        %v1471 = vsel %vm1293, %v1441, %v1457
        %v1472 = vsel %vm1293, %v1443, %v1459
        %v1473 = vsel %vm1293, %v1445, %v1461
        %v1474 = vsel %vm1293, %v1447, %v1463
        %v1475 = vsel %vm1293, %v1449, %v1465
        %v1476 = vsel %vm1293, %v1451, %v1467
        %v1477 = vsel %vm1293, %v1453, %v1469
        %v1478 = vsel %vm1293, %v1423, %v1439
        %v1479 = vsel %vm1293, %v1425, %v1441
        %v1480 = vsel %vm1293, %v1427, %v1443
        %v1481 = vsel %vm1293, %v1429, %v1445
        %v1482 = vsel %vm1293, %v1431, %v1447
        %v1483 = vsel %vm1293, %v1433, %v1449
        %v1484 = vsel %vm1293, %v1435, %v1451
        %v1485 = vsel %vm1293, %v1437, %v1453
        %v1486 = vsel %vm1293, %v1407, %v1423
        %v1487 = vsel %vm1293, %v1409, %v1425
        %v1488 = vsel %vm1293, %v1411, %v1427
        %v1489 = vsel %vm1293, %v1413, %v1429
        %v1490 = vsel %vm1293, %v1415, %v1431
        %v1491 = vsel %vm1293, %v1417, %v1433
        %v1492 = vsel %vm1293, %v1419, %v1435
        %v1493 = vsel %vm1293, %v1421, %v1437
        %v1494 = vsel %vm1293, %v1455, %v1407
        %v1495 = vsel %vm1293, %v1457, %v1409
        %v1496 = vsel %vm1293, %v1459, %v1411
        %v1497 = vsel %vm1293, %v1461, %v1413
        %v1498 = vsel %vm1293, %v1463, %v1415
        %v1499 = vsel %vm1293, %v1465, %v1417
        %v1500 = vsel %vm1293, %v1467, %v1419
        %v1501 = vsel %vm1293, %v1469, %v1421
        %1502 = vset.pattern.permute.xlu0 5
        %1503 = vperm.xlu0 %1502, %v1326
        %v1504 = vpop.permute.xlu0 %1503
        %1506 = vset.pattern.permute.xlu0 5
        %1507 = vperm.xlu0 %1506, %v1327
        %v1508 = vpop.permute.xlu0 %1507
        %1510 = vset.pattern.permute.xlu0 5
        %1511 = vperm.xlu0 %1510, %v1328
        %v1512 = vpop.permute.xlu0 %1511
        %1514 = vset.pattern.permute.xlu0 5
        %1515 = vperm.xlu0 %1514, %v1329
        %v1516 = vpop.permute.xlu0 %1515
        %1518 = vset.pattern.permute.xlu0 5
        %1519 = vperm.xlu0 %1518, %v1330
        %v1520 = vpop.permute.xlu0 %1519
        %1522 = vset.pattern.permute.xlu0 5
        %1523 = vperm.xlu0 %1522, %v1331
        %v1524 = vpop.permute.xlu0 %1523
        %1526 = vset.pattern.permute.xlu0 5
        %1527 = vperm.xlu0 %1526, %v1332
        %v1528 = vpop.permute.xlu0 %1527
        %1530 = vset.pattern.permute.xlu0 5
        %1531 = vperm.xlu0 %1530, %v1333
        %v1532 = vpop.permute.xlu0 %1531
        %v1534 = vmul.f32 %v1494, %v1504
        %v1535 = vmul.f32 %v1486, %v1504
        %v1536 = vmul.f32 %v1478, %v1504
        %v1537 = vmul.f32 %v1470, %v1504
        %v1538 = vmul.f32 %v1495, %v1508
        %v1539 = vmul.f32 %v1487, %v1508
        %v1540 = vmul.f32 %v1479, %v1508
        %v1541 = vmul.f32 %v1471, %v1508
        %v1542 = vmul.f32 %v1496, %v1512
        %v1543 = vmul.f32 %v1488, %v1512
        %v1544 = vmul.f32 %v1480, %v1512
        %v1545 = vmul.f32 %v1472, %v1512
        %v1546 = vmul.f32 %v1497, %v1516
        %v1547 = vmul.f32 %v1489, %v1516
        %v1548 = vmul.f32 %v1481, %v1516
        %v1549 = vmul.f32 %v1473, %v1516
        %v1550 = vmul.f32 %v1498, %v1520
        %v1551 = vmul.f32 %v1490, %v1520
        %v1552 = vmul.f32 %v1482, %v1520
        %v1553 = vmul.f32 %v1474, %v1520
        %v1554 = vmul.f32 %v1499, %v1524
        %v1555 = vmul.f32 %v1491, %v1524
        %v1556 = vmul.f32 %v1483, %v1524
        %v1557 = vmul.f32 %v1475, %v1524
        %v1558 = vmul.f32 %v1500, %v1528
        %v1559 = vmul.f32 %v1492, %v1528
        %v1560 = vmul.f32 %v1484, %v1528
        %v1561 = vmul.f32 %v1476, %v1528
        %v1562 = vmul.f32 %v1501, %v1532
        %v1563 = vmul.f32 %v1493, %v1532
        %v1564 = vmul.f32 %v1485, %v1532
        %v1565 = vmul.f32 %v1477, %v1532
        %v1566 = vadd.f32 %v1374, %v1534
        %v1567 = vadd.f32 %v1375, %v1535
        %v1568 = vadd.f32 %v1376, %v1536
        %v1569 = vadd.f32 %v1377, %v1537
        %v1570 = vadd.f32 %v1378, %v1538
        %v1571 = vadd.f32 %v1379, %v1539
        %v1572 = vadd.f32 %v1380, %v1540
        %v1573 = vadd.f32 %v1381, %v1541
        %v1574 = vadd.f32 %v1382, %v1542
        %v1575 = vadd.f32 %v1383, %v1543
        %v1576 = vadd.f32 %v1384, %v1544
        %v1577 = vadd.f32 %v1385, %v1545
        %v1578 = vadd.f32 %v1386, %v1546
        %v1579 = vadd.f32 %v1387, %v1547
        %v1580 = vadd.f32 %v1388, %v1548
        %v1581 = vadd.f32 %v1389, %v1549
        %v1582 = vadd.f32 %v1390, %v1550
        %v1583 = vadd.f32 %v1391, %v1551
        %v1584 = vadd.f32 %v1392, %v1552
        %v1585 = vadd.f32 %v1393, %v1553
        %v1586 = vadd.f32 %v1394, %v1554
        %v1587 = vadd.f32 %v1395, %v1555
        %v1588 = vadd.f32 %v1396, %v1556
        %v1589 = vadd.f32 %v1397, %v1557
        %v1590 = vadd.f32 %v1398, %v1558
        %v1591 = vadd.f32 %v1399, %v1559
        %v1592 = vadd.f32 %v1400, %v1560
        %v1593 = vadd.f32 %v1401, %v1561
        %v1594 = vadd.f32 %v1402, %v1562
        %v1595 = vadd.f32 %v1403, %v1563
        %v1596 = vadd.f32 %v1404, %v1564
        %v1597 = vadd.f32 %v1405, %v1565
        %vm1598 = vcmp.ge.s32.totalorder %v1225, 2
        %vm1599 = vcmp.ge.s32.totalorder %v1226, 2
        %vm1600 = vcmp.ge.s32.totalorder %v1227, 2
        %vm1601 = vcmp.ge.s32.totalorder %v1228, 2
        %v1602 = vsel %vm1598, 1, 0
        %v1603 = vsel %vm1599, 1, 0
        %v1604 = vsel %vm1600, 1, 0
        %v1605 = vsel %vm1601, 1, 0
        %vm1606 = vcmp.eq.s32.totalorder %v1602, 1
        %vm1607 = vcmp.eq.s32.totalorder %v1603, 1
        %vm1608 = vcmp.eq.s32.totalorder %v1604, 1
        %vm1609 = vcmp.eq.s32.totalorder %v1605, 1
        %v1610 = vsel %vm1606, %v1566, 0.0
        %v1611 = vsel %vm1607, %v1567, 0.0
        %v1612 = vsel %vm1608, %v1568, 0.0
        %v1613 = vsel %vm1609, %v1569, 0.0
        %v1614 = vsel %vm1606, %v1570, 0.0
        %v1615 = vsel %vm1607, %v1571, 0.0
        %v1616 = vsel %vm1608, %v1572, 0.0
        %v1617 = vsel %vm1609, %v1573, 0.0
        %v1618 = vsel %vm1606, %v1574, 0.0
        %v1619 = vsel %vm1607, %v1575, 0.0
        %v1620 = vsel %vm1608, %v1576, 0.0
        %v1621 = vsel %vm1609, %v1577, 0.0
        %v1622 = vsel %vm1606, %v1578, 0.0
        %v1623 = vsel %vm1607, %v1579, 0.0
        %v1624 = vsel %vm1608, %v1580, 0.0
        %v1625 = vsel %vm1609, %v1581, 0.0
        %v1626 = vsel %vm1606, %v1582, 0.0
        %v1627 = vsel %vm1607, %v1583, 0.0
        %v1628 = vsel %vm1608, %v1584, 0.0
        %v1629 = vsel %vm1609, %v1585, 0.0
        %v1630 = vsel %vm1606, %v1586, 0.0
        %v1631 = vsel %vm1607, %v1587, 0.0
        %v1632 = vsel %vm1608, %v1588, 0.0
        %v1633 = vsel %vm1609, %v1589, 0.0
        %v1634 = vsel %vm1606, %v1590, 0.0
        %v1635 = vsel %vm1607, %v1591, 0.0
        %v1636 = vsel %vm1608, %v1592, 0.0
        %v1637 = vsel %vm1609, %v1593, 0.0
        %v1638 = vsel %vm1606, %v1594, 0.0
        %v1639 = vsel %vm1607, %v1595, 0.0
        %v1640 = vsel %vm1608, %v1596, 0.0
        %v1641 = vsel %vm1609, %v1597, 0.0
        %1642 = vrot.lane.b32.xlu0 %v897, 1
        %v1643 = vpop.permute.xlu0 %1642
        %1644 = vrot.lane.b32.xlu0 %v901, 1
        %v1645 = vpop.permute.xlu0 %1644
        %1646 = vrot.lane.b32.xlu0 %v905, 1
        %v1647 = vpop.permute.xlu0 %1646
        %1648 = vrot.lane.b32.xlu0 %v909, 1
        %v1649 = vpop.permute.xlu0 %1648
        %1650 = vrot.lane.b32.xlu0 %v913, 1
        %v1651 = vpop.permute.xlu0 %1650
        %1652 = vrot.lane.b32.xlu0 %v917, 1
        %v1653 = vpop.permute.xlu0 %1652
        %1654 = vrot.lane.b32.xlu0 %v921, 1
        %v1655 = vpop.permute.xlu0 %1654
        %1656 = vrot.lane.b32.xlu0 %v925, 1
        %v1657 = vpop.permute.xlu0 %1656
        %1658 = vrot.lane.b32.xlu0 %v898, 1
        %v1659 = vpop.permute.xlu0 %1658
        %1660 = vrot.lane.b32.xlu0 %v902, 1
        %v1661 = vpop.permute.xlu0 %1660
        %1662 = vrot.lane.b32.xlu0 %v906, 1
        %v1663 = vpop.permute.xlu0 %1662
        %1664 = vrot.lane.b32.xlu0 %v910, 1
        %v1665 = vpop.permute.xlu0 %1664
        %1666 = vrot.lane.b32.xlu0 %v914, 1
        %v1667 = vpop.permute.xlu0 %1666
        %1668 = vrot.lane.b32.xlu0 %v918, 1
        %v1669 = vpop.permute.xlu0 %1668
        %1670 = vrot.lane.b32.xlu0 %v922, 1
        %v1671 = vpop.permute.xlu0 %1670
        %1672 = vrot.lane.b32.xlu0 %v926, 1
        %v1673 = vpop.permute.xlu0 %1672
        %1674 = vrot.lane.b32.xlu0 %v899, 1
        %v1675 = vpop.permute.xlu0 %1674
        %1676 = vrot.lane.b32.xlu0 %v903, 1
        %v1677 = vpop.permute.xlu0 %1676
        %1678 = vrot.lane.b32.xlu0 %v907, 1
        %v1679 = vpop.permute.xlu0 %1678
        %1680 = vrot.lane.b32.xlu0 %v911, 1
        %v1681 = vpop.permute.xlu0 %1680
        %1682 = vrot.lane.b32.xlu0 %v915, 1
        %v1683 = vpop.permute.xlu0 %1682
        %1684 = vrot.lane.b32.xlu0 %v919, 1
        %v1685 = vpop.permute.xlu0 %1684
        %1686 = vrot.lane.b32.xlu0 %v923, 1
        %v1687 = vpop.permute.xlu0 %1686
        %1688 = vrot.lane.b32.xlu0 %v927, 1
        %v1689 = vpop.permute.xlu0 %1688
        %1690 = vrot.lane.b32.xlu0 %v900, 1
        %v1691 = vpop.permute.xlu0 %1690
        %1692 = vrot.lane.b32.xlu0 %v904, 1
        %v1693 = vpop.permute.xlu0 %1692
        %1694 = vrot.lane.b32.xlu0 %v908, 1
        %v1695 = vpop.permute.xlu0 %1694
        %1696 = vrot.lane.b32.xlu0 %v912, 1
        %v1697 = vpop.permute.xlu0 %1696
        %1698 = vrot.lane.b32.xlu0 %v916, 1
        %v1699 = vpop.permute.xlu0 %1698
        %1700 = vrot.lane.b32.xlu0 %v920, 1
        %v1701 = vpop.permute.xlu0 %1700
        %1702 = vrot.lane.b32.xlu0 %v924, 1
        %v1703 = vpop.permute.xlu0 %1702
        %1704 = vrot.lane.b32.xlu0 %v928, 1
        %v1705 = vpop.permute.xlu0 %1704
        %vm1706 = vcmp.lt.s32.totalorder %v1221, 1
        %v1707 = vsel %vm1706, %v1675, %v1691
        %v1708 = vsel %vm1706, %v1677, %v1693
        %v1709 = vsel %vm1706, %v1679, %v1695
        %v1710 = vsel %vm1706, %v1681, %v1697
        %v1711 = vsel %vm1706, %v1683, %v1699
        %v1712 = vsel %vm1706, %v1685, %v1701
        %v1713 = vsel %vm1706, %v1687, %v1703
        %v1714 = vsel %vm1706, %v1689, %v1705
        %v1715 = vsel %vm1706, %v1659, %v1675
        %v1716 = vsel %vm1706, %v1661, %v1677
        %v1717 = vsel %vm1706, %v1663, %v1679
        %v1718 = vsel %vm1706, %v1665, %v1681
        %v1719 = vsel %vm1706, %v1667, %v1683
        %v1720 = vsel %vm1706, %v1669, %v1685
        %v1721 = vsel %vm1706, %v1671, %v1687
        %v1722 = vsel %vm1706, %v1673, %v1689
        %v1723 = vsel %vm1706, %v1643, %v1659
        %v1724 = vsel %vm1706, %v1645, %v1661
        %v1725 = vsel %vm1706, %v1647, %v1663
        %v1726 = vsel %vm1706, %v1649, %v1665
        %v1727 = vsel %vm1706, %v1651, %v1667
        %v1728 = vsel %vm1706, %v1653, %v1669
        %v1729 = vsel %vm1706, %v1655, %v1671
        %v1730 = vsel %vm1706, %v1657, %v1673
        %v1731 = vsel %vm1706, %v1691, %v1643
        %v1732 = vsel %vm1706, %v1693, %v1645
        %v1733 = vsel %vm1706, %v1695, %v1647
        %v1734 = vsel %vm1706, %v1697, %v1649
        %v1735 = vsel %vm1706, %v1699, %v1651
        %v1736 = vsel %vm1706, %v1701, %v1653
        %v1737 = vsel %vm1706, %v1703, %v1655
        %v1738 = vsel %vm1706, %v1705, %v1657
        %1739 = vset.pattern.permute.xlu0 1
        %1740 = vperm.xlu0 %1739, %v1326
        %v1741 = vpop.permute.xlu0 %1740
        %1743 = vset.pattern.permute.xlu0 1
        %1744 = vperm.xlu0 %1743, %v1327
        %v1745 = vpop.permute.xlu0 %1744
        %1747 = vset.pattern.permute.xlu0 1
        %1748 = vperm.xlu0 %1747, %v1328
        %v1749 = vpop.permute.xlu0 %1748
        %1751 = vset.pattern.permute.xlu0 1
        %1752 = vperm.xlu0 %1751, %v1329
        %v1753 = vpop.permute.xlu0 %1752
        %1755 = vset.pattern.permute.xlu0 1
        %1756 = vperm.xlu0 %1755, %v1330
        %v1757 = vpop.permute.xlu0 %1756
        %1759 = vset.pattern.permute.xlu0 1
        %1760 = vperm.xlu0 %1759, %v1331
        %v1761 = vpop.permute.xlu0 %1760
        %1763 = vset.pattern.permute.xlu0 1
        %1764 = vperm.xlu0 %1763, %v1332
        %v1765 = vpop.permute.xlu0 %1764
        %1767 = vset.pattern.permute.xlu0 1
        %1768 = vperm.xlu0 %1767, %v1333
        %v1769 = vpop.permute.xlu0 %1768
        %v1771 = vmul.f32 %v1731, %v1741
        %v1772 = vmul.f32 %v1723, %v1741
        %v1773 = vmul.f32 %v1715, %v1741
        %v1774 = vmul.f32 %v1707, %v1741
        %v1775 = vmul.f32 %v1732, %v1745
        %v1776 = vmul.f32 %v1724, %v1745
        %v1777 = vmul.f32 %v1716, %v1745
        %v1778 = vmul.f32 %v1708, %v1745
        %v1779 = vmul.f32 %v1733, %v1749
        %v1780 = vmul.f32 %v1725, %v1749
        %v1781 = vmul.f32 %v1717, %v1749
        %v1782 = vmul.f32 %v1709, %v1749
        %v1783 = vmul.f32 %v1734, %v1753
        %v1784 = vmul.f32 %v1726, %v1753
        %v1785 = vmul.f32 %v1718, %v1753
        %v1786 = vmul.f32 %v1710, %v1753
        %v1787 = vmul.f32 %v1735, %v1757
        %v1788 = vmul.f32 %v1727, %v1757
        %v1789 = vmul.f32 %v1719, %v1757
        %v1790 = vmul.f32 %v1711, %v1757
        %v1791 = vmul.f32 %v1736, %v1761
        %v1792 = vmul.f32 %v1728, %v1761
        %v1793 = vmul.f32 %v1720, %v1761
        %v1794 = vmul.f32 %v1712, %v1761
        %v1795 = vmul.f32 %v1737, %v1765
        %v1796 = vmul.f32 %v1729, %v1765
        %v1797 = vmul.f32 %v1721, %v1765
        %v1798 = vmul.f32 %v1713, %v1765
        %v1799 = vmul.f32 %v1738, %v1769
        %v1800 = vmul.f32 %v1730, %v1769
        %v1801 = vmul.f32 %v1722, %v1769
        %v1802 = vmul.f32 %v1714, %v1769
        %1803 = vrot.lane.b32.xlu0 %v1188, 1
        %v1804 = vpop.permute.xlu0 %1803
        %1805 = vrot.lane.b32.xlu0 %v1192, 1
        %v1806 = vpop.permute.xlu0 %1805
        %1807 = vrot.lane.b32.xlu0 %v1196, 1
        %v1808 = vpop.permute.xlu0 %1807
        %1809 = vrot.lane.b32.xlu0 %v1200, 1
        %v1810 = vpop.permute.xlu0 %1809
        %1811 = vrot.lane.b32.xlu0 %v1204, 1
        %v1812 = vpop.permute.xlu0 %1811
        %1813 = vrot.lane.b32.xlu0 %v1208, 1
        %v1814 = vpop.permute.xlu0 %1813
        %1815 = vrot.lane.b32.xlu0 %v1212, 1
        %v1816 = vpop.permute.xlu0 %1815
        %1817 = vrot.lane.b32.xlu0 %v1216, 1
        %v1818 = vpop.permute.xlu0 %1817
        %1819 = vrot.lane.b32.xlu0 %v1189, 1
        %v1820 = vpop.permute.xlu0 %1819
        %1821 = vrot.lane.b32.xlu0 %v1193, 1
        %v1822 = vpop.permute.xlu0 %1821
        %1823 = vrot.lane.b32.xlu0 %v1197, 1
        %v1824 = vpop.permute.xlu0 %1823
        %1825 = vrot.lane.b32.xlu0 %v1201, 1
        %v1826 = vpop.permute.xlu0 %1825
        %1827 = vrot.lane.b32.xlu0 %v1205, 1
        %v1828 = vpop.permute.xlu0 %1827
        %1829 = vrot.lane.b32.xlu0 %v1209, 1
        %v1830 = vpop.permute.xlu0 %1829
        %1831 = vrot.lane.b32.xlu0 %v1213, 1
        %v1832 = vpop.permute.xlu0 %1831
        %1833 = vrot.lane.b32.xlu0 %v1217, 1
        %v1834 = vpop.permute.xlu0 %1833
        %1835 = vrot.lane.b32.xlu0 %v1190, 1
        %v1836 = vpop.permute.xlu0 %1835
        %1837 = vrot.lane.b32.xlu0 %v1194, 1
        %v1838 = vpop.permute.xlu0 %1837
        %1839 = vrot.lane.b32.xlu0 %v1198, 1
        %v1840 = vpop.permute.xlu0 %1839
        %1841 = vrot.lane.b32.xlu0 %v1202, 1
        %v1842 = vpop.permute.xlu0 %1841
        %1843 = vrot.lane.b32.xlu0 %v1206, 1
        %v1844 = vpop.permute.xlu0 %1843
        %1845 = vrot.lane.b32.xlu0 %v1210, 1
        %v1846 = vpop.permute.xlu0 %1845
        %1847 = vrot.lane.b32.xlu0 %v1214, 1
        %v1848 = vpop.permute.xlu0 %1847
        %1849 = vrot.lane.b32.xlu0 %v1218, 1
        %v1850 = vpop.permute.xlu0 %1849
        %1851 = vrot.lane.b32.xlu0 %v1191, 1
        %v1852 = vpop.permute.xlu0 %1851
        %1853 = vrot.lane.b32.xlu0 %v1195, 1
        %v1854 = vpop.permute.xlu0 %1853
        %1855 = vrot.lane.b32.xlu0 %v1199, 1
        %v1856 = vpop.permute.xlu0 %1855
        %1857 = vrot.lane.b32.xlu0 %v1203, 1
        %v1858 = vpop.permute.xlu0 %1857
        %1859 = vrot.lane.b32.xlu0 %v1207, 1
        %v1860 = vpop.permute.xlu0 %1859
        %1861 = vrot.lane.b32.xlu0 %v1211, 1
        %v1862 = vpop.permute.xlu0 %1861
        %1863 = vrot.lane.b32.xlu0 %v1215, 1
        %v1864 = vpop.permute.xlu0 %1863
        %1865 = vrot.lane.b32.xlu0 %v1219, 1
        %v1866 = vpop.permute.xlu0 %1865
        %v1867 = vsel %vm1706, %v1836, %v1852
        %v1868 = vsel %vm1706, %v1838, %v1854
        %v1869 = vsel %vm1706, %v1840, %v1856
        %v1870 = vsel %vm1706, %v1842, %v1858
        %v1871 = vsel %vm1706, %v1844, %v1860
        %v1872 = vsel %vm1706, %v1846, %v1862
        %v1873 = vsel %vm1706, %v1848, %v1864
        %v1874 = vsel %vm1706, %v1850, %v1866
        %v1875 = vsel %vm1706, %v1820, %v1836
        %v1876 = vsel %vm1706, %v1822, %v1838
        %v1877 = vsel %vm1706, %v1824, %v1840
        %v1878 = vsel %vm1706, %v1826, %v1842
        %v1879 = vsel %vm1706, %v1828, %v1844
        %v1880 = vsel %vm1706, %v1830, %v1846
        %v1881 = vsel %vm1706, %v1832, %v1848
        %v1882 = vsel %vm1706, %v1834, %v1850
        %v1883 = vsel %vm1706, %v1804, %v1820
        %v1884 = vsel %vm1706, %v1806, %v1822
        %v1885 = vsel %vm1706, %v1808, %v1824
        %v1886 = vsel %vm1706, %v1810, %v1826
        %v1887 = vsel %vm1706, %v1812, %v1828
        %v1888 = vsel %vm1706, %v1814, %v1830
        %v1889 = vsel %vm1706, %v1816, %v1832
        %v1890 = vsel %vm1706, %v1818, %v1834
        %v1891 = vsel %vm1706, %v1852, %v1804
        %v1892 = vsel %vm1706, %v1854, %v1806
        %v1893 = vsel %vm1706, %v1856, %v1808
        %v1894 = vsel %vm1706, %v1858, %v1810
        %v1895 = vsel %vm1706, %v1860, %v1812
        %v1896 = vsel %vm1706, %v1862, %v1814
        %v1897 = vsel %vm1706, %v1864, %v1816
        %v1898 = vsel %vm1706, %v1866, %v1818
        %1899 = vset.pattern.permute.xlu0 6
        %1900 = vperm.xlu0 %1899, %v1326
        %v1901 = vpop.permute.xlu0 %1900
        %1903 = vset.pattern.permute.xlu0 6
        %1904 = vperm.xlu0 %1903, %v1327
        %v1905 = vpop.permute.xlu0 %1904
        %1907 = vset.pattern.permute.xlu0 6
        %1908 = vperm.xlu0 %1907, %v1328
        %v1909 = vpop.permute.xlu0 %1908
        %1911 = vset.pattern.permute.xlu0 6
        %1912 = vperm.xlu0 %1911, %v1329
        %v1913 = vpop.permute.xlu0 %1912
        %1915 = vset.pattern.permute.xlu0 6
        %1916 = vperm.xlu0 %1915, %v1330
        %v1917 = vpop.permute.xlu0 %1916
        %1919 = vset.pattern.permute.xlu0 6
        %1920 = vperm.xlu0 %1919, %v1331
        %v1921 = vpop.permute.xlu0 %1920
        %1923 = vset.pattern.permute.xlu0 6
        %1924 = vperm.xlu0 %1923, %v1332
        %v1925 = vpop.permute.xlu0 %1924
        %1927 = vset.pattern.permute.xlu0 6
        %1928 = vperm.xlu0 %1927, %v1333
        %v1929 = vpop.permute.xlu0 %1928
        %v1931 = vmul.f32 %v1891, %v1901
        %v1932 = vmul.f32 %v1883, %v1901
        %v1933 = vmul.f32 %v1875, %v1901
        %v1934 = vmul.f32 %v1867, %v1901
        %v1935 = vmul.f32 %v1892, %v1905
        %v1936 = vmul.f32 %v1884, %v1905
        %v1937 = vmul.f32 %v1876, %v1905
        %v1938 = vmul.f32 %v1868, %v1905
        %v1939 = vmul.f32 %v1893, %v1909
        %v1940 = vmul.f32 %v1885, %v1909
        %v1941 = vmul.f32 %v1877, %v1909
        %v1942 = vmul.f32 %v1869, %v1909
        %v1943 = vmul.f32 %v1894, %v1913
        %v1944 = vmul.f32 %v1886, %v1913
        %v1945 = vmul.f32 %v1878, %v1913
        %v1946 = vmul.f32 %v1870, %v1913
        %v1947 = vmul.f32 %v1895, %v1917
        %v1948 = vmul.f32 %v1887, %v1917
        %v1949 = vmul.f32 %v1879, %v1917
        %v1950 = vmul.f32 %v1871, %v1917
        %v1951 = vmul.f32 %v1896, %v1921
        %v1952 = vmul.f32 %v1888, %v1921
        %v1953 = vmul.f32 %v1880, %v1921
        %v1954 = vmul.f32 %v1872, %v1921
        %v1955 = vmul.f32 %v1897, %v1925
        %v1956 = vmul.f32 %v1889, %v1925
        %v1957 = vmul.f32 %v1881, %v1925
        %v1958 = vmul.f32 %v1873, %v1925
        %v1959 = vmul.f32 %v1898, %v1929
        %v1960 = vmul.f32 %v1890, %v1929
        %v1961 = vmul.f32 %v1882, %v1929
        %v1962 = vmul.f32 %v1874, %v1929
        %v1963 = vadd.f32 %v1771, %v1931
        %v1964 = vadd.f32 %v1772, %v1932
        %v1965 = vadd.f32 %v1773, %v1933
        %v1966 = vadd.f32 %v1774, %v1934
        %v1967 = vadd.f32 %v1775, %v1935
        %v1968 = vadd.f32 %v1776, %v1936
        %v1969 = vadd.f32 %v1777, %v1937
        %v1970 = vadd.f32 %v1778, %v1938
        %v1971 = vadd.f32 %v1779, %v1939
        %v1972 = vadd.f32 %v1780, %v1940
        %v1973 = vadd.f32 %v1781, %v1941
        %v1974 = vadd.f32 %v1782, %v1942
        %v1975 = vadd.f32 %v1783, %v1943
        %v1976 = vadd.f32 %v1784, %v1944
        %v1977 = vadd.f32 %v1785, %v1945
        %v1978 = vadd.f32 %v1786, %v1946
        %v1979 = vadd.f32 %v1787, %v1947
        %v1980 = vadd.f32 %v1788, %v1948
        %v1981 = vadd.f32 %v1789, %v1949
        %v1982 = vadd.f32 %v1790, %v1950
        %v1983 = vadd.f32 %v1791, %v1951
        %v1984 = vadd.f32 %v1792, %v1952
        %v1985 = vadd.f32 %v1793, %v1953
        %v1986 = vadd.f32 %v1794, %v1954
        %v1987 = vadd.f32 %v1795, %v1955
        %v1988 = vadd.f32 %v1796, %v1956
        %v1989 = vadd.f32 %v1797, %v1957
        %v1990 = vadd.f32 %v1798, %v1958
        %v1991 = vadd.f32 %v1799, %v1959
        %v1992 = vadd.f32 %v1800, %v1960
        %v1993 = vadd.f32 %v1801, %v1961
        %v1994 = vadd.f32 %v1802, %v1962
        %vm1995 = vcmp.ge.s32.totalorder %v1225, 1
        %vm1996 = vcmp.ge.s32.totalorder %v1226, 1
        %vm1997 = vcmp.ge.s32.totalorder %v1227, 1
        %vm1998 = vcmp.ge.s32.totalorder %v1228, 1
        %v1999 = vsel %vm1995, 1, 0
        %v2000 = vsel %vm1996, 1, 0
        %v2001 = vsel %vm1997, 1, 0
        %v2002 = vsel %vm1998, 1, 0
        %vm2003 = vcmp.eq.s32.totalorder %v1999, 1
        %vm2004 = vcmp.eq.s32.totalorder %v2000, 1
        %vm2005 = vcmp.eq.s32.totalorder %v2001, 1
        %vm2006 = vcmp.eq.s32.totalorder %v2002, 1
        %v2007 = vsel %vm2003, %v1963, 0.0
        %v2008 = vsel %vm2004, %v1964, 0.0
        %v2009 = vsel %vm2005, %v1965, 0.0
        %v2010 = vsel %vm2006, %v1966, 0.0
        %v2011 = vsel %vm2003, %v1967, 0.0
        %v2012 = vsel %vm2004, %v1968, 0.0
        %v2013 = vsel %vm2005, %v1969, 0.0
        %v2014 = vsel %vm2006, %v1970, 0.0
        %v2015 = vsel %vm2003, %v1971, 0.0
        %v2016 = vsel %vm2004, %v1972, 0.0
        %v2017 = vsel %vm2005, %v1973, 0.0
        %v2018 = vsel %vm2006, %v1974, 0.0
        %v2019 = vsel %vm2003, %v1975, 0.0
        %v2020 = vsel %vm2004, %v1976, 0.0
        %v2021 = vsel %vm2005, %v1977, 0.0
        %v2022 = vsel %vm2006, %v1978, 0.0
        %v2023 = vsel %vm2003, %v1979, 0.0
        %v2024 = vsel %vm2004, %v1980, 0.0
        %v2025 = vsel %vm2005, %v1981, 0.0
        %v2026 = vsel %vm2006, %v1982, 0.0
        %v2027 = vsel %vm2003, %v1983, 0.0
        %v2028 = vsel %vm2004, %v1984, 0.0
        %v2029 = vsel %vm2005, %v1985, 0.0
        %v2030 = vsel %vm2006, %v1986, 0.0
        %v2031 = vsel %vm2003, %v1987, 0.0
        %v2032 = vsel %vm2004, %v1988, 0.0
        %v2033 = vsel %vm2005, %v1989, 0.0
        %v2034 = vsel %vm2006, %v1990, 0.0
        %v2035 = vsel %vm2003, %v1991, 0.0
        %v2036 = vsel %vm2004, %v1992, 0.0
        %v2037 = vsel %vm2005, %v1993, 0.0
        %v2038 = vsel %vm2006, %v1994, 0.0
        %2039 = vset.pattern.permute.xlu0 2
        %2040 = vperm.xlu0 %2039, %v1326
        %v2041 = vpop.permute.xlu0 %2040
        %2043 = vset.pattern.permute.xlu0 2
        %2044 = vperm.xlu0 %2043, %v1327
        %v2045 = vpop.permute.xlu0 %2044
        %2047 = vset.pattern.permute.xlu0 2
        %2048 = vperm.xlu0 %2047, %v1328
        %v2049 = vpop.permute.xlu0 %2048
        %2051 = vset.pattern.permute.xlu0 2
        %2052 = vperm.xlu0 %2051, %v1329
        %v2053 = vpop.permute.xlu0 %2052
        %2055 = vset.pattern.permute.xlu0 2
        %2056 = vperm.xlu0 %2055, %v1330
        %v2057 = vpop.permute.xlu0 %2056
        %2059 = vset.pattern.permute.xlu0 2
        %2060 = vperm.xlu0 %2059, %v1331
        %v2061 = vpop.permute.xlu0 %2060
        %2063 = vset.pattern.permute.xlu0 2
        %2064 = vperm.xlu0 %2063, %v1332
        %v2065 = vpop.permute.xlu0 %2064
        %2067 = vset.pattern.permute.xlu0 2
        %2068 = vperm.xlu0 %2067, %v1333
        %v2069 = vpop.permute.xlu0 %2068
        %v2071 = vmul.f32 %v897, %v2041
        %v2072 = vmul.f32 %v898, %v2041
        %v2073 = vmul.f32 %v899, %v2041
        %v2074 = vmul.f32 %v900, %v2041
        %v2075 = vmul.f32 %v901, %v2045
        %v2076 = vmul.f32 %v902, %v2045
        %v2077 = vmul.f32 %v903, %v2045
        %v2078 = vmul.f32 %v904, %v2045
        %v2079 = vmul.f32 %v905, %v2049
        %v2080 = vmul.f32 %v906, %v2049
        %v2081 = vmul.f32 %v907, %v2049
        %v2082 = vmul.f32 %v908, %v2049
        %v2083 = vmul.f32 %v909, %v2053
        %v2084 = vmul.f32 %v910, %v2053
        %v2085 = vmul.f32 %v911, %v2053
        %v2086 = vmul.f32 %v912, %v2053
        %v2087 = vmul.f32 %v913, %v2057
        %v2088 = vmul.f32 %v914, %v2057
        %v2089 = vmul.f32 %v915, %v2057
        %v2090 = vmul.f32 %v916, %v2057
        %v2091 = vmul.f32 %v917, %v2061
        %v2092 = vmul.f32 %v918, %v2061
        %v2093 = vmul.f32 %v919, %v2061
        %v2094 = vmul.f32 %v920, %v2061
        %v2095 = vmul.f32 %v921, %v2065
        %v2096 = vmul.f32 %v922, %v2065
        %v2097 = vmul.f32 %v923, %v2065
        %v2098 = vmul.f32 %v924, %v2065
        %v2099 = vmul.f32 %v925, %v2069
        %v2100 = vmul.f32 %v926, %v2069
        %v2101 = vmul.f32 %v927, %v2069
        %v2102 = vmul.f32 %v928, %v2069
        %2103 = vset.pattern.permute.xlu0 7
        %2104 = vperm.xlu0 %2103, %v1326
        %v2105 = vpop.permute.xlu0 %2104
        %2107 = vset.pattern.permute.xlu0 7
        %2108 = vperm.xlu0 %2107, %v1327
        %v2109 = vpop.permute.xlu0 %2108
        %2111 = vset.pattern.permute.xlu0 7
        %2112 = vperm.xlu0 %2111, %v1328
        %v2113 = vpop.permute.xlu0 %2112
        %2115 = vset.pattern.permute.xlu0 7
        %2116 = vperm.xlu0 %2115, %v1329
        %v2117 = vpop.permute.xlu0 %2116
        %2119 = vset.pattern.permute.xlu0 7
        %2120 = vperm.xlu0 %2119, %v1330
        %v2121 = vpop.permute.xlu0 %2120
        %2123 = vset.pattern.permute.xlu0 7
        %2124 = vperm.xlu0 %2123, %v1331
        %v2125 = vpop.permute.xlu0 %2124
        %2127 = vset.pattern.permute.xlu0 7
        %2128 = vperm.xlu0 %2127, %v1332
        %v2129 = vpop.permute.xlu0 %2128
        %2131 = vset.pattern.permute.xlu0 7
        %2132 = vperm.xlu0 %2131, %v1333
        %v2133 = vpop.permute.xlu0 %2132
        %v2135 = vmul.f32 %v1188, %v2105
        %v2136 = vmul.f32 %v1189, %v2105
        %v2137 = vmul.f32 %v1190, %v2105
        %v2138 = vmul.f32 %v1191, %v2105
        %v2139 = vmul.f32 %v1192, %v2109
        %v2140 = vmul.f32 %v1193, %v2109
        %v2141 = vmul.f32 %v1194, %v2109
        %v2142 = vmul.f32 %v1195, %v2109
        %v2143 = vmul.f32 %v1196, %v2113
        %v2144 = vmul.f32 %v1197, %v2113
        %v2145 = vmul.f32 %v1198, %v2113
        %v2146 = vmul.f32 %v1199, %v2113
        %v2147 = vmul.f32 %v1200, %v2117
        %v2148 = vmul.f32 %v1201, %v2117
        %v2149 = vmul.f32 %v1202, %v2117
        %v2150 = vmul.f32 %v1203, %v2117
        %v2151 = vmul.f32 %v1204, %v2121
        %v2152 = vmul.f32 %v1205, %v2121
        %v2153 = vmul.f32 %v1206, %v2121
        %v2154 = vmul.f32 %v1207, %v2121
        %v2155 = vmul.f32 %v1208, %v2125
        %v2156 = vmul.f32 %v1209, %v2125
        %v2157 = vmul.f32 %v1210, %v2125
        %v2158 = vmul.f32 %v1211, %v2125
        %v2159 = vmul.f32 %v1212, %v2129
        %v2160 = vmul.f32 %v1213, %v2129
        %v2161 = vmul.f32 %v1214, %v2129
        %v2162 = vmul.f32 %v1215, %v2129
        %v2163 = vmul.f32 %v1216, %v2133
        %v2164 = vmul.f32 %v1217, %v2133
        %v2165 = vmul.f32 %v1218, %v2133
        %v2166 = vmul.f32 %v1219, %v2133
        %v2167 = vadd.f32 %v2071, %v2135
        %v2168 = vadd.f32 %v2072, %v2136
        %v2169 = vadd.f32 %v2073, %v2137
        %v2170 = vadd.f32 %v2074, %v2138
        %v2171 = vadd.f32 %v2075, %v2139
        %v2172 = vadd.f32 %v2076, %v2140
        %v2173 = vadd.f32 %v2077, %v2141
        %v2174 = vadd.f32 %v2078, %v2142
        %v2175 = vadd.f32 %v2079, %v2143
        %v2176 = vadd.f32 %v2080, %v2144
        %v2177 = vadd.f32 %v2081, %v2145
        %v2178 = vadd.f32 %v2082, %v2146
        %v2179 = vadd.f32 %v2083, %v2147
        %v2180 = vadd.f32 %v2084, %v2148
        %v2181 = vadd.f32 %v2085, %v2149
        %v2182 = vadd.f32 %v2086, %v2150
        %v2183 = vadd.f32 %v2087, %v2151
        %v2184 = vadd.f32 %v2088, %v2152
        %v2185 = vadd.f32 %v2089, %v2153
        %v2186 = vadd.f32 %v2090, %v2154
        %v2187 = vadd.f32 %v2091, %v2155
        %v2188 = vadd.f32 %v2092, %v2156
        %v2189 = vadd.f32 %v2093, %v2157
        %v2190 = vadd.f32 %v2094, %v2158
        %v2191 = vadd.f32 %v2095, %v2159
        %v2192 = vadd.f32 %v2096, %v2160
        %v2193 = vadd.f32 %v2097, %v2161
        %v2194 = vadd.f32 %v2098, %v2162
        %v2195 = vadd.f32 %v2099, %v2163
        %v2196 = vadd.f32 %v2100, %v2164
        %v2197 = vadd.f32 %v2101, %v2165
        %v2198 = vadd.f32 %v2102, %v2166
        %v2199 = vadd.f32 %v1610, %v2167
        %v2200 = vadd.f32 %v1611, %v2168
        %v2201 = vadd.f32 %v1612, %v2169
        %v2202 = vadd.f32 %v1613, %v2170
        %v2203 = vadd.f32 %v1614, %v2171
        %v2204 = vadd.f32 %v1615, %v2172
        %v2205 = vadd.f32 %v1616, %v2173
        %v2206 = vadd.f32 %v1617, %v2174
        %v2207 = vadd.f32 %v1618, %v2175
        %v2208 = vadd.f32 %v1619, %v2176
        %v2209 = vadd.f32 %v1620, %v2177
        %v2210 = vadd.f32 %v1621, %v2178
        %v2211 = vadd.f32 %v1622, %v2179
        %v2212 = vadd.f32 %v1623, %v2180
        %v2213 = vadd.f32 %v1624, %v2181
        %v2214 = vadd.f32 %v1625, %v2182
        %v2215 = vadd.f32 %v1626, %v2183
        %v2216 = vadd.f32 %v1627, %v2184
        %v2217 = vadd.f32 %v1628, %v2185
        %v2218 = vadd.f32 %v1629, %v2186
        %v2219 = vadd.f32 %v1630, %v2187
        %v2220 = vadd.f32 %v1631, %v2188
        %v2221 = vadd.f32 %v1632, %v2189
        %v2222 = vadd.f32 %v1633, %v2190
        %v2223 = vadd.f32 %v1634, %v2191
        %v2224 = vadd.f32 %v1635, %v2192
        %v2225 = vadd.f32 %v1636, %v2193
        %v2226 = vadd.f32 %v1637, %v2194
        %v2227 = vadd.f32 %v1638, %v2195
        %v2228 = vadd.f32 %v1639, %v2196
        %v2229 = vadd.f32 %v1640, %v2197
        %v2230 = vadd.f32 %v1641, %v2198
        %2231 = vrot.lane.b32.xlu0 %v897, 127
        %v2232 = vpop.permute.xlu0 %2231
        %2233 = vrot.lane.b32.xlu0 %v901, 127
        %v2234 = vpop.permute.xlu0 %2233
        %2235 = vrot.lane.b32.xlu0 %v905, 127
        %v2236 = vpop.permute.xlu0 %2235
        %2237 = vrot.lane.b32.xlu0 %v909, 127
        %v2238 = vpop.permute.xlu0 %2237
        %2239 = vrot.lane.b32.xlu0 %v913, 127
        %v2240 = vpop.permute.xlu0 %2239
        %2241 = vrot.lane.b32.xlu0 %v917, 127
        %v2242 = vpop.permute.xlu0 %2241
        %2243 = vrot.lane.b32.xlu0 %v921, 127
        %v2244 = vpop.permute.xlu0 %2243
        %2245 = vrot.lane.b32.xlu0 %v925, 127
        %v2246 = vpop.permute.xlu0 %2245
        %2247 = vrot.lane.b32.xlu0 %v898, 127
        %v2248 = vpop.permute.xlu0 %2247
        %2249 = vrot.lane.b32.xlu0 %v902, 127
        %v2250 = vpop.permute.xlu0 %2249
        %2251 = vrot.lane.b32.xlu0 %v906, 127
        %v2252 = vpop.permute.xlu0 %2251
        %2253 = vrot.lane.b32.xlu0 %v910, 127
        %v2254 = vpop.permute.xlu0 %2253
        %2255 = vrot.lane.b32.xlu0 %v914, 127
        %v2256 = vpop.permute.xlu0 %2255
        %2257 = vrot.lane.b32.xlu0 %v918, 127
        %v2258 = vpop.permute.xlu0 %2257
        %2259 = vrot.lane.b32.xlu0 %v922, 127
        %v2260 = vpop.permute.xlu0 %2259
        %2261 = vrot.lane.b32.xlu0 %v926, 127
        %v2262 = vpop.permute.xlu0 %2261
        %2263 = vrot.lane.b32.xlu0 %v899, 127
        %v2264 = vpop.permute.xlu0 %2263
        %2265 = vrot.lane.b32.xlu0 %v903, 127
        %v2266 = vpop.permute.xlu0 %2265
        %2267 = vrot.lane.b32.xlu0 %v907, 127
        %v2268 = vpop.permute.xlu0 %2267
        %2269 = vrot.lane.b32.xlu0 %v911, 127
        %v2270 = vpop.permute.xlu0 %2269
        %2271 = vrot.lane.b32.xlu0 %v915, 127
        %v2272 = vpop.permute.xlu0 %2271
        %2273 = vrot.lane.b32.xlu0 %v919, 127
        %v2274 = vpop.permute.xlu0 %2273
        %2275 = vrot.lane.b32.xlu0 %v923, 127
        %v2276 = vpop.permute.xlu0 %2275
        %2277 = vrot.lane.b32.xlu0 %v927, 127
        %v2278 = vpop.permute.xlu0 %2277
        %2279 = vrot.lane.b32.xlu0 %v900, 127
        %v2280 = vpop.permute.xlu0 %2279
        %2281 = vrot.lane.b32.xlu0 %v904, 127
        %v2282 = vpop.permute.xlu0 %2281
        %2283 = vrot.lane.b32.xlu0 %v908, 127
        %v2284 = vpop.permute.xlu0 %2283
        %2285 = vrot.lane.b32.xlu0 %v912, 127
        %v2286 = vpop.permute.xlu0 %2285
        %2287 = vrot.lane.b32.xlu0 %v916, 127
        %v2288 = vpop.permute.xlu0 %2287
        %2289 = vrot.lane.b32.xlu0 %v920, 127
        %v2290 = vpop.permute.xlu0 %2289
        %2291 = vrot.lane.b32.xlu0 %v924, 127
        %v2292 = vpop.permute.xlu0 %2291
        %2293 = vrot.lane.b32.xlu0 %v928, 127
        %v2294 = vpop.permute.xlu0 %2293
        %vm2295 = vcmp.lt.s32.totalorder %v1221, 127
        %v2296 = vsel %vm2295, %v2264, %v2280
        %v2297 = vsel %vm2295, %v2266, %v2282
        %v2298 = vsel %vm2295, %v2268, %v2284
        %v2299 = vsel %vm2295, %v2270, %v2286
        %v2300 = vsel %vm2295, %v2272, %v2288
        %v2301 = vsel %vm2295, %v2274, %v2290
        %v2302 = vsel %vm2295, %v2276, %v2292
        %v2303 = vsel %vm2295, %v2278, %v2294
        %v2304 = vsel %vm2295, %v2248, %v2264
        %v2305 = vsel %vm2295, %v2250, %v2266
        %v2306 = vsel %vm2295, %v2252, %v2268
        %v2307 = vsel %vm2295, %v2254, %v2270
        %v2308 = vsel %vm2295, %v2256, %v2272
        %v2309 = vsel %vm2295, %v2258, %v2274
        %v2310 = vsel %vm2295, %v2260, %v2276
        %v2311 = vsel %vm2295, %v2262, %v2278
        %v2312 = vsel %vm2295, %v2232, %v2248
        %v2313 = vsel %vm2295, %v2234, %v2250
        %v2314 = vsel %vm2295, %v2236, %v2252
        %v2315 = vsel %vm2295, %v2238, %v2254
        %v2316 = vsel %vm2295, %v2240, %v2256
        %v2317 = vsel %vm2295, %v2242, %v2258
        %v2318 = vsel %vm2295, %v2244, %v2260
        %v2319 = vsel %vm2295, %v2246, %v2262
        %v2320 = vsel %vm2295, %v2280, %v2232
        %v2321 = vsel %vm2295, %v2282, %v2234
        %v2322 = vsel %vm2295, %v2284, %v2236
        %v2323 = vsel %vm2295, %v2286, %v2238
        %v2324 = vsel %vm2295, %v2288, %v2240
        %v2325 = vsel %vm2295, %v2290, %v2242
        %v2326 = vsel %vm2295, %v2292, %v2244
        %v2327 = vsel %vm2295, %v2294, %v2246
        %2328 = vset.pattern.permute.xlu0 3
        %2329 = vperm.xlu0 %2328, %v1326
        %v2330 = vpop.permute.xlu0 %2329
        %2332 = vset.pattern.permute.xlu0 3
        %2333 = vperm.xlu0 %2332, %v1327
        %v2334 = vpop.permute.xlu0 %2333
        %2336 = vset.pattern.permute.xlu0 3
        %2337 = vperm.xlu0 %2336, %v1328
        %v2338 = vpop.permute.xlu0 %2337
        %2340 = vset.pattern.permute.xlu0 3
        %2341 = vperm.xlu0 %2340, %v1329
        %v2342 = vpop.permute.xlu0 %2341
        %2344 = vset.pattern.permute.xlu0 3
        %2345 = vperm.xlu0 %2344, %v1330
        %v2346 = vpop.permute.xlu0 %2345
        %2348 = vset.pattern.permute.xlu0 3
        %2349 = vperm.xlu0 %2348, %v1331
        %v2350 = vpop.permute.xlu0 %2349
        %2352 = vset.pattern.permute.xlu0 3
        %2353 = vperm.xlu0 %2352, %v1332
        %v2354 = vpop.permute.xlu0 %2353
        %2356 = vset.pattern.permute.xlu0 3
        %2357 = vperm.xlu0 %2356, %v1333
        %v2358 = vpop.permute.xlu0 %2357
        %v2360 = vmul.f32 %v2312, %v2330
        %v2361 = vmul.f32 %v2304, %v2330
        %v2362 = vmul.f32 %v2296, %v2330
        %v2363 = vmul.f32 %v2320, %v2330
        %v2364 = vmul.f32 %v2313, %v2334
        %v2365 = vmul.f32 %v2305, %v2334
        %v2366 = vmul.f32 %v2297, %v2334
        %v2367 = vmul.f32 %v2321, %v2334
        %v2368 = vmul.f32 %v2314, %v2338
        %v2369 = vmul.f32 %v2306, %v2338
        %v2370 = vmul.f32 %v2298, %v2338
        %v2371 = vmul.f32 %v2322, %v2338
        %v2372 = vmul.f32 %v2315, %v2342
        %v2373 = vmul.f32 %v2307, %v2342
        %v2374 = vmul.f32 %v2299, %v2342
        %v2375 = vmul.f32 %v2323, %v2342
        %v2376 = vmul.f32 %v2316, %v2346
        %v2377 = vmul.f32 %v2308, %v2346
        %v2378 = vmul.f32 %v2300, %v2346
        %v2379 = vmul.f32 %v2324, %v2346
        %v2380 = vmul.f32 %v2317, %v2350
        %v2381 = vmul.f32 %v2309, %v2350
        %v2382 = vmul.f32 %v2301, %v2350
        %v2383 = vmul.f32 %v2325, %v2350
        %v2384 = vmul.f32 %v2318, %v2354
        %v2385 = vmul.f32 %v2310, %v2354
        %v2386 = vmul.f32 %v2302, %v2354
        %v2387 = vmul.f32 %v2326, %v2354
        %v2388 = vmul.f32 %v2319, %v2358
        %v2389 = vmul.f32 %v2311, %v2358
        %v2390 = vmul.f32 %v2303, %v2358
        %v2391 = vmul.f32 %v2327, %v2358
        %2392 = vrot.lane.b32.xlu0 %v1188, 127
        %v2393 = vpop.permute.xlu0 %2392
        %2394 = vrot.lane.b32.xlu0 %v1192, 127
        %v2395 = vpop.permute.xlu0 %2394
        %2396 = vrot.lane.b32.xlu0 %v1196, 127
        %v2397 = vpop.permute.xlu0 %2396
        %2398 = vrot.lane.b32.xlu0 %v1200, 127
        %v2399 = vpop.permute.xlu0 %2398
        %2400 = vrot.lane.b32.xlu0 %v1204, 127
        %v2401 = vpop.permute.xlu0 %2400
        %2402 = vrot.lane.b32.xlu0 %v1208, 127
        %v2403 = vpop.permute.xlu0 %2402
        %2404 = vrot.lane.b32.xlu0 %v1212, 127
        %v2405 = vpop.permute.xlu0 %2404
        %2406 = vrot.lane.b32.xlu0 %v1216, 127
        %v2407 = vpop.permute.xlu0 %2406
        %2408 = vrot.lane.b32.xlu0 %v1189, 127
        %v2409 = vpop.permute.xlu0 %2408
        %2410 = vrot.lane.b32.xlu0 %v1193, 127
        %v2411 = vpop.permute.xlu0 %2410
        %2412 = vrot.lane.b32.xlu0 %v1197, 127
        %v2413 = vpop.permute.xlu0 %2412
        %2414 = vrot.lane.b32.xlu0 %v1201, 127
        %v2415 = vpop.permute.xlu0 %2414
        %2416 = vrot.lane.b32.xlu0 %v1205, 127
        %v2417 = vpop.permute.xlu0 %2416
        %2418 = vrot.lane.b32.xlu0 %v1209, 127
        %v2419 = vpop.permute.xlu0 %2418
        %2420 = vrot.lane.b32.xlu0 %v1213, 127
        %v2421 = vpop.permute.xlu0 %2420
        %2422 = vrot.lane.b32.xlu0 %v1217, 127
        %v2423 = vpop.permute.xlu0 %2422
        %2424 = vrot.lane.b32.xlu0 %v1190, 127
        %v2425 = vpop.permute.xlu0 %2424
        %2426 = vrot.lane.b32.xlu0 %v1194, 127
        %v2427 = vpop.permute.xlu0 %2426
        %2428 = vrot.lane.b32.xlu0 %v1198, 127
        %v2429 = vpop.permute.xlu0 %2428
        %2430 = vrot.lane.b32.xlu0 %v1202, 127
        %v2431 = vpop.permute.xlu0 %2430
        %2432 = vrot.lane.b32.xlu0 %v1206, 127
        %v2433 = vpop.permute.xlu0 %2432
        %2434 = vrot.lane.b32.xlu0 %v1210, 127
        %v2435 = vpop.permute.xlu0 %2434
        %2436 = vrot.lane.b32.xlu0 %v1214, 127
        %v2437 = vpop.permute.xlu0 %2436
        %2438 = vrot.lane.b32.xlu0 %v1218, 127
        %v2439 = vpop.permute.xlu0 %2438
        %2440 = vrot.lane.b32.xlu0 %v1191, 127
        %v2441 = vpop.permute.xlu0 %2440
        %2442 = vrot.lane.b32.xlu0 %v1195, 127
        %v2443 = vpop.permute.xlu0 %2442
        %2444 = vrot.lane.b32.xlu0 %v1199, 127
        %v2445 = vpop.permute.xlu0 %2444
        %2446 = vrot.lane.b32.xlu0 %v1203, 127
        %v2447 = vpop.permute.xlu0 %2446
        %2448 = vrot.lane.b32.xlu0 %v1207, 127
        %v2449 = vpop.permute.xlu0 %2448
        %2450 = vrot.lane.b32.xlu0 %v1211, 127
        %v2451 = vpop.permute.xlu0 %2450
        %2452 = vrot.lane.b32.xlu0 %v1215, 127
        %v2453 = vpop.permute.xlu0 %2452
        %2454 = vrot.lane.b32.xlu0 %v1219, 127
        %v2455 = vpop.permute.xlu0 %2454
        %v2456 = vsel %vm2295, %v2425, %v2441
        %v2457 = vsel %vm2295, %v2427, %v2443
        %v2458 = vsel %vm2295, %v2429, %v2445
        %v2459 = vsel %vm2295, %v2431, %v2447
        %v2460 = vsel %vm2295, %v2433, %v2449
        %v2461 = vsel %vm2295, %v2435, %v2451
        %v2462 = vsel %vm2295, %v2437, %v2453
        %v2463 = vsel %vm2295, %v2439, %v2455
        %v2464 = vsel %vm2295, %v2409, %v2425
        %v2465 = vsel %vm2295, %v2411, %v2427
        %v2466 = vsel %vm2295, %v2413, %v2429
        %v2467 = vsel %vm2295, %v2415, %v2431
        %v2468 = vsel %vm2295, %v2417, %v2433
        %v2469 = vsel %vm2295, %v2419, %v2435
        %v2470 = vsel %vm2295, %v2421, %v2437
        %v2471 = vsel %vm2295, %v2423, %v2439
        %v2472 = vsel %vm2295, %v2393, %v2409
        %v2473 = vsel %vm2295, %v2395, %v2411
        %v2474 = vsel %vm2295, %v2397, %v2413
        %v2475 = vsel %vm2295, %v2399, %v2415
        %v2476 = vsel %vm2295, %v2401, %v2417
        %v2477 = vsel %vm2295, %v2403, %v2419
        %v2478 = vsel %vm2295, %v2405, %v2421
        %v2479 = vsel %vm2295, %v2407, %v2423
        %v2480 = vsel %vm2295, %v2441, %v2393
        %v2481 = vsel %vm2295, %v2443, %v2395
        %v2482 = vsel %vm2295, %v2445, %v2397
        %v2483 = vsel %vm2295, %v2447, %v2399
        %v2484 = vsel %vm2295, %v2449, %v2401
        %v2485 = vsel %vm2295, %v2451, %v2403
        %v2486 = vsel %vm2295, %v2453, %v2405
        %v2487 = vsel %vm2295, %v2455, %v2407
        %2488 = vset.pattern.permute.xlu0 8
        %2489 = vperm.xlu0 %2488, %v1326
        %v2490 = vpop.permute.xlu0 %2489
        %2492 = vset.pattern.permute.xlu0 8
        %2493 = vperm.xlu0 %2492, %v1327
        %v2494 = vpop.permute.xlu0 %2493
        %2496 = vset.pattern.permute.xlu0 8
        %2497 = vperm.xlu0 %2496, %v1328
        %v2498 = vpop.permute.xlu0 %2497
        %2500 = vset.pattern.permute.xlu0 8
        %2501 = vperm.xlu0 %2500, %v1329
        %v2502 = vpop.permute.xlu0 %2501
        %2504 = vset.pattern.permute.xlu0 8
        %2505 = vperm.xlu0 %2504, %v1330
        %v2506 = vpop.permute.xlu0 %2505
        %2508 = vset.pattern.permute.xlu0 8
        %2509 = vperm.xlu0 %2508, %v1331
        %v2510 = vpop.permute.xlu0 %2509
        %2512 = vset.pattern.permute.xlu0 8
        %2513 = vperm.xlu0 %2512, %v1332
        %v2514 = vpop.permute.xlu0 %2513
        %2516 = vset.pattern.permute.xlu0 8
        %2517 = vperm.xlu0 %2516, %v1333
        %v2518 = vpop.permute.xlu0 %2517
        %v2520 = vmul.f32 %v2472, %v2490
        %v2521 = vmul.f32 %v2464, %v2490
        %v2522 = vmul.f32 %v2456, %v2490
        %v2523 = vmul.f32 %v2480, %v2490
        %v2524 = vmul.f32 %v2473, %v2494
        %v2525 = vmul.f32 %v2465, %v2494
        %v2526 = vmul.f32 %v2457, %v2494
        %v2527 = vmul.f32 %v2481, %v2494
        %v2528 = vmul.f32 %v2474, %v2498
        %v2529 = vmul.f32 %v2466, %v2498
        %v2530 = vmul.f32 %v2458, %v2498
        %v2531 = vmul.f32 %v2482, %v2498
        %v2532 = vmul.f32 %v2475, %v2502
        %v2533 = vmul.f32 %v2467, %v2502
        %v2534 = vmul.f32 %v2459, %v2502
        %v2535 = vmul.f32 %v2483, %v2502
        %v2536 = vmul.f32 %v2476, %v2506
        %v2537 = vmul.f32 %v2468, %v2506
        %v2538 = vmul.f32 %v2460, %v2506
        %v2539 = vmul.f32 %v2484, %v2506
        %v2540 = vmul.f32 %v2477, %v2510
        %v2541 = vmul.f32 %v2469, %v2510
        %v2542 = vmul.f32 %v2461, %v2510
        %v2543 = vmul.f32 %v2485, %v2510
        %v2544 = vmul.f32 %v2478, %v2514
        %v2545 = vmul.f32 %v2470, %v2514
        %v2546 = vmul.f32 %v2462, %v2514
        %v2547 = vmul.f32 %v2486, %v2514
        %v2548 = vmul.f32 %v2479, %v2518
        %v2549 = vmul.f32 %v2471, %v2518
        %v2550 = vmul.f32 %v2463, %v2518
        %v2551 = vmul.f32 %v2487, %v2518
        %v2552 = vadd.f32 %v2360, %v2520
        %v2553 = vadd.f32 %v2361, %v2521
        %v2554 = vadd.f32 %v2362, %v2522
        %v2555 = vadd.f32 %v2363, %v2523
        %v2556 = vadd.f32 %v2364, %v2524
        %v2557 = vadd.f32 %v2365, %v2525
        %v2558 = vadd.f32 %v2366, %v2526
        %v2559 = vadd.f32 %v2367, %v2527
        %v2560 = vadd.f32 %v2368, %v2528
        %v2561 = vadd.f32 %v2369, %v2529
        %v2562 = vadd.f32 %v2370, %v2530
        %v2563 = vadd.f32 %v2371, %v2531
        %v2564 = vadd.f32 %v2372, %v2532
        %v2565 = vadd.f32 %v2373, %v2533
        %v2566 = vadd.f32 %v2374, %v2534
        %v2567 = vadd.f32 %v2375, %v2535
        %v2568 = vadd.f32 %v2376, %v2536
        %v2569 = vadd.f32 %v2377, %v2537
        %v2570 = vadd.f32 %v2378, %v2538
        %v2571 = vadd.f32 %v2379, %v2539
        %v2572 = vadd.f32 %v2380, %v2540
        %v2573 = vadd.f32 %v2381, %v2541
        %v2574 = vadd.f32 %v2382, %v2542
        %v2575 = vadd.f32 %v2383, %v2543
        %v2576 = vadd.f32 %v2384, %v2544
        %v2577 = vadd.f32 %v2385, %v2545
        %v2578 = vadd.f32 %v2386, %v2546
        %v2579 = vadd.f32 %v2387, %v2547
        %v2580 = vadd.f32 %v2388, %v2548
        %v2581 = vadd.f32 %v2389, %v2549
        %v2582 = vadd.f32 %v2390, %v2550
        %v2583 = vadd.f32 %v2391, %v2551
        %vm2584 = vcmp.lt.s32.totalorder %v1225, 127
        %vm2585 = vcmp.lt.s32.totalorder %v1226, 127
        %vm2586 = vcmp.lt.s32.totalorder %v1227, 127
        %vm2587 = vcmp.lt.s32.totalorder %v1228, 127
        %v2588 = vsel %vm2584, 1, 0
        %v2589 = vsel %vm2585, 1, 0
        %v2590 = vsel %vm2586, 1, 0
        %v2591 = vsel %vm2587, 1, 0
        %vm2592 = vcmp.eq.s32.totalorder %v2588, 1
        %vm2593 = vcmp.eq.s32.totalorder %v2589, 1
        %vm2594 = vcmp.eq.s32.totalorder %v2590, 1
        %vm2595 = vcmp.eq.s32.totalorder %v2591, 1
        %v2596 = vsel %vm2592, %v2552, 0.0
        %v2597 = vsel %vm2593, %v2553, 0.0
        %v2598 = vsel %vm2594, %v2554, 0.0
        %v2599 = vsel %vm2595, %v2555, 0.0
        %v2600 = vsel %vm2592, %v2556, 0.0
        %v2601 = vsel %vm2593, %v2557, 0.0
        %v2602 = vsel %vm2594, %v2558, 0.0
        %v2603 = vsel %vm2595, %v2559, 0.0
        %v2604 = vsel %vm2592, %v2560, 0.0
        %v2605 = vsel %vm2593, %v2561, 0.0
        %v2606 = vsel %vm2594, %v2562, 0.0
        %v2607 = vsel %vm2595, %v2563, 0.0
        %v2608 = vsel %vm2592, %v2564, 0.0
        %v2609 = vsel %vm2593, %v2565, 0.0
        %v2610 = vsel %vm2594, %v2566, 0.0
        %v2611 = vsel %vm2595, %v2567, 0.0
        %v2612 = vsel %vm2592, %v2568, 0.0
        %v2613 = vsel %vm2593, %v2569, 0.0
        %v2614 = vsel %vm2594, %v2570, 0.0
        %v2615 = vsel %vm2595, %v2571, 0.0
        %v2616 = vsel %vm2592, %v2572, 0.0
        %v2617 = vsel %vm2593, %v2573, 0.0
        %v2618 = vsel %vm2594, %v2574, 0.0
        %v2619 = vsel %vm2595, %v2575, 0.0
        %v2620 = vsel %vm2592, %v2576, 0.0
        %v2621 = vsel %vm2593, %v2577, 0.0
        %v2622 = vsel %vm2594, %v2578, 0.0
        %v2623 = vsel %vm2595, %v2579, 0.0
        %v2624 = vsel %vm2592, %v2580, 0.0
        %v2625 = vsel %vm2593, %v2581, 0.0
        %v2626 = vsel %vm2594, %v2582, 0.0
        %v2627 = vsel %vm2595, %v2583, 0.0
        %v2628 = vadd.f32 %v2007, %v2596
        %v2629 = vadd.f32 %v2008, %v2597
        %v2630 = vadd.f32 %v2009, %v2598
        %v2631 = vadd.f32 %v2010, %v2599
        %v2632 = vadd.f32 %v2011, %v2600
        %v2633 = vadd.f32 %v2012, %v2601
        %v2634 = vadd.f32 %v2013, %v2602
        %v2635 = vadd.f32 %v2014, %v2603
        %v2636 = vadd.f32 %v2015, %v2604
        %v2637 = vadd.f32 %v2016, %v2605
        %v2638 = vadd.f32 %v2017, %v2606
        %v2639 = vadd.f32 %v2018, %v2607
        %v2640 = vadd.f32 %v2019, %v2608
        %v2641 = vadd.f32 %v2020, %v2609
        %v2642 = vadd.f32 %v2021, %v2610
        %v2643 = vadd.f32 %v2022, %v2611
        %v2644 = vadd.f32 %v2023, %v2612
        %v2645 = vadd.f32 %v2024, %v2613
        %v2646 = vadd.f32 %v2025, %v2614
        %v2647 = vadd.f32 %v2026, %v2615
        %v2648 = vadd.f32 %v2027, %v2616
        %v2649 = vadd.f32 %v2028, %v2617
        %v2650 = vadd.f32 %v2029, %v2618
        %v2651 = vadd.f32 %v2030, %v2619
        %v2652 = vadd.f32 %v2031, %v2620
        %v2653 = vadd.f32 %v2032, %v2621
        %v2654 = vadd.f32 %v2033, %v2622
        %v2655 = vadd.f32 %v2034, %v2623
        %v2656 = vadd.f32 %v2035, %v2624
        %v2657 = vadd.f32 %v2036, %v2625
        %v2658 = vadd.f32 %v2037, %v2626
        %v2659 = vadd.f32 %v2038, %v2627
        %2660 = vrot.lane.b32.xlu0 %v897, 126
        %v2661 = vpop.permute.xlu0 %2660
        %2662 = vrot.lane.b32.xlu0 %v901, 126
        %v2663 = vpop.permute.xlu0 %2662
        %2664 = vrot.lane.b32.xlu0 %v905, 126
        %v2665 = vpop.permute.xlu0 %2664
        %2666 = vrot.lane.b32.xlu0 %v909, 126
        %v2667 = vpop.permute.xlu0 %2666
        %2668 = vrot.lane.b32.xlu0 %v913, 126
        %v2669 = vpop.permute.xlu0 %2668
        %2670 = vrot.lane.b32.xlu0 %v917, 126
        %v2671 = vpop.permute.xlu0 %2670
        %2672 = vrot.lane.b32.xlu0 %v921, 126
        %v2673 = vpop.permute.xlu0 %2672
        %2674 = vrot.lane.b32.xlu0 %v925, 126
        %v2675 = vpop.permute.xlu0 %2674
        %2676 = vrot.lane.b32.xlu0 %v898, 126
        %v2677 = vpop.permute.xlu0 %2676
        %2678 = vrot.lane.b32.xlu0 %v902, 126
        %v2679 = vpop.permute.xlu0 %2678
        %2680 = vrot.lane.b32.xlu0 %v906, 126
        %v2681 = vpop.permute.xlu0 %2680
        %2682 = vrot.lane.b32.xlu0 %v910, 126
        %v2683 = vpop.permute.xlu0 %2682
        %2684 = vrot.lane.b32.xlu0 %v914, 126
        %v2685 = vpop.permute.xlu0 %2684
        %2686 = vrot.lane.b32.xlu0 %v918, 126
        %v2687 = vpop.permute.xlu0 %2686
        %2688 = vrot.lane.b32.xlu0 %v922, 126
        %v2689 = vpop.permute.xlu0 %2688
        %2690 = vrot.lane.b32.xlu0 %v926, 126
        %v2691 = vpop.permute.xlu0 %2690
        %2692 = vrot.lane.b32.xlu0 %v899, 126
        %v2693 = vpop.permute.xlu0 %2692
        %2694 = vrot.lane.b32.xlu0 %v903, 126
        %v2695 = vpop.permute.xlu0 %2694
        %2696 = vrot.lane.b32.xlu0 %v907, 126
        %v2697 = vpop.permute.xlu0 %2696
        %2698 = vrot.lane.b32.xlu0 %v911, 126
        %v2699 = vpop.permute.xlu0 %2698
        %2700 = vrot.lane.b32.xlu0 %v915, 126
        %v2701 = vpop.permute.xlu0 %2700
        %2702 = vrot.lane.b32.xlu0 %v919, 126
        %v2703 = vpop.permute.xlu0 %2702
        %2704 = vrot.lane.b32.xlu0 %v923, 126
        %v2705 = vpop.permute.xlu0 %2704
        %2706 = vrot.lane.b32.xlu0 %v927, 126
        %v2707 = vpop.permute.xlu0 %2706
        %2708 = vrot.lane.b32.xlu0 %v900, 126
        %v2709 = vpop.permute.xlu0 %2708
        %2710 = vrot.lane.b32.xlu0 %v904, 126
        %v2711 = vpop.permute.xlu0 %2710
        %2712 = vrot.lane.b32.xlu0 %v908, 126
        %v2713 = vpop.permute.xlu0 %2712
        %2714 = vrot.lane.b32.xlu0 %v912, 126
        %v2715 = vpop.permute.xlu0 %2714
        %2716 = vrot.lane.b32.xlu0 %v916, 126
        %v2717 = vpop.permute.xlu0 %2716
        %2718 = vrot.lane.b32.xlu0 %v920, 126
        %v2719 = vpop.permute.xlu0 %2718
        %2720 = vrot.lane.b32.xlu0 %v924, 126
        %v2721 = vpop.permute.xlu0 %2720
        %2722 = vrot.lane.b32.xlu0 %v928, 126
        %v2723 = vpop.permute.xlu0 %2722
        %vm2724 = vcmp.lt.s32.totalorder %v1221, 126
        %v2725 = vsel %vm2724, %v2693, %v2709
        %v2726 = vsel %vm2724, %v2695, %v2711
        %v2727 = vsel %vm2724, %v2697, %v2713
        %v2728 = vsel %vm2724, %v2699, %v2715
        %v2729 = vsel %vm2724, %v2701, %v2717
        %v2730 = vsel %vm2724, %v2703, %v2719
        %v2731 = vsel %vm2724, %v2705, %v2721
        %v2732 = vsel %vm2724, %v2707, %v2723
        %v2733 = vsel %vm2724, %v2677, %v2693
        %v2734 = vsel %vm2724, %v2679, %v2695
        %v2735 = vsel %vm2724, %v2681, %v2697
        %v2736 = vsel %vm2724, %v2683, %v2699
        %v2737 = vsel %vm2724, %v2685, %v2701
        %v2738 = vsel %vm2724, %v2687, %v2703
        %v2739 = vsel %vm2724, %v2689, %v2705
        %v2740 = vsel %vm2724, %v2691, %v2707
        %v2741 = vsel %vm2724, %v2661, %v2677
        %v2742 = vsel %vm2724, %v2663, %v2679
        %v2743 = vsel %vm2724, %v2665, %v2681
        %v2744 = vsel %vm2724, %v2667, %v2683
        %v2745 = vsel %vm2724, %v2669, %v2685
        %v2746 = vsel %vm2724, %v2671, %v2687
        %v2747 = vsel %vm2724, %v2673, %v2689
        %v2748 = vsel %vm2724, %v2675, %v2691
        %v2749 = vsel %vm2724, %v2709, %v2661
        %v2750 = vsel %vm2724, %v2711, %v2663
        %v2751 = vsel %vm2724, %v2713, %v2665
        %v2752 = vsel %vm2724, %v2715, %v2667
        %v2753 = vsel %vm2724, %v2717, %v2669
        %v2754 = vsel %vm2724, %v2719, %v2671
        %v2755 = vsel %vm2724, %v2721, %v2673
        %v2756 = vsel %vm2724, %v2723, %v2675
        %2757 = vset.pattern.permute.xlu0 4
        %2758 = vperm.xlu0 %2757, %v1326
        %v2759 = vpop.permute.xlu0 %2758
        %2761 = vset.pattern.permute.xlu0 4
        %2762 = vperm.xlu0 %2761, %v1327
        %v2763 = vpop.permute.xlu0 %2762
        %2765 = vset.pattern.permute.xlu0 4
        %2766 = vperm.xlu0 %2765, %v1328
        %v2767 = vpop.permute.xlu0 %2766
        %2769 = vset.pattern.permute.xlu0 4
        %2770 = vperm.xlu0 %2769, %v1329
        %v2771 = vpop.permute.xlu0 %2770
        %2773 = vset.pattern.permute.xlu0 4
        %2774 = vperm.xlu0 %2773, %v1330
        %v2775 = vpop.permute.xlu0 %2774
        %2777 = vset.pattern.permute.xlu0 4
        %2778 = vperm.xlu0 %2777, %v1331
        %v2779 = vpop.permute.xlu0 %2778
        %2781 = vset.pattern.permute.xlu0 4
        %2782 = vperm.xlu0 %2781, %v1332
        %v2783 = vpop.permute.xlu0 %2782
        %2785 = vset.pattern.permute.xlu0 4
        %2786 = vperm.xlu0 %2785, %v1333
        %v2787 = vpop.permute.xlu0 %2786
        %v2789 = vmul.f32 %v2741, %v2759
        %v2790 = vmul.f32 %v2733, %v2759
        %v2791 = vmul.f32 %v2725, %v2759
        %v2792 = vmul.f32 %v2749, %v2759
        %v2793 = vmul.f32 %v2742, %v2763
        %v2794 = vmul.f32 %v2734, %v2763
        %v2795 = vmul.f32 %v2726, %v2763
        %v2796 = vmul.f32 %v2750, %v2763
        %v2797 = vmul.f32 %v2743, %v2767
        %v2798 = vmul.f32 %v2735, %v2767
        %v2799 = vmul.f32 %v2727, %v2767
        %v2800 = vmul.f32 %v2751, %v2767
        %v2801 = vmul.f32 %v2744, %v2771
        %v2802 = vmul.f32 %v2736, %v2771
        %v2803 = vmul.f32 %v2728, %v2771
        %v2804 = vmul.f32 %v2752, %v2771
        %v2805 = vmul.f32 %v2745, %v2775
        %v2806 = vmul.f32 %v2737, %v2775
        %v2807 = vmul.f32 %v2729, %v2775
        %v2808 = vmul.f32 %v2753, %v2775
        %v2809 = vmul.f32 %v2746, %v2779
        %v2810 = vmul.f32 %v2738, %v2779
        %v2811 = vmul.f32 %v2730, %v2779
        %v2812 = vmul.f32 %v2754, %v2779
        %v2813 = vmul.f32 %v2747, %v2783
        %v2814 = vmul.f32 %v2739, %v2783
        %v2815 = vmul.f32 %v2731, %v2783
        %v2816 = vmul.f32 %v2755, %v2783
        %v2817 = vmul.f32 %v2748, %v2787
        %v2818 = vmul.f32 %v2740, %v2787
        %v2819 = vmul.f32 %v2732, %v2787
        %v2820 = vmul.f32 %v2756, %v2787
        %2821 = vrot.lane.b32.xlu0 %v1188, 126
        %v2822 = vpop.permute.xlu0 %2821
        %2823 = vrot.lane.b32.xlu0 %v1192, 126
        %v2824 = vpop.permute.xlu0 %2823
        %2825 = vrot.lane.b32.xlu0 %v1196, 126
        %v2826 = vpop.permute.xlu0 %2825
        %2827 = vrot.lane.b32.xlu0 %v1200, 126
        %v2828 = vpop.permute.xlu0 %2827
        %2829 = vrot.lane.b32.xlu0 %v1204, 126
        %v2830 = vpop.permute.xlu0 %2829
        %2831 = vrot.lane.b32.xlu0 %v1208, 126
        %v2832 = vpop.permute.xlu0 %2831
        %2833 = vrot.lane.b32.xlu0 %v1212, 126
        %v2834 = vpop.permute.xlu0 %2833
        %2835 = vrot.lane.b32.xlu0 %v1216, 126
        %v2836 = vpop.permute.xlu0 %2835
        %2837 = vrot.lane.b32.xlu0 %v1189, 126
        %v2838 = vpop.permute.xlu0 %2837
        %2839 = vrot.lane.b32.xlu0 %v1193, 126
        %v2840 = vpop.permute.xlu0 %2839
        %2841 = vrot.lane.b32.xlu0 %v1197, 126
        %v2842 = vpop.permute.xlu0 %2841
        %2843 = vrot.lane.b32.xlu0 %v1201, 126
        %v2844 = vpop.permute.xlu0 %2843
        %2845 = vrot.lane.b32.xlu0 %v1205, 126
        %v2846 = vpop.permute.xlu0 %2845
        %2847 = vrot.lane.b32.xlu0 %v1209, 126
        %v2848 = vpop.permute.xlu0 %2847
        %2849 = vrot.lane.b32.xlu0 %v1213, 126
        %v2850 = vpop.permute.xlu0 %2849
        %2851 = vrot.lane.b32.xlu0 %v1217, 126
        %v2852 = vpop.permute.xlu0 %2851
        %2853 = vrot.lane.b32.xlu0 %v1190, 126
        %v2854 = vpop.permute.xlu0 %2853
        %2855 = vrot.lane.b32.xlu0 %v1194, 126
        %v2856 = vpop.permute.xlu0 %2855
        %2857 = vrot.lane.b32.xlu0 %v1198, 126
        %v2858 = vpop.permute.xlu0 %2857
        %2859 = vrot.lane.b32.xlu0 %v1202, 126
        %v2860 = vpop.permute.xlu0 %2859
        %2861 = vrot.lane.b32.xlu0 %v1206, 126
        %v2862 = vpop.permute.xlu0 %2861
        %2863 = vrot.lane.b32.xlu0 %v1210, 126
        %v2864 = vpop.permute.xlu0 %2863
        %2865 = vrot.lane.b32.xlu0 %v1214, 126
        %v2866 = vpop.permute.xlu0 %2865
        %2867 = vrot.lane.b32.xlu0 %v1218, 126
        %v2868 = vpop.permute.xlu0 %2867
        %2869 = vrot.lane.b32.xlu0 %v1191, 126
        %v2870 = vpop.permute.xlu0 %2869
        %2871 = vrot.lane.b32.xlu0 %v1195, 126
        %v2872 = vpop.permute.xlu0 %2871
        %2873 = vrot.lane.b32.xlu0 %v1199, 126
        %v2874 = vpop.permute.xlu0 %2873
        %2875 = vrot.lane.b32.xlu0 %v1203, 126
        %v2876 = vpop.permute.xlu0 %2875
        %2877 = vrot.lane.b32.xlu0 %v1207, 126
        %v2878 = vpop.permute.xlu0 %2877
        %2879 = vrot.lane.b32.xlu0 %v1211, 126
        %v2880 = vpop.permute.xlu0 %2879
        %2881 = vrot.lane.b32.xlu0 %v1215, 126
        %v2882 = vpop.permute.xlu0 %2881
        %2883 = vrot.lane.b32.xlu0 %v1219, 126
        %v2884 = vpop.permute.xlu0 %2883
        %v2885 = vsel %vm2724, %v2854, %v2870
        %v2886 = vsel %vm2724, %v2856, %v2872
        %v2887 = vsel %vm2724, %v2858, %v2874
        %v2888 = vsel %vm2724, %v2860, %v2876
        %v2889 = vsel %vm2724, %v2862, %v2878
        %v2890 = vsel %vm2724, %v2864, %v2880
        %v2891 = vsel %vm2724, %v2866, %v2882
        %v2892 = vsel %vm2724, %v2868, %v2884
        %v2893 = vsel %vm2724, %v2838, %v2854
        %v2894 = vsel %vm2724, %v2840, %v2856
        %v2895 = vsel %vm2724, %v2842, %v2858
        %v2896 = vsel %vm2724, %v2844, %v2860
        %v2897 = vsel %vm2724, %v2846, %v2862
        %v2898 = vsel %vm2724, %v2848, %v2864
        %v2899 = vsel %vm2724, %v2850, %v2866
        %v2900 = vsel %vm2724, %v2852, %v2868
        %v2901 = vsel %vm2724, %v2822, %v2838
        %v2902 = vsel %vm2724, %v2824, %v2840
        %v2903 = vsel %vm2724, %v2826, %v2842
        %v2904 = vsel %vm2724, %v2828, %v2844
        %v2905 = vsel %vm2724, %v2830, %v2846
        %v2906 = vsel %vm2724, %v2832, %v2848
        %v2907 = vsel %vm2724, %v2834, %v2850
        %v2908 = vsel %vm2724, %v2836, %v2852
        %v2909 = vsel %vm2724, %v2870, %v2822
        %v2910 = vsel %vm2724, %v2872, %v2824
        %v2911 = vsel %vm2724, %v2874, %v2826
        %v2912 = vsel %vm2724, %v2876, %v2828
        %v2913 = vsel %vm2724, %v2878, %v2830
        %v2914 = vsel %vm2724, %v2880, %v2832
        %v2915 = vsel %vm2724, %v2882, %v2834
        %v2916 = vsel %vm2724, %v2884, %v2836
        %2917 = vset.pattern.permute.xlu0 9
        %2918 = vperm.xlu0 %2917, %v1326
        %v2919 = vpop.permute.xlu0 %2918
        %2921 = vset.pattern.permute.xlu0 9
        %2922 = vperm.xlu0 %2921, %v1327
        %v2923 = vpop.permute.xlu0 %2922
        %2925 = vset.pattern.permute.xlu0 9
        %2926 = vperm.xlu0 %2925, %v1328
        %v2927 = vpop.permute.xlu0 %2926
        %2929 = vset.pattern.permute.xlu0 9
        %2930 = vperm.xlu0 %2929, %v1329
        %v2931 = vpop.permute.xlu0 %2930
        %2933 = vset.pattern.permute.xlu0 9
        %2934 = vperm.xlu0 %2933, %v1330
        %v2935 = vpop.permute.xlu0 %2934
        %2937 = vset.pattern.permute.xlu0 9
        %2938 = vperm.xlu0 %2937, %v1331
        %v2939 = vpop.permute.xlu0 %2938
        %2941 = vset.pattern.permute.xlu0 9
        %2942 = vperm.xlu0 %2941, %v1332
        %v2943 = vpop.permute.xlu0 %2942
        %2945 = vset.pattern.permute.xlu0 9
        %2946 = vperm.xlu0 %2945, %v1333
        %v2947 = vpop.permute.xlu0 %2946
        %v2949 = vmul.f32 %v2901, %v2919
        %v2950 = vmul.f32 %v2893, %v2919
        %v2951 = vmul.f32 %v2885, %v2919
        %v2952 = vmul.f32 %v2909, %v2919
        %v2953 = vmul.f32 %v2902, %v2923
        %v2954 = vmul.f32 %v2894, %v2923
        %v2955 = vmul.f32 %v2886, %v2923
        %v2956 = vmul.f32 %v2910, %v2923
        %v2957 = vmul.f32 %v2903, %v2927
        %v2958 = vmul.f32 %v2895, %v2927
        %v2959 = vmul.f32 %v2887, %v2927
        %v2960 = vmul.f32 %v2911, %v2927
        %v2961 = vmul.f32 %v2904, %v2931
        %v2962 = vmul.f32 %v2896, %v2931
        %v2963 = vmul.f32 %v2888, %v2931
        %v2964 = vmul.f32 %v2912, %v2931
        %v2965 = vmul.f32 %v2905, %v2935
        %v2966 = vmul.f32 %v2897, %v2935
        %v2967 = vmul.f32 %v2889, %v2935
        %v2968 = vmul.f32 %v2913, %v2935
        %v2969 = vmul.f32 %v2906, %v2939
        %v2970 = vmul.f32 %v2898, %v2939
        %v2971 = vmul.f32 %v2890, %v2939
        %v2972 = vmul.f32 %v2914, %v2939
        %v2973 = vmul.f32 %v2907, %v2943
        %v2974 = vmul.f32 %v2899, %v2943
        %v2975 = vmul.f32 %v2891, %v2943
        %v2976 = vmul.f32 %v2915, %v2943
        %v2977 = vmul.f32 %v2908, %v2947
        %v2978 = vmul.f32 %v2900, %v2947
        %v2979 = vmul.f32 %v2892, %v2947
        %v2980 = vmul.f32 %v2916, %v2947
        %v2981 = vadd.f32 %v2789, %v2949
        %v2982 = vadd.f32 %v2790, %v2950
        %v2983 = vadd.f32 %v2791, %v2951
        %v2984 = vadd.f32 %v2792, %v2952
        %v2985 = vadd.f32 %v2793, %v2953
        %v2986 = vadd.f32 %v2794, %v2954
        %v2987 = vadd.f32 %v2795, %v2955
        %v2988 = vadd.f32 %v2796, %v2956
        %v2989 = vadd.f32 %v2797, %v2957
        %v2990 = vadd.f32 %v2798, %v2958
        %v2991 = vadd.f32 %v2799, %v2959
        %v2992 = vadd.f32 %v2800, %v2960
        %v2993 = vadd.f32 %v2801, %v2961
        %v2994 = vadd.f32 %v2802, %v2962
        %v2995 = vadd.f32 %v2803, %v2963
        %v2996 = vadd.f32 %v2804, %v2964
        %v2997 = vadd.f32 %v2805, %v2965
        %v2998 = vadd.f32 %v2806, %v2966
        %v2999 = vadd.f32 %v2807, %v2967
        %v3000 = vadd.f32 %v2808, %v2968
        %v3001 = vadd.f32 %v2809, %v2969
        %v3002 = vadd.f32 %v2810, %v2970
        %v3003 = vadd.f32 %v2811, %v2971
        %v3004 = vadd.f32 %v2812, %v2972
        %v3005 = vadd.f32 %v2813, %v2973
        %v3006 = vadd.f32 %v2814, %v2974
        %v3007 = vadd.f32 %v2815, %v2975
        %v3008 = vadd.f32 %v2816, %v2976
        %v3009 = vadd.f32 %v2817, %v2977
        %v3010 = vadd.f32 %v2818, %v2978
        %v3011 = vadd.f32 %v2819, %v2979
        %v3012 = vadd.f32 %v2820, %v2980
        %vm3013 = vcmp.lt.s32.totalorder %v1225, 126
        %vm3014 = vcmp.lt.s32.totalorder %v1226, 126
        %vm3015 = vcmp.lt.s32.totalorder %v1227, 126
        %vm3016 = vcmp.lt.s32.totalorder %v1228, 126
        %v3017 = vsel %vm3013, 1, 0
        %v3018 = vsel %vm3014, 1, 0
        %v3019 = vsel %vm3015, 1, 0
        %v3020 = vsel %vm3016, 1, 0
        %vm3021 = vcmp.eq.s32.totalorder %v3017, 1
        %vm3022 = vcmp.eq.s32.totalorder %v3018, 1
        %vm3023 = vcmp.eq.s32.totalorder %v3019, 1
        %vm3024 = vcmp.eq.s32.totalorder %v3020, 1
        %v3025 = vsel %vm3021, %v2981, 0.0
        %v3026 = vsel %vm3022, %v2982, 0.0
        %v3027 = vsel %vm3023, %v2983, 0.0
        %v3028 = vsel %vm3024, %v2984, 0.0
        %v3029 = vsel %vm3021, %v2985, 0.0
        %v3030 = vsel %vm3022, %v2986, 0.0
        %v3031 = vsel %vm3023, %v2987, 0.0
        %v3032 = vsel %vm3024, %v2988, 0.0
        %v3033 = vsel %vm3021, %v2989, 0.0
        %v3034 = vsel %vm3022, %v2990, 0.0
        %v3035 = vsel %vm3023, %v2991, 0.0
        %v3036 = vsel %vm3024, %v2992, 0.0
        %v3037 = vsel %vm3021, %v2993, 0.0
        %v3038 = vsel %vm3022, %v2994, 0.0
        %v3039 = vsel %vm3023, %v2995, 0.0
        %v3040 = vsel %vm3024, %v2996, 0.0
        %v3041 = vsel %vm3021, %v2997, 0.0
        %v3042 = vsel %vm3022, %v2998, 0.0
        %v3043 = vsel %vm3023, %v2999, 0.0
        %v3044 = vsel %vm3024, %v3000, 0.0
        %v3045 = vsel %vm3021, %v3001, 0.0
        %v3046 = vsel %vm3022, %v3002, 0.0
        %v3047 = vsel %vm3023, %v3003, 0.0
        %v3048 = vsel %vm3024, %v3004, 0.0
        %v3049 = vsel %vm3021, %v3005, 0.0
        %v3050 = vsel %vm3022, %v3006, 0.0
        %v3051 = vsel %vm3023, %v3007, 0.0
        %v3052 = vsel %vm3024, %v3008, 0.0
        %v3053 = vsel %vm3021, %v3009, 0.0
        %v3054 = vsel %vm3022, %v3010, 0.0
        %v3055 = vsel %vm3023, %v3011, 0.0
        %v3056 = vsel %vm3024, %v3012, 0.0
        %v3057 = vadd.f32 %v2199, %v3025
        %v3058 = vadd.f32 %v2200, %v3026
        %v3059 = vadd.f32 %v2201, %v3027
        %v3060 = vadd.f32 %v2202, %v3028
        %v3061 = vadd.f32 %v2203, %v3029
        %v3062 = vadd.f32 %v2204, %v3030
        %v3063 = vadd.f32 %v2205, %v3031
        %v3064 = vadd.f32 %v2206, %v3032
        %v3065 = vadd.f32 %v2207, %v3033
        %v3066 = vadd.f32 %v2208, %v3034
        %v3067 = vadd.f32 %v2209, %v3035
        %v3068 = vadd.f32 %v2210, %v3036
        %v3069 = vadd.f32 %v2211, %v3037
        %v3070 = vadd.f32 %v2212, %v3038
        %v3071 = vadd.f32 %v2213, %v3039
        %v3072 = vadd.f32 %v2214, %v3040
        %v3073 = vadd.f32 %v2215, %v3041
        %v3074 = vadd.f32 %v2216, %v3042
        %v3075 = vadd.f32 %v2217, %v3043
        %v3076 = vadd.f32 %v2218, %v3044
        %v3077 = vadd.f32 %v2219, %v3045
        %v3078 = vadd.f32 %v2220, %v3046
        %v3079 = vadd.f32 %v2221, %v3047
        %v3080 = vadd.f32 %v2222, %v3048
        %v3081 = vadd.f32 %v2223, %v3049
        %v3082 = vadd.f32 %v2224, %v3050
        %v3083 = vadd.f32 %v2225, %v3051
        %v3084 = vadd.f32 %v2226, %v3052
        %v3085 = vadd.f32 %v2227, %v3053
        %v3086 = vadd.f32 %v2228, %v3054
        %v3087 = vadd.f32 %v2229, %v3055
        %v3088 = vadd.f32 %v2230, %v3056
        %v3089 = vadd.f32 %v3057, %v2628
        %v3090 = vadd.f32 %v3058, %v2629
        %v3091 = vadd.f32 %v3059, %v2630
        %v3092 = vadd.f32 %v3060, %v2631
        %v3093 = vadd.f32 %v3061, %v2632
        %v3094 = vadd.f32 %v3062, %v2633
        %v3095 = vadd.f32 %v3063, %v2634
        %v3096 = vadd.f32 %v3064, %v2635
        %v3097 = vadd.f32 %v3065, %v2636
        %v3098 = vadd.f32 %v3066, %v2637
        %v3099 = vadd.f32 %v3067, %v2638
        %v3100 = vadd.f32 %v3068, %v2639
        %v3101 = vadd.f32 %v3069, %v2640
        %v3102 = vadd.f32 %v3070, %v2641
        %v3103 = vadd.f32 %v3071, %v2642
        %v3104 = vadd.f32 %v3072, %v2643
        %v3105 = vadd.f32 %v3073, %v2644
        %v3106 = vadd.f32 %v3074, %v2645
        %v3107 = vadd.f32 %v3075, %v2646
        %v3108 = vadd.f32 %v3076, %v2647
        %v3109 = vadd.f32 %v3077, %v2648
        %v3110 = vadd.f32 %v3078, %v2649
        %v3111 = vadd.f32 %v3079, %v2650
        %v3112 = vadd.f32 %v3080, %v2651
        %v3113 = vadd.f32 %v3081, %v2652
        %v3114 = vadd.f32 %v3082, %v2653
        %v3115 = vadd.f32 %v3083, %v2654
        %v3116 = vadd.f32 %v3084, %v2655
        %v3117 = vadd.f32 %v3085, %v2656
        %v3118 = vadd.f32 %v3086, %v2657
        %v3119 = vadd.f32 %v3087, %v2658
        %v3120 = vadd.f32 %v3088, %v2659
        %3121 = vset.pattern.permute.xlu0 2
        %3122 = vperm.xlu0 %3121, %v593
        %v3123 = vpop.permute.xlu0 %3122
        %3125 = vset.pattern.permute.xlu0 2
        %3126 = vperm.xlu0 %3125, %v594
        %v3127 = vpop.permute.xlu0 %3126
        %3129 = vset.pattern.permute.xlu0 2
        %3130 = vperm.xlu0 %3129, %v595
        %v3131 = vpop.permute.xlu0 %3130
        %3133 = vset.pattern.permute.xlu0 2
        %3134 = vperm.xlu0 %3133, %v596
        %v3135 = vpop.permute.xlu0 %3134
        %3137 = vset.pattern.permute.xlu0 2
        %3138 = vperm.xlu0 %3137, %v597
        %v3139 = vpop.permute.xlu0 %3138
        %3141 = vset.pattern.permute.xlu0 2
        %3142 = vperm.xlu0 %3141, %v598
        %v3143 = vpop.permute.xlu0 %3142
        %3145 = vset.pattern.permute.xlu0 2
        %3146 = vperm.xlu0 %3145, %v599
        %v3147 = vpop.permute.xlu0 %3146
        %3149 = vset.pattern.permute.xlu0 2
        %3150 = vperm.xlu0 %3149, %v600
        %v3151 = vpop.permute.xlu0 %3150
        %v3153 = vmul.f32 %v3089, %v3123
        %v3154 = vmul.f32 %v3090, %v3123
        %v3155 = vmul.f32 %v3091, %v3123
        %v3156 = vmul.f32 %v3092, %v3123
        %v3157 = vmul.f32 %v3093, %v3127
        %v3158 = vmul.f32 %v3094, %v3127
        %v3159 = vmul.f32 %v3095, %v3127
        %v3160 = vmul.f32 %v3096, %v3127
        %v3161 = vmul.f32 %v3097, %v3131
        %v3162 = vmul.f32 %v3098, %v3131
        %v3163 = vmul.f32 %v3099, %v3131
        %v3164 = vmul.f32 %v3100, %v3131
        %v3165 = vmul.f32 %v3101, %v3135
        %v3166 = vmul.f32 %v3102, %v3135
        %v3167 = vmul.f32 %v3103, %v3135
        %v3168 = vmul.f32 %v3104, %v3135
        %v3169 = vmul.f32 %v3105, %v3139
        %v3170 = vmul.f32 %v3106, %v3139
        %v3171 = vmul.f32 %v3107, %v3139
        %v3172 = vmul.f32 %v3108, %v3139
        %v3173 = vmul.f32 %v3109, %v3143
        %v3174 = vmul.f32 %v3110, %v3143
        %v3175 = vmul.f32 %v3111, %v3143
        %v3176 = vmul.f32 %v3112, %v3143
        %v3177 = vmul.f32 %v3113, %v3147
        %v3178 = vmul.f32 %v3114, %v3147
        %v3179 = vmul.f32 %v3115, %v3147
        %v3180 = vmul.f32 %v3116, %v3147
        %v3181 = vmul.f32 %v3117, %v3151
        %v3182 = vmul.f32 %v3118, %v3151
        %v3183 = vmul.f32 %v3119, %v3151
        %v3184 = vmul.f32 %v3120, %v3151
        %3185 = vset.pattern.permute.xlu0 3
        %3186 = vperm.xlu0 %3185, %v593
        %v3187 = vpop.permute.xlu0 %3186
        %3189 = vset.pattern.permute.xlu0 3
        %3190 = vperm.xlu0 %3189, %v594
        %v3191 = vpop.permute.xlu0 %3190
        %3193 = vset.pattern.permute.xlu0 3
        %3194 = vperm.xlu0 %3193, %v595
        %v3195 = vpop.permute.xlu0 %3194
        %3197 = vset.pattern.permute.xlu0 3
        %3198 = vperm.xlu0 %3197, %v596
        %v3199 = vpop.permute.xlu0 %3198
        %3201 = vset.pattern.permute.xlu0 3
        %3202 = vperm.xlu0 %3201, %v597
        %v3203 = vpop.permute.xlu0 %3202
        %3205 = vset.pattern.permute.xlu0 3
        %3206 = vperm.xlu0 %3205, %v598
        %v3207 = vpop.permute.xlu0 %3206
        %3209 = vset.pattern.permute.xlu0 3
        %3210 = vperm.xlu0 %3209, %v599
        %v3211 = vpop.permute.xlu0 %3210
        %3213 = vset.pattern.permute.xlu0 3
        %3214 = vperm.xlu0 %3213, %v600
        %v3215 = vpop.permute.xlu0 %3214
        %v3217 = vadd.f32 %v3153, %v3187
        %v3218 = vadd.f32 %v3154, %v3187
        %v3219 = vadd.f32 %v3155, %v3187
        %v3220 = vadd.f32 %v3156, %v3187
        %v3221 = vadd.f32 %v3157, %v3191
        %v3222 = vadd.f32 %v3158, %v3191
        %v3223 = vadd.f32 %v3159, %v3191
        %v3224 = vadd.f32 %v3160, %v3191
        %v3225 = vadd.f32 %v3161, %v3195
        %v3226 = vadd.f32 %v3162, %v3195
        %v3227 = vadd.f32 %v3163, %v3195
        %v3228 = vadd.f32 %v3164, %v3195
        %v3229 = vadd.f32 %v3165, %v3199
        %v3230 = vadd.f32 %v3166, %v3199
        %v3231 = vadd.f32 %v3167, %v3199
        %v3232 = vadd.f32 %v3168, %v3199
        %v3233 = vadd.f32 %v3169, %v3203
        %v3234 = vadd.f32 %v3170, %v3203
        %v3235 = vadd.f32 %v3171, %v3203
        %v3236 = vadd.f32 %v3172, %v3203
        %v3237 = vadd.f32 %v3173, %v3207
        %v3238 = vadd.f32 %v3174, %v3207
        %v3239 = vadd.f32 %v3175, %v3207
        %v3240 = vadd.f32 %v3176, %v3207
        %v3241 = vadd.f32 %v3177, %v3211
        %v3242 = vadd.f32 %v3178, %v3211
        %v3243 = vadd.f32 %v3179, %v3211
        %v3244 = vadd.f32 %v3180, %v3211
        %v3245 = vadd.f32 %v3181, %v3215
        %v3246 = vadd.f32 %v3182, %v3215
        %v3247 = vadd.f32 %v3183, %v3215
        %v3248 = vadd.f32 %v3184, %v3215
        %v3249 = vsub.f32 0.0, %v3217
        %v3250 = vsub.f32 0.0, %v3218
        %v3251 = vsub.f32 0.0, %v3219
        %v3252 = vsub.f32 0.0, %v3220
        %v3253 = vsub.f32 0.0, %v3221
        %v3254 = vsub.f32 0.0, %v3222
        %v3255 = vsub.f32 0.0, %v3223
        %v3256 = vsub.f32 0.0, %v3224
        %v3257 = vsub.f32 0.0, %v3225
        %v3258 = vsub.f32 0.0, %v3226
        %v3259 = vsub.f32 0.0, %v3227
        %v3260 = vsub.f32 0.0, %v3228
        %v3261 = vsub.f32 0.0, %v3229
        %v3262 = vsub.f32 0.0, %v3230
        %v3263 = vsub.f32 0.0, %v3231
        %v3264 = vsub.f32 0.0, %v3232
        %v3265 = vsub.f32 0.0, %v3233
        %v3266 = vsub.f32 0.0, %v3234
        %v3267 = vsub.f32 0.0, %v3235
        %v3268 = vsub.f32 0.0, %v3236
        %v3269 = vsub.f32 0.0, %v3237
        %v3270 = vsub.f32 0.0, %v3238
        %v3271 = vsub.f32 0.0, %v3239
        %v3272 = vsub.f32 0.0, %v3240
        %v3273 = vsub.f32 0.0, %v3241
        %v3274 = vsub.f32 0.0, %v3242
        %v3275 = vsub.f32 0.0, %v3243
        %v3276 = vsub.f32 0.0, %v3244
        %v3277 = vsub.f32 0.0, %v3245
        %v3278 = vsub.f32 0.0, %v3246
        %v3279 = vsub.f32 0.0, %v3247
        %v3280 = vsub.f32 0.0, %v3248
        %v3281 = vmul.f32 %v3249, 1.442695
        %v3282 = vpow.pop %v3281
        %v3283 = vmul.f32 %v3250, 1.442695
        %v3284 = vpow.pop %v3283
        %v3285 = vmul.f32 %v3251, 1.442695
        %v3286 = vpow.pop %v3285
        %v3287 = vmul.f32 %v3252, 1.442695
        %v3288 = vpow.pop %v3287
        %v3289 = vmul.f32 %v3253, 1.442695
        %v3290 = vpow.pop %v3289
        %v3291 = vmul.f32 %v3254, 1.442695
        %v3292 = vpow.pop %v3291
        %v3293 = vmul.f32 %v3255, 1.442695
        %v3294 = vpow.pop %v3293
        %v3295 = vmul.f32 %v3256, 1.442695
        %v3296 = vpow.pop %v3295
        %v3297 = vmul.f32 %v3257, 1.442695
        %v3298 = vpow.pop %v3297
        %v3299 = vmul.f32 %v3258, 1.442695
        %v3300 = vpow.pop %v3299
        %v3301 = vmul.f32 %v3259, 1.442695
        %v3302 = vpow.pop %v3301
        %v3303 = vmul.f32 %v3260, 1.442695
        %v3304 = vpow.pop %v3303
        %v3305 = vmul.f32 %v3261, 1.442695
        %v3306 = vpow.pop %v3305
        %v3307 = vmul.f32 %v3262, 1.442695
        %v3308 = vpow.pop %v3307
        %v3309 = vmul.f32 %v3263, 1.442695
        %v3310 = vpow.pop %v3309
        %v3311 = vmul.f32 %v3264, 1.442695
        %v3312 = vpow.pop %v3311
        %v3313 = vmul.f32 %v3265, 1.442695
        %v3314 = vpow.pop %v3313
        %v3315 = vmul.f32 %v3266, 1.442695
        %v3316 = vpow.pop %v3315
        %v3317 = vmul.f32 %v3267, 1.442695
        %v3318 = vpow.pop %v3317
        %v3319 = vmul.f32 %v3268, 1.442695
        %v3320 = vpow.pop %v3319
        %v3321 = vmul.f32 %v3269, 1.442695
        %v3322 = vpow.pop %v3321
        %v3323 = vmul.f32 %v3270, 1.442695
        %v3324 = vpow.pop %v3323
        %v3325 = vmul.f32 %v3271, 1.442695
        %v3326 = vpow.pop %v3325
        %v3327 = vmul.f32 %v3272, 1.442695
        %v3328 = vpow.pop %v3327
        %v3329 = vmul.f32 %v3273, 1.442695
        %v3330 = vpow.pop %v3329
        %v3331 = vmul.f32 %v3274, 1.442695
        %v3332 = vpow.pop %v3331
        %v3333 = vmul.f32 %v3275, 1.442695
        %v3334 = vpow.pop %v3333
        %v3335 = vmul.f32 %v3276, 1.442695
        %v3336 = vpow.pop %v3335
        %v3337 = vmul.f32 %v3277, 1.442695
        %v3338 = vpow.pop %v3337
        %v3339 = vmul.f32 %v3278, 1.442695
        %v3340 = vpow.pop %v3339
        %v3341 = vmul.f32 %v3279, 1.442695
        %v3342 = vpow.pop %v3341
        %v3343 = vmul.f32 %v3280, 1.442695
        %v3344 = vpow.pop %v3343
        %v3345 = vadd.f32 %v3282, 1.0
        %v3346 = vadd.f32 %v3284, 1.0
        %v3347 = vadd.f32 %v3286, 1.0
        %v3348 = vadd.f32 %v3288, 1.0
        %v3349 = vadd.f32 %v3290, 1.0
        %v3350 = vadd.f32 %v3292, 1.0
        %v3351 = vadd.f32 %v3294, 1.0
        %v3352 = vadd.f32 %v3296, 1.0
        %v3353 = vadd.f32 %v3298, 1.0
        %v3354 = vadd.f32 %v3300, 1.0
        %v3355 = vadd.f32 %v3302, 1.0
        %v3356 = vadd.f32 %v3304, 1.0
        %v3357 = vadd.f32 %v3306, 1.0
        %v3358 = vadd.f32 %v3308, 1.0
        %v3359 = vadd.f32 %v3310, 1.0
        %v3360 = vadd.f32 %v3312, 1.0
        %v3361 = vadd.f32 %v3314, 1.0
        %v3362 = vadd.f32 %v3316, 1.0
        %v3363 = vadd.f32 %v3318, 1.0
        %v3364 = vadd.f32 %v3320, 1.0
        %v3365 = vadd.f32 %v3322, 1.0
        %v3366 = vadd.f32 %v3324, 1.0
        %v3367 = vadd.f32 %v3326, 1.0
        %v3368 = vadd.f32 %v3328, 1.0
        %v3369 = vadd.f32 %v3330, 1.0
        %v3370 = vadd.f32 %v3332, 1.0
        %v3371 = vadd.f32 %v3334, 1.0
        %v3372 = vadd.f32 %v3336, 1.0
        %v3373 = vadd.f32 %v3338, 1.0
        %v3374 = vadd.f32 %v3340, 1.0
        %v3375 = vadd.f32 %v3342, 1.0
        %v3376 = vadd.f32 %v3344, 1.0
        %v3377 = vrcp.pop %v3345
        %v3378 = vrcp.pop %v3346
        %v3379 = vrcp.pop %v3347
        %v3380 = vrcp.pop %v3348
        %v3381 = vrcp.pop %v3349
        %v3382 = vrcp.pop %v3350
        %v3383 = vrcp.pop %v3351
        %v3384 = vrcp.pop %v3352
        %v3385 = vrcp.pop %v3353
        %v3386 = vrcp.pop %v3354
        %v3387 = vrcp.pop %v3355
        %v3388 = vrcp.pop %v3356
        %v3389 = vrcp.pop %v3357
        %v3390 = vrcp.pop %v3358
        %v3391 = vrcp.pop %v3359
        %v3392 = vrcp.pop %v3360
        %v3393 = vrcp.pop %v3361
        %v3394 = vrcp.pop %v3362
        %v3395 = vrcp.pop %v3363
        %v3396 = vrcp.pop %v3364
        %v3397 = vrcp.pop %v3365
        %v3398 = vrcp.pop %v3366
        %v3399 = vrcp.pop %v3367
        %v3400 = vrcp.pop %v3368
        %v3401 = vrcp.pop %v3369
        %v3402 = vrcp.pop %v3370
        %v3403 = vrcp.pop %v3371
        %v3404 = vrcp.pop %v3372
        %v3405 = vrcp.pop %v3373
        %v3406 = vrcp.pop %v3374
        %v3407 = vrcp.pop %v3375
        %v3408 = vrcp.pop %v3376
        %v3409 = vmul.f32 %v3217, %v3377
        %v3410 = vmul.f32 %v3218, %v3378
        %v3411 = vmul.f32 %v3219, %v3379
        %v3412 = vmul.f32 %v3220, %v3380
        %v3413 = vmul.f32 %v3221, %v3381
        %v3414 = vmul.f32 %v3222, %v3382
        %v3415 = vmul.f32 %v3223, %v3383
        %v3416 = vmul.f32 %v3224, %v3384
        %v3417 = vmul.f32 %v3225, %v3385
        %v3418 = vmul.f32 %v3226, %v3386
        %v3419 = vmul.f32 %v3227, %v3387
        %v3420 = vmul.f32 %v3228, %v3388
        %v3421 = vmul.f32 %v3229, %v3389
        %v3422 = vmul.f32 %v3230, %v3390
        %v3423 = vmul.f32 %v3231, %v3391
        %v3424 = vmul.f32 %v3232, %v3392
        %v3425 = vmul.f32 %v3233, %v3393
        %v3426 = vmul.f32 %v3234, %v3394
        %v3427 = vmul.f32 %v3235, %v3395
        %v3428 = vmul.f32 %v3236, %v3396
        %v3429 = vmul.f32 %v3237, %v3397
        %v3430 = vmul.f32 %v3238, %v3398
        %v3431 = vmul.f32 %v3239, %v3399
        %v3432 = vmul.f32 %v3240, %v3400
        %v3433 = vmul.f32 %v3241, %v3401
        %v3434 = vmul.f32 %v3242, %v3402
        %v3435 = vmul.f32 %v3243, %v3403
        %v3436 = vmul.f32 %v3244, %v3404
        %v3437 = vmul.f32 %v3245, %v3405
        %v3438 = vmul.f32 %v3246, %v3406
        %v3439 = vmul.f32 %v3247, %v3407
        %v3440 = vmul.f32 %v3248, %v3408
        %v3441 = vld [vmem:[%s1] sm:$0xff]
        %v3442 = vld [vmem:[%s1 + $0x8] sm:$0xff]
        %v3445 = vcombine.high %v3441, %v3441
        %v3446 = vcombine.high %v3442, %v3442
        %3449 = vmatprep.subr.mxu0 %v3445
        %3450 = vmatpush1.xpose.msra.mxu0 %v3441
        %3451 = vmatprep.subr.mxu0 0.0
        %3452 = vmatpush1.xpose.msra.mxu0 0.0
        %3453 = vmatprep.subr.mxu0 0.0
        %3454 = vmatpush1.xpose.msra.mxu0 0.0
        %3455 = vmatprep.subr.mxu0 0.0
        %3456 = vmatpush1.xpose.msra.mxu0 0.0
        %3457 = vmatprep.subr.mxu0 0.0
        %3458 = vmatpush1.xpose.msra.mxu0 0.0
        %3459 = vmatprep.subr.mxu0 0.0
        %3460 = vmatpush1.xpose.msra.mxu0 0.0
        %3461 = vmatprep.subr.mxu0 0.0
        %3462 = vmatpush1.xpose.msra.mxu0 0.0
        %3463 = vmatprep.subr.mxu0 0.0
        %3464 = vmatpush1.xpose.msra.mxu0 0.0
        %3465 = vmatprep.subr.mxu0 0.0
        %3466 = vmatpush1.xpose.msra.mxu0 0.0
        %3467 = vmatprep.subr.mxu0 0.0
        %3468 = vmatpush1.xpose.msra.mxu0 0.0
        %3469 = vmatprep.subr.mxu0 0.0
        %3470 = vmatpush1.xpose.msra.mxu0 0.0
        %3471 = vmatprep.subr.mxu0 0.0
        %3472 = vmatpush1.xpose.msra.mxu0 0.0
        %3473 = vmatprep.subr.mxu0 0.0
        %3474 = vmatpush1.xpose.msra.mxu0 0.0
        %3475 = vmatprep.subr.mxu0 0.0
        %3476 = vmatpush1.xpose.msra.mxu0 0.0
        %3477 = vmatprep.subr.mxu0 0.0
        %3478 = vmatpush1.xpose.msra.mxu0 0.0
        %3479 = vmatprep.subr.mxu0 0.0
        %3480 = vmatpush1.xpose.msra.mxu0 0.0
        %3481 = vmatprep.subr.mxu0 0.0
        %3482 = vmatpush1.xpose.msra.mxu0 0.0
        %3483 = vmatprep.subr.mxu0 0.0
        %3484 = vmatpush1.xpose.msra.mxu0 0.0
        %3485 = vmatprep.subr.mxu0 0.0
        %3486 = vmatpush1.xpose.msra.mxu0 0.0
        %3487 = vmatprep.subr.mxu0 0.0
        %3488 = vmatpush1.xpose.msra.mxu0 0.0
        %3489 = vmatprep.subr.mxu0 0.0
        %3490 = vmatpush1.xpose.msra.mxu0 0.0
        %3491 = vmatprep.subr.mxu0 0.0
        %3492 = vmatpush1.xpose.msra.mxu0 0.0
        %3493 = vmatprep.subr.mxu0 0.0
        %3494 = vmatpush1.xpose.msra.mxu0 0.0
        %3495 = vmatprep.subr.mxu0 0.0
        %3496 = vmatpush1.xpose.msra.mxu0 0.0
        %3497 = vmatprep.subr.mxu0 0.0
        %3498 = vmatpush1.xpose.msra.mxu0 0.0
        %3499 = vmatprep.subr.mxu0 0.0
        %3500 = vmatpush1.xpose.msra.mxu0 0.0
        %3501 = vmatprep.subr.mxu0 0.0
        %3502 = vmatpush1.xpose.msra.mxu0 0.0
        %3503 = vmatprep.subr.mxu0 0.0
        %3504 = vmatpush1.xpose.msra.mxu0 0.0
        %3505 = vmatprep.subr.mxu0 0.0
        %3506 = vmatpush1.xpose.msra.mxu0 0.0
        %3507 = vmatprep.subr.mxu0 0.0
        %3508 = vmatpush1.xpose.msra.mxu0 0.0
        %3509 = vmatprep.subr.mxu0 0.0
        %3510 = vmatpush1.xpose.msra.mxu0 0.0
        %3511 = vmatprep.subr.mxu0 0.0
        %3512 = vmatpush1.xpose.msra.mxu0 0.0
        %3513 = vmatprep.mubr.f32.mxu0 %v3410
        %3514 = vmatmul.mubr.f32.gmra.mrb[0].mxu0 %v3409
        %v3515 = vpop.f32.mrb[0].mxu0
        %v3516 = vadd.f32 0.0, %v3515
        %v3517 = vpop.f32.mrb[0].mxu0
        %3518 = vmatprep.mubr.f32.mxu0 %v3414
        %3519 = vmatmul.mubr.f32.gmra.mrb[0].mxu0 %v3413
        %v3520 = vpop.f32.mrb[0].mxu0
        %v3521 = vadd.f32 0.0, %v3520
        %v3522 = vpop.f32.mrb[0].mxu0
        %3523 = vmatprep.mubr.f32.mxu0 %v3418
        %3524 = vmatmul.mubr.f32.gmra.mrb[0].mxu0 %v3417
        %v3525 = vpop.f32.mrb[0].mxu0
        %v3526 = vadd.f32 0.0, %v3525
        %v3527 = vpop.f32.mrb[0].mxu0
        %3528 = vmatprep.mubr.f32.mxu0 %v3422
        %3529 = vmatmul.mubr.f32.gmra.mrb[0].mxu0 %v3421
        %v3530 = vpop.f32.mrb[0].mxu0
        %v3531 = vadd.f32 0.0, %v3530
        %v3532 = vpop.f32.mrb[0].mxu0
        %3533 = vmatprep.mubr.f32.mxu0 %v3426
        %3534 = vmatmul.mubr.f32.gmra.mrb[0].mxu0 %v3425
        %v3535 = vpop.f32.mrb[0].mxu0
        %v3536 = vadd.f32 0.0, %v3535
        %v3537 = vpop.f32.mrb[0].mxu0
        %3538 = vmatprep.mubr.f32.mxu0 %v3430
        %3539 = vmatmul.mubr.f32.gmra.mrb[0].mxu0 %v3429
        %v3540 = vpop.f32.mrb[0].mxu0
        %v3541 = vadd.f32 0.0, %v3540
        %v3542 = vpop.f32.mrb[0].mxu0
        %3543 = vmatprep.mubr.f32.mxu0 %v3434
        %3544 = vmatmul.mubr.f32.gmra.mrb[0].mxu0 %v3433
        %v3545 = vpop.f32.mrb[0].mxu0
        %v3546 = vadd.f32 0.0, %v3545
        %v3547 = vpop.f32.mrb[0].mxu0
        %3548 = vmatprep.mubr.f32.mxu0 %v3438
        %3549 = vmatmul.mubr.f32.gmra.mrb[0].mxu0 %v3437
        %v3550 = vpop.f32.mrb[0].mxu0
        %v3551 = vadd.f32 0.0, %v3550
        %v3552 = vpop.f32.mrb[0].mxu0
        %3553 = vdwg.mxu0
        %3554 = vmatprep.subr.mxu0 %v3446
        %3555 = vmatpush1.xpose.msra.mxu0 %v3442
        %3556 = vmatprep.subr.mxu0 0.0
        %3557 = vmatpush1.xpose.msra.mxu0 0.0
        %3558 = vmatprep.subr.mxu0 0.0
        %3559 = vmatpush1.xpose.msra.mxu0 0.0
        %3560 = vmatprep.subr.mxu0 0.0
        %3561 = vmatpush1.xpose.msra.mxu0 0.0
        %3562 = vmatprep.subr.mxu0 0.0
        %3563 = vmatpush1.xpose.msra.mxu0 0.0
        %3564 = vmatprep.subr.mxu0 0.0
        %3565 = vmatpush1.xpose.msra.mxu0 0.0
        %3566 = vmatprep.subr.mxu0 0.0
        %3567 = vmatpush1.xpose.msra.mxu0 0.0
        %3568 = vmatprep.subr.mxu0 0.0
        %3569 = vmatpush1.xpose.msra.mxu0 0.0
        %3570 = vmatprep.subr.mxu0 0.0
        %3571 = vmatpush1.xpose.msra.mxu0 0.0
        %3572 = vmatprep.subr.mxu0 0.0
        %3573 = vmatpush1.xpose.msra.mxu0 0.0
        %3574 = vmatprep.subr.mxu0 0.0
        %3575 = vmatpush1.xpose.msra.mxu0 0.0
        %3576 = vmatprep.subr.mxu0 0.0
        %3577 = vmatpush1.xpose.msra.mxu0 0.0
        %3578 = vmatprep.subr.mxu0 0.0
        %3579 = vmatpush1.xpose.msra.mxu0 0.0
        %3580 = vmatprep.subr.mxu0 0.0
        %3581 = vmatpush1.xpose.msra.mxu0 0.0
        %3582 = vmatprep.subr.mxu0 0.0
        %3583 = vmatpush1.xpose.msra.mxu0 0.0
        %3584 = vmatprep.subr.mxu0 0.0
        %3585 = vmatpush1.xpose.msra.mxu0 0.0
        %3586 = vmatprep.subr.mxu0 0.0
        %3587 = vmatpush1.xpose.msra.mxu0 0.0
        %3588 = vmatprep.subr.mxu0 0.0
        %3589 = vmatpush1.xpose.msra.mxu0 0.0
        %3590 = vmatprep.subr.mxu0 0.0
        %3591 = vmatpush1.xpose.msra.mxu0 0.0
        %3592 = vmatprep.subr.mxu0 0.0
        %3593 = vmatpush1.xpose.msra.mxu0 0.0
        %3594 = vmatprep.subr.mxu0 0.0
        %3595 = vmatpush1.xpose.msra.mxu0 0.0
        %3596 = vmatprep.subr.mxu0 0.0
        %3597 = vmatpush1.xpose.msra.mxu0 0.0
        %3598 = vmatprep.subr.mxu0 0.0
        %3599 = vmatpush1.xpose.msra.mxu0 0.0
        %3600 = vmatprep.subr.mxu0 0.0
        %3601 = vmatpush1.xpose.msra.mxu0 0.0
        %3602 = vmatprep.subr.mxu0 0.0
        %3603 = vmatpush1.xpose.msra.mxu0 0.0
        %3604 = vmatprep.subr.mxu0 0.0
        %3605 = vmatpush1.xpose.msra.mxu0 0.0
        %3606 = vmatprep.subr.mxu0 0.0
        %3607 = vmatpush1.xpose.msra.mxu0 0.0
        %3608 = vmatprep.subr.mxu0 0.0
        %3609 = vmatpush1.xpose.msra.mxu0 0.0
        %3610 = vmatprep.subr.mxu0 0.0
        %3611 = vmatpush1.xpose.msra.mxu0 0.0
        %3612 = vmatprep.subr.mxu0 0.0
        %3613 = vmatpush1.xpose.msra.mxu0 0.0
        %3614 = vmatprep.subr.mxu0 0.0
        %3615 = vmatpush1.xpose.msra.mxu0 0.0
        %3616 = vmatprep.subr.mxu0 0.0
        %3617 = vmatpush1.xpose.msra.mxu0 0.0
        %3618 = vmatprep.mubr.f32.mxu0 %v3412
        %3619 = vmatmul.mubr.f32.gmra.mrb[0].mxu0 %v3411
        %v3620 = vpop.f32.mrb[0].mxu0
        %v3621 = vadd.f32 %v3516, %v3620
        %v3622 = vpop.f32.mrb[0].mxu0
        %3623 = vmatprep.mubr.f32.mxu0 %v3416
        %3624 = vmatmul.mubr.f32.gmra.mrb[0].mxu0 %v3415
        %v3625 = vpop.f32.mrb[0].mxu0
        %v3626 = vadd.f32 %v3521, %v3625
        %v3627 = vpop.f32.mrb[0].mxu0
        %3628 = vmatprep.mubr.f32.mxu0 %v3420
        %3629 = vmatmul.mubr.f32.gmra.mrb[0].mxu0 %v3419
        %v3630 = vpop.f32.mrb[0].mxu0
        %v3631 = vadd.f32 %v3526, %v3630
        %v3632 = vpop.f32.mrb[0].mxu0
        %3633 = vmatprep.mubr.f32.mxu0 %v3424
        %3634 = vmatmul.mubr.f32.gmra.mrb[0].mxu0 %v3423
        %v3635 = vpop.f32.mrb[0].mxu0
        %v3636 = vadd.f32 %v3531, %v3635
        %v3637 = vpop.f32.mrb[0].mxu0
        %3638 = vmatprep.mubr.f32.mxu0 %v3428
        %3639 = vmatmul.mubr.f32.gmra.mrb[0].mxu0 %v3427
        %v3640 = vpop.f32.mrb[0].mxu0
        %v3641 = vadd.f32 %v3536, %v3640
        %v3642 = vpop.f32.mrb[0].mxu0
        %3643 = vmatprep.mubr.f32.mxu0 %v3432
        %3644 = vmatmul.mubr.f32.gmra.mrb[0].mxu0 %v3431
        %v3645 = vpop.f32.mrb[0].mxu0
        %v3646 = vadd.f32 %v3541, %v3645
        %v3647 = vpop.f32.mrb[0].mxu0
        %3648 = vmatprep.mubr.f32.mxu0 %v3436
        %3649 = vmatmul.mubr.f32.gmra.mrb[0].mxu0 %v3435
        %v3650 = vpop.f32.mrb[0].mxu0
        %v3651 = vadd.f32 %v3546, %v3650
        %v3652 = vpop.f32.mrb[0].mxu0
        %3653 = vmatprep.mubr.f32.mxu0 %v3440
        %3654 = vmatmul.mubr.f32.gmra.mrb[0].mxu0 %v3439
        %v3655 = vpop.f32.mrb[0].mxu0
        %v3656 = vadd.f32 %v3551, %v3655
        %v3657 = vpop.f32.mrb[0].mxu0
        %3658 = vdwg.mxu0
        %v3659 = vmul.f32 %v3621, 0.0078125
        %v3660 = vmul.f32 %v3626, 0.0078125
        %v3661 = vmul.f32 %v3631, 0.0078125
        %v3662 = vmul.f32 %v3636, 0.0078125
        %v3663 = vmul.f32 %v3641, 0.0078125
        %v3664 = vmul.f32 %v3646, 0.0078125
        %v3665 = vmul.f32 %v3651, 0.0078125
        %v3666 = vmul.f32 %v3656, 0.0078125
        %v3667 = vld [vmem:[%s5] sm:$0xff]
        %v3668 = vld [vmem:[%s5 + $0x8] sm:$0xff]
        %v3669 = vld [vmem:[%s6] sm:$0xff]
        %v3670 = vld [vmem:[%s6 + $0x8] sm:$0xff]
        %3672 = vset.pattern.permute.xlu0 0
        %3673 = vperm.xlu0 %3672, %v3669
        %v3674 = vpop.permute.xlu0 %3673
        %3677 = vset.pattern.permute.xlu0 0
        %3678 = vperm.xlu0 %3677, %v3670
        %v3679 = vpop.permute.xlu0 %3678
        %vm3681 = vcmask 523264
        %v3683 = vsel %vm3681, %v3667, 0
        %v3686 = vsel %vm3681, %v3668, 0
        %3688 = vmatprep.subr.mxu0 0.0
        %3689 = vmatpush1.msra.mxu0 %v3659
        %3690 = vmatprep.subr.mxu0 0.0
        %3691 = vmatpush1.msra.mxu0 %v3660
        %3692 = vmatprep.subr.mxu0 0.0
        %3693 = vmatpush1.msra.mxu0 %v3661
        %3694 = vmatprep.subr.mxu0 0.0
        %3695 = vmatpush1.msra.mxu0 %v3662
        %3696 = vmatprep.subr.mxu0 0.0
        %3697 = vmatpush1.msra.mxu0 %v3663
        %3698 = vmatprep.subr.mxu0 0.0
        %3699 = vmatpush1.msra.mxu0 %v3664
        %3700 = vmatprep.subr.mxu0 0.0
        %3701 = vmatpush1.msra.mxu0 %v3665
        %3702 = vmatprep.subr.mxu0 0.0
        %3703 = vmatpush1.msra.mxu0 %v3666
        %3704 = vmatprep.subr.mxu0 0.0
        %3705 = vmatpush1.msra.mxu0 0.0
        %3706 = vmatprep.subr.mxu0 0.0
        %3707 = vmatpush1.msra.mxu0 0.0
        %3708 = vmatprep.subr.mxu0 0.0
        %3709 = vmatpush1.msra.mxu0 0.0
        %3710 = vmatprep.subr.mxu0 0.0
        %3711 = vmatpush1.msra.mxu0 0.0
        %3712 = vmatprep.subr.mxu0 0.0
        %3713 = vmatpush1.msra.mxu0 0.0
        %3714 = vmatprep.subr.mxu0 0.0
        %3715 = vmatpush1.msra.mxu0 0.0
        %3716 = vmatprep.subr.mxu0 0.0
        %3717 = vmatpush1.msra.mxu0 0.0
        %3718 = vmatprep.subr.mxu0 0.0
        %3719 = vmatpush1.msra.mxu0 0.0
        %3720 = vmatprep.subr.mxu0 0.0
        %3721 = vmatpush1.msra.mxu0 0.0
        %3722 = vmatprep.subr.mxu0 0.0
        %3723 = vmatpush1.msra.mxu0 0.0
        %3724 = vmatprep.subr.mxu0 0.0
        %3725 = vmatpush1.msra.mxu0 0.0
        %3726 = vmatprep.subr.mxu0 0.0
        %3727 = vmatpush1.msra.mxu0 0.0
        %3728 = vmatprep.subr.mxu0 0.0
        %3729 = vmatpush1.msra.mxu0 0.0
        %3730 = vmatprep.subr.mxu0 0.0
        %3731 = vmatpush1.msra.mxu0 0.0
        %3732 = vmatprep.subr.mxu0 0.0
        %3733 = vmatpush1.msra.mxu0 0.0
        %3734 = vmatprep.subr.mxu0 0.0
        %3735 = vmatpush1.msra.mxu0 0.0
        %3736 = vmatprep.subr.mxu0 0.0
        %3737 = vmatpush1.msra.mxu0 0.0
        %3738 = vmatprep.subr.mxu0 0.0
        %3739 = vmatpush1.msra.mxu0 0.0
        %3740 = vmatprep.subr.mxu0 0.0
        %3741 = vmatpush1.msra.mxu0 0.0
        %3742 = vmatprep.subr.mxu0 0.0
        %3743 = vmatpush1.msra.mxu0 0.0
        %3744 = vmatprep.subr.mxu0 0.0
        %3745 = vmatpush1.msra.mxu0 0.0
        %3746 = vmatprep.subr.mxu0 0.0
        %3747 = vmatpush1.msra.mxu0 0.0
        %3748 = vmatprep.subr.mxu0 0.0
        %3749 = vmatpush1.msra.mxu0 0.0
        %3750 = vmatprep.subr.mxu0 0.0
        %3751 = vmatpush1.msra.mxu0 0.0
        %3752 = vmatprep.mubr.f32.mxu0 0.0
        %3753 = vmatmul.mubr.f32.gmra.mrb[0].mxu0 %v3683
        %v3754 = vpop.f32.mrb[0].mxu0
        %v3755 = vadd.f32 %v3674, %v3754
        %v3756 = vpop.f32.mrb[0].mxu0
        %3757 = vmatprep.mubr.f32.mxu0 0.0
        %3758 = vmatmul.mubr.f32.gmra.mrb[0].mxu0 %v3686
        %v3759 = vpop.f32.mrb[0].mxu0
        %v3760 = vadd.f32 %v3679, %v3759
        %v3761 = vpop.f32.mrb[0].mxu0
        %3762 = vdwg.mxu0
        %v3763 = vsub.f32 0.0, %v3755
        %v3764 = vsub.f32 0.0, %v3760
        %v3765 = vmul.f32 %v3763, 1.442695
        %v3766 = vpow.pop %v3765
        %v3767 = vmul.f32 %v3764, 1.442695
        %v3768 = vpow.pop %v3767
        %v3769 = vadd.f32 %v3766, 1.0
        %v3770 = vadd.f32 %v3768, 1.0
        %v3771 = vrcp.pop %v3769
        %v3772 = vrcp.pop %v3770
        %v3773 = vmul.f32 %v3755, %v3771
        %v3774 = vmul.f32 %v3760, %v3772
        %v3775 = vld [vmem:[%s7] sm:$0xff]
        %v3776 = vld [vmem:[%s7 + $0x8] sm:$0xff]
        %v3777 = vld [vmem:[%s7 + $0x10] sm:$0xff]
        %v3778 = vld [vmem:[%s7 + $0x18] sm:$0xff]
        %v3779 = vld [vmem:[%s7 + $0x20] sm:$0xff]
        %v3780 = vld [vmem:[%s7 + $0x28] sm:$0xff]
        %v3781 = vld [vmem:[%s7 + $0x30] sm:$0xff]
        %v3782 = vld [vmem:[%s7 + $0x38] sm:$0xff]
        %v3783 = vld [vmem:[%s4] sm:$0xff]
        %v3784 = vld [vmem:[%s4 + $0x8] sm:$0xff]
        %v3785 = vld [vmem:[%s4 + $0x10] sm:$0xff]
        %v3786 = vld [vmem:[%s4 + $0x18] sm:$0xff]
        %v3787 = vld [vmem:[%s4 + $0x20] sm:$0xff]
        %v3788 = vld [vmem:[%s4 + $0x28] sm:$0xff]
        %v3789 = vld [vmem:[%s4 + $0x30] sm:$0xff]
        %v3790 = vld [vmem:[%s4 + $0x38] sm:$0xff]
        %3792 = vset.pattern.permute.xlu0 4
        %3793 = vperm.xlu0 %3792, %v3783
        %v3794 = vpop.permute.xlu0 %3793
        %3797 = vset.pattern.permute.xlu0 4
        %3798 = vperm.xlu0 %3797, %v3784
        %v3799 = vpop.permute.xlu0 %3798
        %3802 = vset.pattern.permute.xlu0 4
        %3803 = vperm.xlu0 %3802, %v3785
        %v3804 = vpop.permute.xlu0 %3803
        %3807 = vset.pattern.permute.xlu0 4
        %3808 = vperm.xlu0 %3807, %v3786
        %v3809 = vpop.permute.xlu0 %3808
        %3812 = vset.pattern.permute.xlu0 4
        %3813 = vperm.xlu0 %3812, %v3787
        %v3814 = vpop.permute.xlu0 %3813
        %3817 = vset.pattern.permute.xlu0 4
        %3818 = vperm.xlu0 %3817, %v3788
        %v3819 = vpop.permute.xlu0 %3818
        %3822 = vset.pattern.permute.xlu0 4
        %3823 = vperm.xlu0 %3822, %v3789
        %v3824 = vpop.permute.xlu0 %3823
        %3827 = vset.pattern.permute.xlu0 4
        %3828 = vperm.xlu0 %3827, %v3790
        %v3829 = vpop.permute.xlu0 %3828
        %vm3831 = vcmask 130048
        %v3833 = vsel %vm3831, %v3775, 0
        %v3836 = vsel %vm3831, %v3776, 0
        %v3839 = vsel %vm3831, %v3777, 0
        %v3842 = vsel %vm3831, %v3778, 0
        %v3845 = vsel %vm3831, %v3779, 0
        %v3848 = vsel %vm3831, %v3780, 0
        %v3851 = vsel %vm3831, %v3781, 0
        %v3854 = vsel %vm3831, %v3782, 0
        %3856 = vmatprep.subr.mxu0 0.0
        %3857 = vmatpush1.msra.mxu0 %v3773
        %3858 = vmatprep.subr.mxu0 0.0
        %3859 = vmatpush1.msra.mxu0 %v3774
        %3860 = vmatprep.subr.mxu0 0.0
        %3861 = vmatpush1.msra.mxu0 0.0
        %3862 = vmatprep.subr.mxu0 0.0
        %3863 = vmatpush1.msra.mxu0 0.0
        %3864 = vmatprep.subr.mxu0 0.0
        %3865 = vmatpush1.msra.mxu0 0.0
        %3866 = vmatprep.subr.mxu0 0.0
        %3867 = vmatpush1.msra.mxu0 0.0
        %3868 = vmatprep.subr.mxu0 0.0
        %3869 = vmatpush1.msra.mxu0 0.0
        %3870 = vmatprep.subr.mxu0 0.0
        %3871 = vmatpush1.msra.mxu0 0.0
        %3872 = vmatprep.subr.mxu0 0.0
        %3873 = vmatpush1.msra.mxu0 0.0
        %3874 = vmatprep.subr.mxu0 0.0
        %3875 = vmatpush1.msra.mxu0 0.0
        %3876 = vmatprep.subr.mxu0 0.0
        %3877 = vmatpush1.msra.mxu0 0.0
        %3878 = vmatprep.subr.mxu0 0.0
        %3879 = vmatpush1.msra.mxu0 0.0
        %3880 = vmatprep.subr.mxu0 0.0
        %3881 = vmatpush1.msra.mxu0 0.0
        %3882 = vmatprep.subr.mxu0 0.0
        %3883 = vmatpush1.msra.mxu0 0.0
        %3884 = vmatprep.subr.mxu0 0.0
        %3885 = vmatpush1.msra.mxu0 0.0
        %3886 = vmatprep.subr.mxu0 0.0
        %3887 = vmatpush1.msra.mxu0 0.0
        %3888 = vmatprep.subr.mxu0 0.0
        %3889 = vmatpush1.msra.mxu0 0.0
        %3890 = vmatprep.subr.mxu0 0.0
        %3891 = vmatpush1.msra.mxu0 0.0
        %3892 = vmatprep.subr.mxu0 0.0
        %3893 = vmatpush1.msra.mxu0 0.0
        %3894 = vmatprep.subr.mxu0 0.0
        %3895 = vmatpush1.msra.mxu0 0.0
        %3896 = vmatprep.subr.mxu0 0.0
        %3897 = vmatpush1.msra.mxu0 0.0
        %3898 = vmatprep.subr.mxu0 0.0
        %3899 = vmatpush1.msra.mxu0 0.0
        %3900 = vmatprep.subr.mxu0 0.0
        %3901 = vmatpush1.msra.mxu0 0.0
        %3902 = vmatprep.subr.mxu0 0.0
        %3903 = vmatpush1.msra.mxu0 0.0
        %3904 = vmatprep.subr.mxu0 0.0
        %3905 = vmatpush1.msra.mxu0 0.0
        %3906 = vmatprep.subr.mxu0 0.0
        %3907 = vmatpush1.msra.mxu0 0.0
        %3908 = vmatprep.subr.mxu0 0.0
        %3909 = vmatpush1.msra.mxu0 0.0
        %3910 = vmatprep.subr.mxu0 0.0
        %3911 = vmatpush1.msra.mxu0 0.0
        %3912 = vmatprep.subr.mxu0 0.0
        %3913 = vmatpush1.msra.mxu0 0.0
        %3914 = vmatprep.subr.mxu0 0.0
        %3915 = vmatpush1.msra.mxu0 0.0
        %3916 = vmatprep.subr.mxu0 0.0
        %3917 = vmatpush1.msra.mxu0 0.0
        %3918 = vmatprep.subr.mxu0 0.0
        %3919 = vmatpush1.msra.mxu0 0.0
        %3920 = vmatprep.mubr.f32.mxu0 0.0
        %3921 = vmatmul.mubr.f32.gmra.mrb[0].mxu0 %v3833
        %v3922 = vpop.f32.mrb[0].mxu0
        %v3923 = vadd.f32 %v3794, %v3922
        %v3924 = vpop.f32.mrb[0].mxu0
        %3925 = vmatprep.mubr.f32.mxu0 0.0
        %3926 = vmatmul.mubr.f32.gmra.mrb[0].mxu0 %v3836
        %v3927 = vpop.f32.mrb[0].mxu0
        %v3928 = vadd.f32 %v3799, %v3927
        %v3929 = vpop.f32.mrb[0].mxu0
        %3930 = vmatprep.mubr.f32.mxu0 0.0
        %3931 = vmatmul.mubr.f32.gmra.mrb[0].mxu0 %v3839
        %v3932 = vpop.f32.mrb[0].mxu0
        %v3933 = vadd.f32 %v3804, %v3932
        %v3934 = vpop.f32.mrb[0].mxu0
        %3935 = vmatprep.mubr.f32.mxu0 0.0
        %3936 = vmatmul.mubr.f32.gmra.mrb[0].mxu0 %v3842
        %v3937 = vpop.f32.mrb[0].mxu0
        %v3938 = vadd.f32 %v3809, %v3937
        %v3939 = vpop.f32.mrb[0].mxu0
        %3940 = vmatprep.mubr.f32.mxu0 0.0
        %3941 = vmatmul.mubr.f32.gmra.mrb[0].mxu0 %v3845
        %v3942 = vpop.f32.mrb[0].mxu0
        %v3943 = vadd.f32 %v3814, %v3942
        %v3944 = vpop.f32.mrb[0].mxu0
        %3945 = vmatprep.mubr.f32.mxu0 0.0
        %3946 = vmatmul.mubr.f32.gmra.mrb[0].mxu0 %v3848
        %v3947 = vpop.f32.mrb[0].mxu0
        %v3948 = vadd.f32 %v3819, %v3947
        %v3949 = vpop.f32.mrb[0].mxu0
        %3950 = vmatprep.mubr.f32.mxu0 0.0
        %3951 = vmatmul.mubr.f32.gmra.mrb[0].mxu0 %v3851
        %v3952 = vpop.f32.mrb[0].mxu0
        %v3953 = vadd.f32 %v3824, %v3952
        %v3954 = vpop.f32.mrb[0].mxu0
        %3955 = vmatprep.mubr.f32.mxu0 0.0
        %3956 = vmatmul.mubr.f32.gmra.mrb[0].mxu0 %v3854
        %v3957 = vpop.f32.mrb[0].mxu0
        %v3958 = vadd.f32 %v3829, %v3957
        %v3959 = vpop.f32.mrb[0].mxu0
        %3960 = vdwg.mxu0
        %v3961 = vsub.f32 0.0, %v3923
        %v3962 = vsub.f32 0.0, %v3928
        %v3963 = vsub.f32 0.0, %v3933
        %v3964 = vsub.f32 0.0, %v3938
        %v3965 = vsub.f32 0.0, %v3943
        %v3966 = vsub.f32 0.0, %v3948
        %v3967 = vsub.f32 0.0, %v3953
        %v3968 = vsub.f32 0.0, %v3958
        %v3969 = vmul.f32 %v3961, 1.442695
        %v3970 = vpow.pop %v3969
        %v3971 = vmul.f32 %v3962, 1.442695
        %v3972 = vpow.pop %v3971
        %v3973 = vmul.f32 %v3963, 1.442695
        %v3974 = vpow.pop %v3973
        %v3975 = vmul.f32 %v3964, 1.442695
        %v3976 = vpow.pop %v3975
        %v3977 = vmul.f32 %v3965, 1.442695
        %v3978 = vpow.pop %v3977
        %v3979 = vmul.f32 %v3966, 1.442695
        %v3980 = vpow.pop %v3979
        %v3981 = vmul.f32 %v3967, 1.442695
        %v3982 = vpow.pop %v3981
        %v3983 = vmul.f32 %v3968, 1.442695
        %v3984 = vpow.pop %v3983
        %v3985 = vadd.f32 %v3970, 1.0
        %v3986 = vadd.f32 %v3972, 1.0
        %v3987 = vadd.f32 %v3974, 1.0
        %v3988 = vadd.f32 %v3976, 1.0
        %v3989 = vadd.f32 %v3978, 1.0
        %v3990 = vadd.f32 %v3980, 1.0
        %v3991 = vadd.f32 %v3982, 1.0
        %v3992 = vadd.f32 %v3984, 1.0
        %v3993 = vrcp.pop %v3985
        %v3994 = vrcp.pop %v3986
        %v3995 = vrcp.pop %v3987
        %v3996 = vrcp.pop %v3988
        %v3997 = vrcp.pop %v3989
        %v3998 = vrcp.pop %v3990
        %v3999 = vrcp.pop %v3991
        %v4000 = vrcp.pop %v3992
        %vm4001 = vcmask 31744
        %v4003 = vsel %vm4001, %v3993, 0
        %v4006 = vsel %vm4001, %v3994, 0
        %v4009 = vsel %vm4001, %v3995, 0
        %v4012 = vsel %vm4001, %v3996, 0
        %v4015 = vsel %vm4001, %v3997, 0
        %v4018 = vsel %vm4001, %v3998, 0
        %v4021 = vsel %vm4001, %v3999, 0
        %v4024 = vsel %vm4001, %v4000, 0
        %vm4026 = vcmask 1043456
        %v4027 = vsel %vm4026, %v3441, 0
        %v4029 = vsel %vm4026, %v3445, 0
        %v4031 = vsel %vm4026, %v3442, 0
        %v4033 = vsel %vm4026, %v3446, 0
        %4035 = vmatprep.subr.mxu0 %v4029
        %4036 = vmatpush1.msra.mxu0 %v4027
        %4037 = vmatprep.subr.mxu0 0.0
        %4038 = vmatpush1.msra.mxu0 0.0
        %4039 = vmatprep.subr.mxu0 0.0
        %4040 = vmatpush1.msra.mxu0 0.0
        %4041 = vmatprep.subr.mxu0 0.0
        %4042 = vmatpush1.msra.mxu0 0.0
        %4043 = vmatprep.subr.mxu0 0.0
        %4044 = vmatpush1.msra.mxu0 0.0
        %4045 = vmatprep.subr.mxu0 0.0
        %4046 = vmatpush1.msra.mxu0 0.0
        %4047 = vmatprep.subr.mxu0 0.0
        %4048 = vmatpush1.msra.mxu0 0.0
        %4049 = vmatprep.subr.mxu0 0.0
        %4050 = vmatpush1.msra.mxu0 0.0
        %4051 = vmatprep.subr.mxu0 0.0
        %4052 = vmatpush1.msra.mxu0 0.0
        %4053 = vmatprep.subr.mxu0 0.0
        %4054 = vmatpush1.msra.mxu0 0.0
        %4055 = vmatprep.subr.mxu0 0.0
        %4056 = vmatpush1.msra.mxu0 0.0
        %4057 = vmatprep.subr.mxu0 0.0
        %4058 = vmatpush1.msra.mxu0 0.0
        %4059 = vmatprep.subr.mxu0 0.0
        %4060 = vmatpush1.msra.mxu0 0.0
        %4061 = vmatprep.subr.mxu0 0.0
        %4062 = vmatpush1.msra.mxu0 0.0
        %4063 = vmatprep.subr.mxu0 0.0
        %4064 = vmatpush1.msra.mxu0 0.0
        %4065 = vmatprep.subr.mxu0 0.0
        %4066 = vmatpush1.msra.mxu0 0.0
        %4067 = vmatprep.subr.mxu0 0.0
        %4068 = vmatpush1.msra.mxu0 0.0
        %4069 = vmatprep.subr.mxu0 0.0
        %4070 = vmatpush1.msra.mxu0 0.0
        %4071 = vmatprep.subr.mxu0 0.0
        %4072 = vmatpush1.msra.mxu0 0.0
        %4073 = vmatprep.subr.mxu0 0.0
        %4074 = vmatpush1.msra.mxu0 0.0
        %4075 = vmatprep.subr.mxu0 0.0
        %4076 = vmatpush1.msra.mxu0 0.0
        %4077 = vmatprep.subr.mxu0 0.0
        %4078 = vmatpush1.msra.mxu0 0.0
        %4079 = vmatprep.subr.mxu0 0.0
        %4080 = vmatpush1.msra.mxu0 0.0
        %4081 = vmatprep.subr.mxu0 0.0
        %4082 = vmatpush1.msra.mxu0 0.0
        %4083 = vmatprep.subr.mxu0 0.0
        %4084 = vmatpush1.msra.mxu0 0.0
        %4085 = vmatprep.subr.mxu0 0.0
        %4086 = vmatpush1.msra.mxu0 0.0
        %4087 = vmatprep.subr.mxu0 0.0
        %4088 = vmatpush1.msra.mxu0 0.0
        %4089 = vmatprep.subr.mxu0 0.0
        %4090 = vmatpush1.msra.mxu0 0.0
        %4091 = vmatprep.subr.mxu0 0.0
        %4092 = vmatpush1.msra.mxu0 0.0
        %4093 = vmatprep.subr.mxu0 0.0
        %4094 = vmatpush1.msra.mxu0 0.0
        %4095 = vmatprep.subr.mxu0 0.0
        %4096 = vmatpush1.msra.mxu0 0.0
        %4097 = vmatprep.subr.mxu0 0.0
        %4098 = vmatpush1.msra.mxu0 0.0
        %4099 = vmatprep.mubr.f32.mxu0 0.0
        %4100 = vmatmul.mubr.f32.gmra.mrb[0].mxu0 %v4003
        %v4101 = vpop.f32.mrb[0].mxu0
        %v4102 = vadd.f32 0.0, %v4101
        %v4103 = vpop.f32.mrb[0].mxu0
        %v4104 = vadd.f32 0.0, %v4103
        %4105 = vmatprep.mubr.f32.mxu0 0.0
        %4106 = vmatmul.mubr.f32.gmra.mrb[0].mxu0 %v4006
        %v4107 = vpop.f32.mrb[0].mxu0
        %v4108 = vadd.f32 0.0, %v4107
        %v4109 = vpop.f32.mrb[0].mxu0
        %v4110 = vadd.f32 0.0, %v4109
        %4111 = vmatprep.mubr.f32.mxu0 0.0
        %4112 = vmatmul.mubr.f32.gmra.mrb[0].mxu0 %v4009
        %v4113 = vpop.f32.mrb[0].mxu0
        %v4114 = vadd.f32 0.0, %v4113
        %v4115 = vpop.f32.mrb[0].mxu0
        %v4116 = vadd.f32 0.0, %v4115
        %4117 = vmatprep.mubr.f32.mxu0 0.0
        %4118 = vmatmul.mubr.f32.gmra.mrb[0].mxu0 %v4012
        %v4119 = vpop.f32.mrb[0].mxu0
        %v4120 = vadd.f32 0.0, %v4119
        %v4121 = vpop.f32.mrb[0].mxu0
        %v4122 = vadd.f32 0.0, %v4121
        %4123 = vmatprep.mubr.f32.mxu0 0.0
        %4124 = vmatmul.mubr.f32.gmra.mrb[0].mxu0 %v4015
        %v4125 = vpop.f32.mrb[0].mxu0
        %v4126 = vadd.f32 0.0, %v4125
        %v4127 = vpop.f32.mrb[0].mxu0
        %v4128 = vadd.f32 0.0, %v4127
        %4129 = vmatprep.mubr.f32.mxu0 0.0
        %4130 = vmatmul.mubr.f32.gmra.mrb[0].mxu0 %v4018
        %v4131 = vpop.f32.mrb[0].mxu0
        %v4132 = vadd.f32 0.0, %v4131
        %v4133 = vpop.f32.mrb[0].mxu0
        %v4134 = vadd.f32 0.0, %v4133
        %4135 = vmatprep.mubr.f32.mxu0 0.0
        %4136 = vmatmul.mubr.f32.gmra.mrb[0].mxu0 %v4021
        %v4137 = vpop.f32.mrb[0].mxu0
        %v4138 = vadd.f32 0.0, %v4137
        %v4139 = vpop.f32.mrb[0].mxu0
        %v4140 = vadd.f32 0.0, %v4139
        %4141 = vmatprep.mubr.f32.mxu0 0.0
        %4142 = vmatmul.mubr.f32.gmra.mrb[0].mxu0 %v4024
        %v4143 = vpop.f32.mrb[0].mxu0
        %v4144 = vadd.f32 0.0, %v4143
        %v4145 = vpop.f32.mrb[0].mxu0
        %v4146 = vadd.f32 0.0, %v4145
        %4147 = vdwg.mxu0
        %4148 = vmatprep.subr.mxu0 %v4033
        %4149 = vmatpush1.msra.mxu0 %v4031
        %4150 = vmatprep.subr.mxu0 0.0
        %4151 = vmatpush1.msra.mxu0 0.0
        %4152 = vmatprep.subr.mxu0 0.0
        %4153 = vmatpush1.msra.mxu0 0.0
        %4154 = vmatprep.subr.mxu0 0.0
        %4155 = vmatpush1.msra.mxu0 0.0
        %4156 = vmatprep.subr.mxu0 0.0
        %4157 = vmatpush1.msra.mxu0 0.0
        %4158 = vmatprep.subr.mxu0 0.0
        %4159 = vmatpush1.msra.mxu0 0.0
        %4160 = vmatprep.subr.mxu0 0.0
        %4161 = vmatpush1.msra.mxu0 0.0
        %4162 = vmatprep.subr.mxu0 0.0
        %4163 = vmatpush1.msra.mxu0 0.0
        %4164 = vmatprep.subr.mxu0 0.0
        %4165 = vmatpush1.msra.mxu0 0.0
        %4166 = vmatprep.subr.mxu0 0.0
        %4167 = vmatpush1.msra.mxu0 0.0
        %4168 = vmatprep.subr.mxu0 0.0
        %4169 = vmatpush1.msra.mxu0 0.0
        %4170 = vmatprep.subr.mxu0 0.0
        %4171 = vmatpush1.msra.mxu0 0.0
        %4172 = vmatprep.subr.mxu0 0.0
        %4173 = vmatpush1.msra.mxu0 0.0
        %4174 = vmatprep.subr.mxu0 0.0
        %4175 = vmatpush1.msra.mxu0 0.0
        %4176 = vmatprep.subr.mxu0 0.0
        %4177 = vmatpush1.msra.mxu0 0.0
        %4178 = vmatprep.subr.mxu0 0.0
        %4179 = vmatpush1.msra.mxu0 0.0
        %4180 = vmatprep.subr.mxu0 0.0
        %4181 = vmatpush1.msra.mxu0 0.0
        %4182 = vmatprep.subr.mxu0 0.0
        %4183 = vmatpush1.msra.mxu0 0.0
        %4184 = vmatprep.subr.mxu0 0.0
        %4185 = vmatpush1.msra.mxu0 0.0
        %4186 = vmatprep.subr.mxu0 0.0
        %4187 = vmatpush1.msra.mxu0 0.0
        %4188 = vmatprep.subr.mxu0 0.0
        %4189 = vmatpush1.msra.mxu0 0.0
        %4190 = vmatprep.subr.mxu0 0.0
        %4191 = vmatpush1.msra.mxu0 0.0
        %4192 = vmatprep.subr.mxu0 0.0
        %4193 = vmatpush1.msra.mxu0 0.0
        %4194 = vmatprep.subr.mxu0 0.0
        %4195 = vmatpush1.msra.mxu0 0.0
        %4196 = vmatprep.subr.mxu0 0.0
        %4197 = vmatpush1.msra.mxu0 0.0
        %4198 = vmatprep.subr.mxu0 0.0
        %4199 = vmatpush1.msra.mxu0 0.0
        %4200 = vmatprep.subr.mxu0 0.0
        %4201 = vmatpush1.msra.mxu0 0.0
        %4202 = vmatprep.subr.mxu0 0.0
        %4203 = vmatpush1.msra.mxu0 0.0
        %4204 = vmatprep.subr.mxu0 0.0
        %4205 = vmatpush1.msra.mxu0 0.0
        %4206 = vmatprep.subr.mxu0 0.0
        %4207 = vmatpush1.msra.mxu0 0.0
        %4208 = vmatprep.subr.mxu0 0.0
        %4209 = vmatpush1.msra.mxu0 0.0
        %4210 = vmatprep.subr.mxu0 0.0
        %4211 = vmatpush1.msra.mxu0 0.0
        %4212 = vmatprep.mubr.f32.mxu0 0.0
        %4213 = vmatmul.mubr.f32.gmra.mrb[0].mxu0 %v4003
        %v4214 = vpop.f32.mrb[0].mxu0
        %v4215 = vadd.f32 0.0, %v4214
        %v4216 = vpop.f32.mrb[0].mxu0
        %v4217 = vadd.f32 0.0, %v4216
        %4218 = vmatprep.mubr.f32.mxu0 0.0
        %4219 = vmatmul.mubr.f32.gmra.mrb[0].mxu0 %v4006
        %v4220 = vpop.f32.mrb[0].mxu0
        %v4221 = vadd.f32 0.0, %v4220
        %v4222 = vpop.f32.mrb[0].mxu0
        %v4223 = vadd.f32 0.0, %v4222
        %4224 = vmatprep.mubr.f32.mxu0 0.0
        %4225 = vmatmul.mubr.f32.gmra.mrb[0].mxu0 %v4009
        %v4226 = vpop.f32.mrb[0].mxu0
        %v4227 = vadd.f32 0.0, %v4226
        %v4228 = vpop.f32.mrb[0].mxu0
        %v4229 = vadd.f32 0.0, %v4228
        %4230 = vmatprep.mubr.f32.mxu0 0.0
        %4231 = vmatmul.mubr.f32.gmra.mrb[0].mxu0 %v4012
        %v4232 = vpop.f32.mrb[0].mxu0
        %v4233 = vadd.f32 0.0, %v4232
        %v4234 = vpop.f32.mrb[0].mxu0
        %v4235 = vadd.f32 0.0, %v4234
        %4236 = vmatprep.mubr.f32.mxu0 0.0
        %4237 = vmatmul.mubr.f32.gmra.mrb[0].mxu0 %v4015
        %v4238 = vpop.f32.mrb[0].mxu0
        %v4239 = vadd.f32 0.0, %v4238
        %v4240 = vpop.f32.mrb[0].mxu0
        %v4241 = vadd.f32 0.0, %v4240
        %4242 = vmatprep.mubr.f32.mxu0 0.0
        %4243 = vmatmul.mubr.f32.gmra.mrb[0].mxu0 %v4018
        %v4244 = vpop.f32.mrb[0].mxu0
        %v4245 = vadd.f32 0.0, %v4244
        %v4246 = vpop.f32.mrb[0].mxu0
        %v4247 = vadd.f32 0.0, %v4246
        %4248 = vmatprep.mubr.f32.mxu0 0.0
        %4249 = vmatmul.mubr.f32.gmra.mrb[0].mxu0 %v4021
        %v4250 = vpop.f32.mrb[0].mxu0
        %v4251 = vadd.f32 0.0, %v4250
        %v4252 = vpop.f32.mrb[0].mxu0
        %v4253 = vadd.f32 0.0, %v4252
        %4254 = vmatprep.mubr.f32.mxu0 0.0
        %4255 = vmatmul.mubr.f32.gmra.mrb[0].mxu0 %v4024
        %v4256 = vpop.f32.mrb[0].mxu0
        %v4257 = vadd.f32 0.0, %v4256
        %v4258 = vpop.f32.mrb[0].mxu0
        %v4259 = vadd.f32 0.0, %v4258
        %4260 = vdwg.mxu0
        %v4261 = vmul.f32 %v3409, %v4102
        %v4262 = vmul.f32 %v3410, %v4104
        %v4263 = vmul.f32 %v3411, %v4215
        %v4264 = vmul.f32 %v3412, %v4217
        %v4265 = vmul.f32 %v3413, %v4108
        %v4266 = vmul.f32 %v3414, %v4110
        %v4267 = vmul.f32 %v3415, %v4221
        %v4268 = vmul.f32 %v3416, %v4223
        %v4269 = vmul.f32 %v3417, %v4114
        %v4270 = vmul.f32 %v3418, %v4116
        %v4271 = vmul.f32 %v3419, %v4227
        %v4272 = vmul.f32 %v3420, %v4229
        %v4273 = vmul.f32 %v3421, %v4120
        %v4274 = vmul.f32 %v3422, %v4122
        %v4275 = vmul.f32 %v3423, %v4233
        %v4276 = vmul.f32 %v3424, %v4235
        %v4277 = vmul.f32 %v3425, %v4126
        %v4278 = vmul.f32 %v3426, %v4128
        %v4279 = vmul.f32 %v3427, %v4239
        %v4280 = vmul.f32 %v3428, %v4241
        %v4281 = vmul.f32 %v3429, %v4132
        %v4282 = vmul.f32 %v3430, %v4134
        %v4283 = vmul.f32 %v3431, %v4245
        %v4284 = vmul.f32 %v3432, %v4247
        %v4285 = vmul.f32 %v3433, %v4138
        %v4286 = vmul.f32 %v3434, %v4140
        %v4287 = vmul.f32 %v3435, %v4251
        %v4288 = vmul.f32 %v3436, %v4253
        %v4289 = vmul.f32 %v3437, %v4144
        %v4290 = vmul.f32 %v3438, %v4146
        %v4291 = vmul.f32 %v3439, %v4257
        %v4292 = vmul.f32 %v3440, %v4259
        %v4293 = vpack.c.bf16 %v4265, %v4261
        %v4294 = vpack.c.bf16 %v4266, %v4262
        %v4295 = vpack.c.bf16 %v4267, %v4263
        %v4296 = vpack.c.bf16 %v4268, %v4264
        %v4297 = vpack.c.bf16 %v4273, %v4269
        %v4298 = vpack.c.bf16 %v4274, %v4270
        %v4299 = vpack.c.bf16 %v4275, %v4271
        %v4300 = vpack.c.bf16 %v4276, %v4272
        %v4301 = vpack.c.bf16 %v4281, %v4277
        %v4302 = vpack.c.bf16 %v4282, %v4278
        %v4303 = vpack.c.bf16 %v4283, %v4279
        %v4304 = vpack.c.bf16 %v4284, %v4280
        %v4305 = vpack.c.bf16 %v4289, %v4285
        %v4306 = vpack.c.bf16 %v4290, %v4286
        %v4307 = vpack.c.bf16 %v4291, %v4287
        %v4308 = vpack.c.bf16 %v4292, %v4288
        %v4309 = vld [vmem:[%s8] sm:$0xf]
        %v4310 = vld [vmem:[%s8 + $0x4] sm:$0xf]
        %v4311 = vld [vmem:[%s8 + $0x8] sm:$0xf]
        %v4312 = vld [vmem:[%s8 + $0xc] sm:$0xf]
        %v4317 = vunpack.c.l.b16 %v4309
        %v4318 = vunpack.c.l.b16 %v4310
        %v4319 = vunpack.c.l.b16 %v4311
        %v4320 = vunpack.c.l.b16 %v4312
        %v4321 = vpack.c.b16 %v4318, %v4317
        %v4322 = vpack.c.b16 %v4320, %v4319
        %v4324 = vsel %vm3681, %v4321, 0
        %v4327 = vsel %vm3681, %v4322, 0
        %4329 = vmatprep.subr.bf16.mxu0 %v4294
        %4330 = vmatpush1.bf16.msra.mxu0 %v4293
        %4331 = vmatprep.subr.bf16.mxu0 %v4298
        %4332 = vmatpush1.bf16.msra.mxu0 %v4297
        %4333 = vmatprep.subr.bf16.mxu0 %v4302
        %4334 = vmatpush1.bf16.msra.mxu0 %v4301
        %4335 = vmatprep.subr.bf16.mxu0 %v4306
        %4336 = vmatpush1.bf16.msra.mxu0 %v4305
        %4337 = vmatprep.subr.bf16.mxu0 0
        %4338 = vmatpush1.bf16.msra.mxu0 0
        %4339 = vmatprep.subr.bf16.mxu0 0
        %4340 = vmatpush1.bf16.msra.mxu0 0
        %4341 = vmatprep.subr.bf16.mxu0 0
        %4342 = vmatpush1.bf16.msra.mxu0 0
        %4343 = vmatprep.subr.bf16.mxu0 0
        %4344 = vmatpush1.bf16.msra.mxu0 0
        %4345 = vmatprep.subr.bf16.mxu0 0
        %4346 = vmatpush1.bf16.msra.mxu0 0
        %4347 = vmatprep.subr.bf16.mxu0 0
        %4348 = vmatpush1.bf16.msra.mxu0 0
        %4349 = vmatprep.subr.bf16.mxu0 0
        %4350 = vmatpush1.bf16.msra.mxu0 0
        %4351 = vmatprep.subr.bf16.mxu0 0
        %4352 = vmatpush1.bf16.msra.mxu0 0
        %4353 = vmatprep.subr.bf16.mxu0 0
        %4354 = vmatpush1.bf16.msra.mxu0 0
        %4355 = vmatprep.subr.bf16.mxu0 0
        %4356 = vmatpush1.bf16.msra.mxu0 0
        %4357 = vmatprep.subr.bf16.mxu0 0
        %4358 = vmatpush1.bf16.msra.mxu0 0
        %4359 = vmatprep.subr.bf16.mxu0 0
        %4360 = vmatpush1.bf16.msra.mxu0 0
        %4361 = vmatprep.mubr.bf16.mxu0 0
        %4362 = vmatmul.mubr.bf16.gmra.mrb[0].mxu0 %v4324
        %v4363 = vpop.f32.mrb[0].mxu0
        %v4364 = vadd.f32 0.0, %v4363
        %v4365 = vpop.f32.mrb[0].mxu0
        %v4366 = vadd.f32 0.0, %v4365
        %v4367 = vpop.f32.mrb[0].mxu0
        %v4368 = vadd.f32 0.0, %v4367
        %v4369 = vpop.f32.mrb[0].mxu0
        %v4370 = vadd.f32 0.0, %v4369
        %4371 = vmatprep.mubr.bf16.mxu0 0
        %4372 = vmatmul.mubr.bf16.gmra.mrb[0].mxu0 %v4327
        %v4373 = vpop.f32.mrb[0].mxu0
        %v4374 = vadd.f32 0.0, %v4373
        %v4375 = vpop.f32.mrb[0].mxu0
        %v4376 = vadd.f32 0.0, %v4375
        %v4377 = vpop.f32.mrb[0].mxu0
        %v4378 = vadd.f32 0.0, %v4377
        %v4379 = vpop.f32.mrb[0].mxu0
        %v4380 = vadd.f32 0.0, %v4379
        %4381 = vdwg.mxu0
        %4382 = vmatprep.subr.bf16.mxu0 %v4296
        %4383 = vmatpush1.bf16.msra.mxu0 %v4295
        %4384 = vmatprep.subr.bf16.mxu0 %v4300
        %4385 = vmatpush1.bf16.msra.mxu0 %v4299
        %4386 = vmatprep.subr.bf16.mxu0 %v4304
        %4387 = vmatpush1.bf16.msra.mxu0 %v4303
        %4388 = vmatprep.subr.bf16.mxu0 %v4308
        %4389 = vmatpush1.bf16.msra.mxu0 %v4307
        %4390 = vmatprep.subr.bf16.mxu0 0
        %4391 = vmatpush1.bf16.msra.mxu0 0
        %4392 = vmatprep.subr.bf16.mxu0 0
        %4393 = vmatpush1.bf16.msra.mxu0 0
        %4394 = vmatprep.subr.bf16.mxu0 0
        %4395 = vmatpush1.bf16.msra.mxu0 0
        %4396 = vmatprep.subr.bf16.mxu0 0
        %4397 = vmatpush1.bf16.msra.mxu0 0
        %4398 = vmatprep.subr.bf16.mxu0 0
        %4399 = vmatpush1.bf16.msra.mxu0 0
        %4400 = vmatprep.subr.bf16.mxu0 0
        %4401 = vmatpush1.bf16.msra.mxu0 0
        %4402 = vmatprep.subr.bf16.mxu0 0
        %4403 = vmatpush1.bf16.msra.mxu0 0
        %4404 = vmatprep.subr.bf16.mxu0 0
        %4405 = vmatpush1.bf16.msra.mxu0 0
        %4406 = vmatprep.subr.bf16.mxu0 0
        %4407 = vmatpush1.bf16.msra.mxu0 0
        %4408 = vmatprep.subr.bf16.mxu0 0
        %4409 = vmatpush1.bf16.msra.mxu0 0
        %4410 = vmatprep.subr.bf16.mxu0 0
        %4411 = vmatpush1.bf16.msra.mxu0 0
        %4412 = vmatprep.subr.bf16.mxu0 0
        %4413 = vmatpush1.bf16.msra.mxu0 0
        %4414 = vmatprep.mubr.bf16.mxu0 0
        %4415 = vmatmul.mubr.bf16.gmra.mrb[0].mxu0 %v4324
        %v4416 = vpop.f32.mrb[0].mxu0
        %v4417 = vadd.f32 0.0, %v4416
        %v4418 = vpop.f32.mrb[0].mxu0
        %v4419 = vadd.f32 0.0, %v4418
        %v4420 = vpop.f32.mrb[0].mxu0
        %v4421 = vadd.f32 0.0, %v4420
        %v4422 = vpop.f32.mrb[0].mxu0
        %v4423 = vadd.f32 0.0, %v4422
        %4424 = vmatprep.mubr.bf16.mxu0 0
        %4425 = vmatmul.mubr.bf16.gmra.mrb[0].mxu0 %v4327
        %v4426 = vpop.f32.mrb[0].mxu0
        %v4427 = vadd.f32 0.0, %v4426
        %v4428 = vpop.f32.mrb[0].mxu0
        %v4429 = vadd.f32 0.0, %v4428
        %v4430 = vpop.f32.mrb[0].mxu0
        %v4431 = vadd.f32 0.0, %v4430
        %v4432 = vpop.f32.mrb[0].mxu0
        %v4433 = vadd.f32 0.0, %v4432
        %4434 = vdwg.mxu0
        %v4435 = vld [vmem:[%s9] sm:$0xff]
        %v4436 = vld [vmem:[%s9 + $0x8] sm:$0xff]
        %v4437 = vld [vmem:[%s9 + $0x10] sm:$0xff]
        %v4438 = vld [vmem:[%s9 + $0x18] sm:$0xff]
        %4440 = vset.pattern.permute.xlu0 0
        %4441 = vperm.xlu0 %4440, %v4435
        %v4442 = vpop.permute.xlu0 %4441
        %4445 = vset.pattern.permute.xlu0 0
        %4446 = vperm.xlu0 %4445, %v4436
        %v4447 = vpop.permute.xlu0 %4446
        %4450 = vset.pattern.permute.xlu0 0
        %4451 = vperm.xlu0 %4450, %v4437
        %v4452 = vpop.permute.xlu0 %4451
        %4455 = vset.pattern.permute.xlu0 0
        %4456 = vperm.xlu0 %4455, %v4438
        %v4457 = vpop.permute.xlu0 %4456
        %v4459 = vmul.f32 %v4364, %v4442
        %v4460 = vmul.f32 %v4366, %v4442
        %v4461 = vmul.f32 %v4417, %v4442
        %v4462 = vmul.f32 %v4419, %v4442
        %v4463 = vmul.f32 %v4368, %v4447
        %v4464 = vmul.f32 %v4370, %v4447
        %v4465 = vmul.f32 %v4421, %v4447
        %v4466 = vmul.f32 %v4423, %v4447
        %v4467 = vmul.f32 %v4374, %v4452
        %v4468 = vmul.f32 %v4376, %v4452
        %v4469 = vmul.f32 %v4427, %v4452
        %v4470 = vmul.f32 %v4429, %v4452
        %v4471 = vmul.f32 %v4378, %v4457
        %v4472 = vmul.f32 %v4380, %v4457
        %v4473 = vmul.f32 %v4431, %v4457
        %v4474 = vmul.f32 %v4433, %v4457
        %4475 = vset.pattern.permute.xlu0 1
        %4476 = vperm.xlu0 %4475, %v4435
        %v4477 = vpop.permute.xlu0 %4476
        %4479 = vset.pattern.permute.xlu0 1
        %4480 = vperm.xlu0 %4479, %v4436
        %v4481 = vpop.permute.xlu0 %4480
        %4483 = vset.pattern.permute.xlu0 1
        %4484 = vperm.xlu0 %4483, %v4437
        %v4485 = vpop.permute.xlu0 %4484
        %4487 = vset.pattern.permute.xlu0 1
        %4488 = vperm.xlu0 %4487, %v4438
        %v4489 = vpop.permute.xlu0 %4488
        %v4491 = vadd.f32 %v4459, %v4477
        %v4492 = vadd.f32 %v4460, %v4477
        %v4493 = vadd.f32 %v4461, %v4477
        %v4494 = vadd.f32 %v4462, %v4477
        %v4495 = vadd.f32 %v4463, %v4481
        %v4496 = vadd.f32 %v4464, %v4481
        %v4497 = vadd.f32 %v4465, %v4481
        %v4498 = vadd.f32 %v4466, %v4481
        %v4499 = vadd.f32 %v4467, %v4485
        %v4500 = vadd.f32 %v4468, %v4485
        %v4501 = vadd.f32 %v4469, %v4485
        %v4502 = vadd.f32 %v4470, %v4485
        %v4503 = vadd.f32 %v4471, %v4489
        %v4504 = vadd.f32 %v4472, %v4489
        %v4505 = vadd.f32 %v4473, %v4489
        %v4506 = vadd.f32 %v4474, %v4489
        %v4507 = vsub.f32 0.0, %v4491
        %v4508 = vsub.f32 0.0, %v4492
        %v4509 = vsub.f32 0.0, %v4493
        %v4510 = vsub.f32 0.0, %v4494
        %v4511 = vsub.f32 0.0, %v4495
        %v4512 = vsub.f32 0.0, %v4496
        %v4513 = vsub.f32 0.0, %v4497
        %v4514 = vsub.f32 0.0, %v4498
        %v4515 = vsub.f32 0.0, %v4499
        %v4516 = vsub.f32 0.0, %v4500
        %v4517 = vsub.f32 0.0, %v4501
        %v4518 = vsub.f32 0.0, %v4502
        %v4519 = vsub.f32 0.0, %v4503
        %v4520 = vsub.f32 0.0, %v4504
        %v4521 = vsub.f32 0.0, %v4505
        %v4522 = vsub.f32 0.0, %v4506
        %v4523 = vmul.f32 %v4507, 1.442695
        %v4524 = vpow.pop %v4523
        %v4525 = vmul.f32 %v4508, 1.442695
        %v4526 = vpow.pop %v4525
        %v4527 = vmul.f32 %v4509, 1.442695
        %v4528 = vpow.pop %v4527
        %v4529 = vmul.f32 %v4510, 1.442695
        %v4530 = vpow.pop %v4529
        %v4531 = vmul.f32 %v4511, 1.442695
        %v4532 = vpow.pop %v4531
        %v4533 = vmul.f32 %v4512, 1.442695
        %v4534 = vpow.pop %v4533
        %v4535 = vmul.f32 %v4513, 1.442695
        %v4536 = vpow.pop %v4535
        %v4537 = vmul.f32 %v4514, 1.442695
        %v4538 = vpow.pop %v4537
        %v4539 = vmul.f32 %v4515, 1.442695
        %v4540 = vpow.pop %v4539
        %v4541 = vmul.f32 %v4516, 1.442695
        %v4542 = vpow.pop %v4541
        %v4543 = vmul.f32 %v4517, 1.442695
        %v4544 = vpow.pop %v4543
        %v4545 = vmul.f32 %v4518, 1.442695
        %v4546 = vpow.pop %v4545
        %v4547 = vmul.f32 %v4519, 1.442695
        %v4548 = vpow.pop %v4547
        %v4549 = vmul.f32 %v4520, 1.442695
        %v4550 = vpow.pop %v4549
        %v4551 = vmul.f32 %v4521, 1.442695
        %v4552 = vpow.pop %v4551
        %v4553 = vmul.f32 %v4522, 1.442695
        %v4554 = vpow.pop %v4553
        %v4555 = vadd.f32 %v4524, 1.0
        %v4556 = vadd.f32 %v4526, 1.0
        %v4557 = vadd.f32 %v4528, 1.0
        %v4558 = vadd.f32 %v4530, 1.0
        %v4559 = vadd.f32 %v4532, 1.0
        %v4560 = vadd.f32 %v4534, 1.0
        %v4561 = vadd.f32 %v4536, 1.0
        %v4562 = vadd.f32 %v4538, 1.0
        %v4563 = vadd.f32 %v4540, 1.0
        %v4564 = vadd.f32 %v4542, 1.0
        %v4565 = vadd.f32 %v4544, 1.0
        %v4566 = vadd.f32 %v4546, 1.0
        %v4567 = vadd.f32 %v4548, 1.0
        %v4568 = vadd.f32 %v4550, 1.0
        %v4569 = vadd.f32 %v4552, 1.0
        %v4570 = vadd.f32 %v4554, 1.0
        %v4571 = vrcp.pop %v4555
        %v4572 = vrcp.pop %v4556
        %v4573 = vrcp.pop %v4557
        %v4574 = vrcp.pop %v4558
        %v4575 = vrcp.pop %v4559
        %v4576 = vrcp.pop %v4560
        %v4577 = vrcp.pop %v4561
        %v4578 = vrcp.pop %v4562
        %v4579 = vrcp.pop %v4563
        %v4580 = vrcp.pop %v4564
        %v4581 = vrcp.pop %v4565
        %v4582 = vrcp.pop %v4566
        %v4583 = vrcp.pop %v4567
        %v4584 = vrcp.pop %v4568
        %v4585 = vrcp.pop %v4569
        %v4586 = vrcp.pop %v4570
        %v4587 = vmul.f32 %v4491, %v4571
        %v4588 = vmul.f32 %v4492, %v4572
        %v4589 = vmul.f32 %v4493, %v4573
        %v4590 = vmul.f32 %v4494, %v4574
        %v4591 = vmul.f32 %v4495, %v4575
        %v4592 = vmul.f32 %v4496, %v4576
        %v4593 = vmul.f32 %v4497, %v4577
        %v4594 = vmul.f32 %v4498, %v4578
        %v4595 = vmul.f32 %v4499, %v4579
        %v4596 = vmul.f32 %v4500, %v4580
        %v4597 = vmul.f32 %v4501, %v4581
        %v4598 = vmul.f32 %v4502, %v4582
        %v4599 = vmul.f32 %v4503, %v4583
        %v4600 = vmul.f32 %v4504, %v4584
        %v4601 = vmul.f32 %v4505, %v4585
        %v4602 = vmul.f32 %v4506, %v4586
        %4603 = vst [vmem:[%s378] sm:$0xff] %v4587
        %4604 = vst [vmem:[%s378 + $0x8] sm:$0xff] %v4588
        %4605 = vst [vmem:[%s378 + $0x10] sm:$0xff] %v4589
        %4606 = vst [vmem:[%s378 + $0x18] sm:$0xff] %v4590
        %4607 = vst [vmem:[%s378 + $0x20] sm:$0xff] %v4591
        %4608 = vst [vmem:[%s378 + $0x28] sm:$0xff] %v4592
        %4609 = vst [vmem:[%s378 + $0x30] sm:$0xff] %v4593
        %4610 = vst [vmem:[%s378 + $0x38] sm:$0xff] %v4594
        %4611 = vst [vmem:[%s378 + $0x40] sm:$0xff] %v4595
        %4612 = vst [vmem:[%s378 + $0x48] sm:$0xff] %v4596
        %4613 = vst [vmem:[%s378 + $0x50] sm:$0xff] %v4597
        %4614 = vst [vmem:[%s378 + $0x58] sm:$0xff] %v4598
        %4615 = vst [vmem:[%s378 + $0x60] sm:$0xff] %v4599
        %4616 = vst [vmem:[%s378 + $0x68] sm:$0xff] %v4600
        %4617 = vst [vmem:[%s378 + $0x70] sm:$0xff] %v4601
        %4618 = vst [vmem:[%s378 + $0x78] sm:$0xff] %v4602
        %s4619 = sand.u32 %s250, 1
        %s4620 = scalar_lea.sflag [#allocation4], %s4619
        %s4621 = sand.u32 %s250, 1
        %s4622 = smul.addr %s4621, 128
        %s4623 = scalar_lea.vmem [#allocation5], %s4622
        // Predicated region
        $region65: #{tpu_custom_call.1} parent=59 // pred_check
          %p4624 = pneg %p260
        $region66: #{tpu_custom_call.1} parent=59 // pred_check_branch
          %4626 = sbr.rel (%p4624) target = $region68
        $region67: #{tpu_custom_call.1} parent=59 // pred_region
          %s4627 = smul.u32 4, %s27
          %s4629 = ssub.s32 2048, 2048
          %4630 = vsyncadd %s4620, %s4629
          %s4631 = smul.addr %s4627, 4
          %s4632 = smul.addr %s4631, 128
          %s4633 = scalar_lea.hbm %s10, %s4632
          %s4634 = sshll.u32 %s4623, 4
          %s4635 = int_to_ptr.vmem [resolvable:$true] %s4634
          %4640 = dma.vmem_to_hbm [thread:$0]  %s4635, 2048, %s4633, %s4620, 512, 512, 32
        $region68: #{tpu_custom_call.1} parent=59 // pred_fallthru
          _
      $region60: #{tpu_custom_call.1} parent=5 // pred_fallthru
        _
      %p4641 = scmp.le.s32.totalorder 2, %s22
      // Predicated region
      $region69: #{tpu_custom_call.1} parent=5 // pred_check
        %p4642 = pneg %p4641
      $region70: #{tpu_custom_call.1} parent=5 // pred_check_branch
        %4644 = sbr.rel (%p4642) target = $region72
      $region71: #{tpu_custom_call.1} parent=5 // pred_region
        %s4645 = ssub.s32 %s22, 2
        // Predicated region
        $region73: #{tpu_custom_call.1} parent=71 // pred_check
          %p4646 = pneg %p266
        $region74: #{tpu_custom_call.1} parent=71 // pred_check_branch
          %4648 = sbr.rel (%p4646) target = $region76
        $region75: #{tpu_custom_call.1} parent=71 // pred_region
          %s4649 = sand.u32 %s251, 1
          %s4650 = scalar_lea.sflag [#allocation4], %s4649
          %s4651 = sand.u32 %s251, 1
          %s4652 = smul.addr %s4651, 128
          %s4653 = scalar_lea.vmem [#allocation5], %s4652
          %4654 = dma.done %s4650, 2048
        $region76: #{tpu_custom_call.1} parent=71 // pred_fallthru
          _
      $region72: #{tpu_custom_call.1} parent=5 // pred_fallthru
        _
    $region6: #{tpu_custom_call.1} parent=1 // loop_footer
      %s26 = sadd.s32 1, %s22
    $region7: #{tpu_custom_call.1} parent=1 // loop_footer_branch
      %21 = sbr.rel target = $region3
    $region8: #{tpu_custom_call.1} parent=1 // loop_exit
      _
    %4655 = vsyncpa [#allocation3], 1
    %s4656 = scalar_lea.sflag [#allocation3], 1
    %4657 = vsyncpa %s4656, 1
    %4658 = vsyncpa [#allocation4], 1
    %s4659 = scalar_lea.sflag [#allocation4], 1
    %4660 = vsyncpa %s4659, 1

</llo_original>
